<compile_context>
chip_gen: v5e
topology: v5e:2x2
jax: 0.10.0
libtpu: 0.0.40
codegen_flags: <defaults>
</compile_context>

<pallas_src>
import functools

import jax
import jax.numpy as jnp
from jax.experimental import pallas as pl
from jax.experimental.pallas import tpu as pltpu


# ---------------------------------------------------------------------------
# Fused kernel: GRU (num_layers, PyTorch gate order r, z, n) + MLP classifier.
#   r = sigmoid(Wir x + bir + Whr h + bhr)
#   z = sigmoid(Wiz x + biz + Whz h + bhz)
#   n = tanh  (Win x + bin + r * (Whn h + bhn))
#   h = (1 - z) * n + z * h
# ---------------------------------------------------------------------------
def _grunet_kernel(num_layers, seq_len, batch, *refs):
    """Ref layout:
      [0]                x_flat   (T*B, D_in)   time-major, flattened
      [1 : 1+4L]         per layer: wih (3,Din,H), whh (3,H,H), bih (3,1,H), bhh (3,1,H)
      [1+4L : 7+4L]      classifier: w1, b1, w2, b2, w3, b3
      [7+4L], [8+4L]     outputs: h_final (B,H), logits (B,C)
      [9+4L]             scratch: y_flat (T*B, H) VMEM (inter-layer activations)
    """
    n_gru = 4 * num_layers
    x_ref = refs[0]
    gru_refs = refs[1:1 + n_gru]
    w1_ref, b1_ref, w2_ref, b2_ref, w3_ref, b3_ref = refs[1 + n_gru:7 + n_gru]
    h_out_ref = refs[7 + n_gru]
    out_ref = refs[8 + n_gru]
    yflat_ref = refs[9 + n_gru]

    x_flat = x_ref[...]                                # (T*B, D_in)
    h = None

    for layer in range(num_layers):
        wih_ref, whh_ref, bih_ref, bhh_ref = gru_refs[4 * layer:4 * layer + 4]
        H = whh_ref.shape[-1]
        is_last = layer == num_layers - 1

        # ---- hoisted input projection: one matmul per gate over ALL time steps ----
        # r/z biases (input + hidden side) folded once here, outside the recurrence.
        gi_r = jnp.dot(x_flat, wih_ref[0],
                       preferred_element_type=jnp.float32) + (bih_ref[0] + bhh_ref[0])
        gi_z = jnp.dot(x_flat, wih_ref[1],
                       preferred_element_type=jnp.float32) + (bih_ref[1] + bhh_ref[1])
        gi_n = jnp.dot(x_flat, wih_ref[2],
                       preferred_element_type=jnp.float32) + bih_ref[2]

        whh_r = whh_ref[0]
        whh_z = whh_ref[1]
        whh_n = whh_ref[2]
        b_hn = bhh_ref[2]                              # must stay inside r * (...)

        # ---- serial recurrence: only h @ W_hh on the critical path -------------
        # seq_len is static & small -> fully unrolled; h stays in vregs.
        h = jnp.zeros((batch, H), jnp.float32)
        for t in range(seq_len):
            lo = t * batch
            gh_r = jnp.dot(h, whh_r, preferred_element_type=jnp.float32)
            gh_z = jnp.dot(h, whh_z, preferred_element_type=jnp.float32)
            gh_n = jnp.dot(h, whh_n, preferred_element_type=jnp.float32) + b_hn
            r = jax.nn.sigmoid(gi_r[lo:lo + batch] + gh_r)
            z = jax.nn.sigmoid(gi_z[lo:lo + batch] + gh_z)
            n = jnp.tanh(gi_n[lo:lo + batch] + r * gh_n)
            h = (1.0 - z) * n + z * h
            if not is_last:
                yflat_ref[lo:lo + batch, :] = h        # inter-layer acts stay in VMEM

        if not is_last:
            x_flat = yflat_ref[...]                    # (T*B, H), already flat for next gi

    # ---- classifier fused on the final hidden state (no extra launch / HBM trip) ----
    a = jnp.dot(h, w1_ref[...], preferred_element_type=jnp.float32) + b1_ref[...]
    a = jnp.maximum(a, 0.0)
    a = jnp.dot(a, w2_ref[...], preferred_element_type=jnp.float32) + b2_ref[...]
    a = jnp.maximum(a, 0.0)
    logits = jnp.dot(a, w3_ref[...], preferred_element_type=jnp.float32) + b3_ref[...]

    h_out_ref[...] = h
    out_ref[...] = logits


def grunet_forward(x, gru_params, clf_params):
    """x: (B, T, D_in) batch-first (like PyTorch batch_first=True). Returns (h, logits)."""
    B, T, Din = x.shape
    num_layers = len(gru_params)
    H = gru_params[-1][1].shape[-1]
    C = clf_params[-2].shape[-1]

    # time-major + flattened so the kernel's hoisted projection is one matmul
    x_flat = jnp.transpose(x, (1, 0, 2)).reshape(T * B, Din)

    flat_params = []
    for layer_params in gru_params:
        flat_params.extend(layer_params)
    flat_params.extend(clf_params)

    kernel = functools.partial(_grunet_kernel, num_layers, T, B)
    h, logits = pl.pallas_call(
        kernel,
        out_shape=(
            jax.ShapeDtypeStruct((B, H), jnp.float32),
            jax.ShapeDtypeStruct((B, C), jnp.float32),
        ),
        # whole arrays in VMEM (tiny); inter-layer sequence lives in VMEM scratch
        scratch_shapes=[pltpu.VMEM((T * B, H), jnp.float32)],
    )(x_flat, *flat_params)
    return h, logits


# ---------------------------------------------------------------------------
# Pure-JAX reference (validation only)
# ---------------------------------------------------------------------------
def grunet_ref(x, gru_params, clf_params):
    B = x.shape[0]
    y = x
    h_last = None
    for (wih, whh, bih, bhh) in gru_params:    # wih (3,Din,H), whh (3,H,H), b* (3,1,H)
        H = whh.shape[-1]

        def step(h, x_t, wih=wih, whh=whh, bih=bih, bhh=bhh):
            r = jax.nn.sigmoid(x_t @ wih[0] + bih[0] + h @ whh[0] + bhh[0])
            z = jax.nn.sigmoid(x_t @ wih[1] + bih[1] + h @ whh[1] + bhh[1])
            n = jnp.tanh(x_t @ wih[2] + bih[2] + r * (h @ whh[2] + bhh[2]))
            h_new = (1.0 - z) * n + z * h
            return h_new, h_new

        h0 = jnp.zeros((B, H), jnp.float32)
        h_last, ys = jax.lax.scan(step, h0, jnp.transpose(y, (1, 0, 2)))
        y = jnp.transpose(ys, (1, 0, 2))

    w1, b1, w2, b2, w3, b3 = clf_params
    a = jnp.maximum(h_last @ w1 + b1, 0.0)
    a = jnp.maximum(a @ w2 + b2, 0.0)
    return h_last, a @ w3 + b3


# ---------------------------------------------------------------------------
# Deterministic parameter construction (shapes follow nn.GRU / nn.Linear),
# pre-transposed into the per-gate layout the kernel consumes.
# ---------------------------------------------------------------------------
def make_params(key, input_size, hidden_size, num_layers, num_classes):
    H = hidden_size
    gru_params = []
    for layer in range(num_layers):
        d_in = input_size if layer == 0 else H
        key, k1, k2, k3, k4 = jax.random.split(key, 5)
        s = 1.0 / jnp.sqrt(H)
        wih = jax.random.uniform(k1, (3 * H, d_in), jnp.float32, -s, s)   # PyTorch (3H, Din)
        whh = jax.random.uniform(k2, (3 * H, H), jnp.float32, -s, s)
        bih = jax.random.uniform(k3, (3 * H,), jnp.float32, -s, s)
        bhh = jax.random.uniform(k4, (3 * H,), jnp.float32, -s, s)
        gru_params.append((
            jnp.transpose(wih.reshape(3, H, d_in), (0, 2, 1)),            # (3, Din, H)
            jnp.transpose(whh.reshape(3, H, H), (0, 2, 1)),               # (3, H, H)
            bih.reshape(3, 1, H),
            bhh.reshape(3, 1, H),
        ))

    dims = [(H, H // 2), (H // 2, H // 4), (H // 4, num_classes)]
    clf_params = []
    for (di, do) in dims:
        key, kw, kb = jax.random.split(key, 3)
        s = 1.0 / jnp.sqrt(di)
        clf_params.append(jax.random.uniform(kw, (di, do), jnp.float32, -s, s))
        clf_params.append(jax.random.uniform(kb, (1, do), jnp.float32, -s, s))
    return gru_params, tuple(clf_params)


if __name__ == "__main__":
    # small shapes implied by the module: (batch, seq, input_size)
    B, T, D_IN, HIDDEN, NUM_LAYERS, NUM_CLASSES = 2, 8, 16, 32, 2, 6

    key = jax.random.PRNGKey(0)
    key, kx = jax.random.split(key)
    x = jax.random.normal(kx, (B, T, D_IN), jnp.float32)

    gru_params, clf_params = make_params(key, D_IN, HIDDEN, NUM_LAYERS, NUM_CLASSES)

    h, out = grunet_forward(x, gru_params, clf_params)
    h = jax.block_until_ready(h)
    out = jax.block_until_ready(out)

    h_ref, out_ref = grunet_ref(x, gru_params, clf_params)
    assert h.shape == (B, HIDDEN) and out.shape == (B, NUM_CLASSES)
    assert jnp.allclose(h, h_ref, atol=1e-5, rtol=1e-4), float(jnp.max(jnp.abs(h - h_ref)))
    assert jnp.allclose(out, out_ref, atol=1e-5, rtol=1e-4), float(jnp.max(jnp.abs(out - out_ref)))

    print("KERNEL_OK")
</pallas_src>

<mosaic_0001>
module attributes {stable_mosaic.version = 11 : i64} {
  func.func @_grunet_kernel(%arg0: memref<16x16xf32, #tpu.memory_space<vmem>>, %arg1: memref<3x16x32xf32, #tpu.memory_space<vmem>>, %arg2: memref<3x32x32xf32, #tpu.memory_space<vmem>>, %arg3: memref<3x1x32xf32, #tpu.memory_space<vmem>>, %arg4: memref<3x1x32xf32, #tpu.memory_space<vmem>>, %arg5: memref<3x32x32xf32, #tpu.memory_space<vmem>>, %arg6: memref<3x32x32xf32, #tpu.memory_space<vmem>>, %arg7: memref<3x1x32xf32, #tpu.memory_space<vmem>>, %arg8: memref<3x1x32xf32, #tpu.memory_space<vmem>>, %arg9: memref<32x16xf32, #tpu.memory_space<vmem>>, %arg10: memref<1x16xf32, #tpu.memory_space<vmem>>, %arg11: memref<16x8xf32, #tpu.memory_space<vmem>>, %arg12: memref<1x8xf32, #tpu.memory_space<vmem>>, %arg13: memref<8x6xf32, #tpu.memory_space<vmem>>, %arg14: memref<1x6xf32, #tpu.memory_space<vmem>>, %arg15: memref<2x32xf32, #tpu.memory_space<vmem>>, %arg16: memref<2x6xf32, #tpu.memory_space<vmem>>, %arg17: memref<16x32xf32, #tpu.memory_space<vmem>>) attributes {dimension_semantics = [], scalar_prefetch = 0 : i64, scratch_operands = 1 : i64, tpu.core_type = #tpu.core_type<tc>} {
    %c0 = arith.constant 0 : index
    %c0_0 = arith.constant 0 : index
    %0 = vector.load %arg0[%c0, %c0_0] : memref<16x16xf32, #tpu.memory_space<vmem>>, vector<16x16xf32>
    %c0_1 = arith.constant 0 : index
    %c0_2 = arith.constant 0 : index
    %c0_3 = arith.constant 0 : index
    %1 = vector.load %arg1[%c0_1, %c0_2, %c0_3] : memref<3x16x32xf32, #tpu.memory_space<vmem>>, vector<1x16x32xf32>
    %2 = vector.shape_cast %1 : vector<1x16x32xf32> to vector<16x32xf32>
    %cst = arith.constant dense<0.000000e+00> : vector<16x32xf32>
    %3 = tpu.matmul %0, %2, %cst {dimension_numbers = #tpu.dot_dimension_numbers<[1], [0], [0], [1], [0, 0, 1, 1], [], []>} : vector<16x16xf32>, vector<16x32xf32>, vector<16x32xf32> -> vector<16x32xf32>
    %c0_4 = arith.constant 0 : index
    %c0_5 = arith.constant 0 : index
    %c0_6 = arith.constant 0 : index
    %4 = vector.load %arg3[%c0_4, %c0_5, %c0_6] : memref<3x1x32xf32, #tpu.memory_space<vmem>>, vector<1x1x32xf32>
    %5 = vector.shape_cast %4 : vector<1x1x32xf32> to vector<1x32xf32>
    %c0_7 = arith.constant 0 : index
    %c0_8 = arith.constant 0 : index
    %c0_9 = arith.constant 0 : index
    %6 = vector.load %arg4[%c0_7, %c0_8, %c0_9] : memref<3x1x32xf32, #tpu.memory_space<vmem>>, vector<1x1x32xf32>
    %7 = vector.shape_cast %6 : vector<1x1x32xf32> to vector<1x32xf32>
    %8 = arith.addf %5, %7 : vector<1x32xf32>
    %9 = vector.broadcast %8 : vector<1x32xf32> to vector<16x32xf32>
    %10 = arith.addf %3, %9 : vector<16x32xf32>
    %c1 = arith.constant 1 : index
    %c0_10 = arith.constant 0 : index
    %c0_11 = arith.constant 0 : index
    %11 = vector.load %arg1[%c1, %c0_10, %c0_11] : memref<3x16x32xf32, #tpu.memory_space<vmem>>, vector<1x16x32xf32>
    %12 = vector.shape_cast %11 : vector<1x16x32xf32> to vector<16x32xf32>
    %cst_12 = arith.constant dense<0.000000e+00> : vector<16x32xf32>
    %13 = tpu.matmul %0, %12, %cst_12 {dimension_numbers = #tpu.dot_dimension_numbers<[1], [0], [0], [1], [0, 0, 1, 1], [], []>} : vector<16x16xf32>, vector<16x32xf32>, vector<16x32xf32> -> vector<16x32xf32>
    %c1_13 = arith.constant 1 : index
    %c0_14 = arith.constant 0 : index
    %c0_15 = arith.constant 0 : index
    %14 = vector.load %arg3[%c1_13, %c0_14, %c0_15] : memref<3x1x32xf32, #tpu.memory_space<vmem>>, vector<1x1x32xf32>
    %15 = vector.shape_cast %14 : vector<1x1x32xf32> to vector<1x32xf32>
    %c1_16 = arith.constant 1 : index
    %c0_17 = arith.constant 0 : index
    %c0_18 = arith.constant 0 : index
    %16 = vector.load %arg4[%c1_16, %c0_17, %c0_18] : memref<3x1x32xf32, #tpu.memory_space<vmem>>, vector<1x1x32xf32>
    %17 = vector.shape_cast %16 : vector<1x1x32xf32> to vector<1x32xf32>
    %18 = arith.addf %15, %17 : vector<1x32xf32>
    %19 = vector.broadcast %18 : vector<1x32xf32> to vector<16x32xf32>
    %20 = arith.addf %13, %19 : vector<16x32xf32>
    %c2 = arith.constant 2 : index
    %c0_19 = arith.constant 0 : index
    %c0_20 = arith.constant 0 : index
    %21 = vector.load %arg1[%c2, %c0_19, %c0_20] : memref<3x16x32xf32, #tpu.memory_space<vmem>>, vector<1x16x32xf32>
    %22 = vector.shape_cast %21 : vector<1x16x32xf32> to vector<16x32xf32>
    %cst_21 = arith.constant dense<0.000000e+00> : vector<16x32xf32>
    %23 = tpu.matmul %0, %22, %cst_21 {dimension_numbers = #tpu.dot_dimension_numbers<[1], [0], [0], [1], [0, 0, 1, 1], [], []>} : vector<16x16xf32>, vector<16x32xf32>, vector<16x32xf32> -> vector<16x32xf32>
    %c2_22 = arith.constant 2 : index
    %c0_23 = arith.constant 0 : index
    %c0_24 = arith.constant 0 : index
    %24 = vector.load %arg3[%c2_22, %c0_23, %c0_24] : memref<3x1x32xf32, #tpu.memory_space<vmem>>, vector<1x1x32xf32>
    %25 = vector.shape_cast %24 : vector<1x1x32xf32> to vector<1x32xf32>
    %26 = vector.broadcast %25 : vector<1x32xf32> to vector<16x32xf32>
    %27 = arith.addf %23, %26 : vector<16x32xf32>
    %c0_25 = arith.constant 0 : index
    %c0_26 = arith.constant 0 : index
    %c0_27 = arith.constant 0 : index
    %28 = vector.load %arg2[%c0_25, %c0_26, %c0_27] : memref<3x32x32xf32, #tpu.memory_space<vmem>>, vector<1x32x32xf32>
    %29 = vector.shape_cast %28 : vector<1x32x32xf32> to vector<32x32xf32>
    %c1_28 = arith.constant 1 : index
    %c0_29 = arith.constant 0 : index
    %c0_30 = arith.constant 0 : index
    %30 = vector.load %arg2[%c1_28, %c0_29, %c0_30] : memref<3x32x32xf32, #tpu.memory_space<vmem>>, vector<1x32x32xf32>
    %31 = vector.shape_cast %30 : vector<1x32x32xf32> to vector<32x32xf32>
    %c2_31 = arith.constant 2 : index
    %c0_32 = arith.constant 0 : index
    %c0_33 = arith.constant 0 : index
    %32 = vector.load %arg2[%c2_31, %c0_32, %c0_33] : memref<3x32x32xf32, #tpu.memory_space<vmem>>, vector<1x32x32xf32>
    %33 = vector.shape_cast %32 : vector<1x32x32xf32> to vector<32x32xf32>
    %c2_34 = arith.constant 2 : index
    %c0_35 = arith.constant 0 : index
    %c0_36 = arith.constant 0 : index
    %34 = vector.load %arg4[%c2_34, %c0_35, %c0_36] : memref<3x1x32xf32, #tpu.memory_space<vmem>>, vector<1x1x32xf32>
    %35 = vector.shape_cast %34 : vector<1x1x32xf32> to vector<1x32xf32>
    %cst_37 = arith.constant 0.000000e+00 : f32
    %36 = vector.broadcast %cst_37 : f32 to vector<2x32xf32>
    %cst_38 = arith.constant dense<0.000000e+00> : vector<2x32xf32>
    %37 = tpu.matmul %36, %29, %cst_38 {dimension_numbers = #tpu.dot_dimension_numbers<[1], [0], [0], [1], [0, 0, 1, 1], [], []>} : vector<2x32xf32>, vector<32x32xf32>, vector<2x32xf32> -> vector<2x32xf32>
    %cst_39 = arith.constant dense<0.000000e+00> : vector<2x32xf32>
    %38 = tpu.matmul %36, %31, %cst_39 {dimension_numbers = #tpu.dot_dimension_numbers<[1], [0], [0], [1], [0, 0, 1, 1], [], []>} : vector<2x32xf32>, vector<32x32xf32>, vector<2x32xf32> -> vector<2x32xf32>
    %cst_40 = arith.constant dense<0.000000e+00> : vector<2x32xf32>
    %39 = tpu.matmul %36, %33, %cst_40 {dimension_numbers = #tpu.dot_dimension_numbers<[1], [0], [0], [1], [0, 0, 1, 1], [], []>} : vector<2x32xf32>, vector<32x32xf32>, vector<2x32xf32> -> vector<2x32xf32>
    %40 = vector.broadcast %35 : vector<1x32xf32> to vector<2x32xf32>
    %41 = arith.addf %39, %40 : vector<2x32xf32>
    %42 = vector.extract_strided_slice %10 {offsets = [0, 0], sizes = [2, 32], strides = [1, 1]} : vector<16x32xf32> to vector<2x32xf32>
    %43 = arith.addf %42, %37 : vector<2x32xf32>
    %44 = arith.negf %43 : vector<2x32xf32>
    %45 = math.exp %44 : vector<2x32xf32>
    %cst_41 = arith.constant 1.000000e+00 : f32
    %46 = vector.broadcast %cst_41 : f32 to vector<2x32xf32>
    %47 = arith.addf %46, %45 : vector<2x32xf32>
    %48 = arith.divf %46, %47 : vector<2x32xf32>
    %49 = vector.extract_strided_slice %20 {offsets = [0, 0], sizes = [2, 32], strides = [1, 1]} : vector<16x32xf32> to vector<2x32xf32>
    %50 = arith.addf %49, %38 : vector<2x32xf32>
    %51 = arith.negf %50 : vector<2x32xf32>
    %52 = math.exp %51 : vector<2x32xf32>
    %cst_42 = arith.constant 1.000000e+00 : f32
    %53 = vector.broadcast %cst_42 : f32 to vector<2x32xf32>
    %54 = arith.addf %53, %52 : vector<2x32xf32>
    %55 = arith.divf %53, %54 : vector<2x32xf32>
    %56 = vector.extract_strided_slice %27 {offsets = [0, 0], sizes = [2, 32], strides = [1, 1]} : vector<16x32xf32> to vector<2x32xf32>
    %57 = arith.mulf %48, %41 : vector<2x32xf32>
    %58 = arith.addf %56, %57 : vector<2x32xf32>
    %59 = math.tanh %58 : vector<2x32xf32>
    %cst_43 = arith.constant 1.000000e+00 : f32
    %60 = vector.broadcast %cst_43 : f32 to vector<2x32xf32>
    %61 = arith.subf %60, %55 : vector<2x32xf32>
    %62 = arith.mulf %61, %59 : vector<2x32xf32>
    %63 = arith.mulf %55, %36 : vector<2x32xf32>
    %64 = arith.addf %62, %63 : vector<2x32xf32>
    %c0_44 = arith.constant 0 : index
    %c0_45 = arith.constant 0 : index
    %65 = vector.load %arg17[%c0_44, %c0_45] : memref<16x32xf32, #tpu.memory_space<vmem>>, vector<2x32xf32>
    tpu.vector_store %arg17[%c0_44, %c0_45], %64 {strides = array<i32>} : memref<16x32xf32, #tpu.memory_space<vmem>>, vector<2x32xf32>,
    %cst_46 = arith.constant dense<0.000000e+00> : vector<2x32xf32>
    %66 = tpu.matmul %64, %29, %cst_46 {dimension_numbers = #tpu.dot_dimension_numbers<[1], [0], [0], [1], [0, 0, 1, 1], [], []>} : vector<2x32xf32>, vector<32x32xf32>, vector<2x32xf32> -> vector<2x32xf32>
    %cst_47 = arith.constant dense<0.000000e+00> : vector<2x32xf32>
    %67 = tpu.matmul %64, %31, %cst_47 {dimension_numbers = #tpu.dot_dimension_numbers<[1], [0], [0], [1], [0, 0, 1, 1], [], []>} : vector<2x32xf32>, vector<32x32xf32>, vector<2x32xf32> -> vector<2x32xf32>
    %cst_48 = arith.constant dense<0.000000e+00> : vector<2x32xf32>
    %68 = tpu.matmul %64, %33, %cst_48 {dimension_numbers = #tpu.dot_dimension_numbers<[1], [0], [0], [1], [0, 0, 1, 1], [], []>} : vector<2x32xf32>, vector<32x32xf32>, vector<2x32xf32> -> vector<2x32xf32>
    %69 = vector.broadcast %35 : vector<1x32xf32> to vector<2x32xf32>
    %70 = arith.addf %68, %69 : vector<2x32xf32>
    %71 = vector.extract_strided_slice %10 {offsets = [2, 0], sizes = [2, 32], strides = [1, 1]} : vector<16x32xf32> to vector<2x32xf32>
    %72 = arith.addf %71, %66 : vector<2x32xf32>
    %73 = arith.negf %72 : vector<2x32xf32>
    %74 = math.exp %73 : vector<2x32xf32>
    %cst_49 = arith.constant 1.000000e+00 : f32
    %75 = vector.broadcast %cst_49 : f32 to vector<2x32xf32>
    %76 = arith.addf %75, %74 : vector<2x32xf32>
    %77 = arith.divf %75, %76 : vector<2x32xf32>
    %78 = vector.extract_strided_slice %20 {offsets = [2, 0], sizes = [2, 32], strides = [1, 1]} : vector<16x32xf32> to vector<2x32xf32>
    %79 = arith.addf %78, %67 : vector<2x32xf32>
    %80 = arith.negf %79 : vector<2x32xf32>
    %81 = math.exp %80 : vector<2x32xf32>
    %cst_50 = arith.constant 1.000000e+00 : f32
    %82 = vector.broadcast %cst_50 : f32 to vector<2x32xf32>
    %83 = arith.addf %82, %81 : vector<2x32xf32>
    %84 = arith.divf %82, %83 : vector<2x32xf32>
    %85 = vector.extract_strided_slice %27 {offsets = [2, 0], sizes = [2, 32], strides = [1, 1]} : vector<16x32xf32> to vector<2x32xf32>
    %86 = arith.mulf %77, %70 : vector<2x32xf32>
    %87 = arith.addf %85, %86 : vector<2x32xf32>
    %88 = math.tanh %87 : vector<2x32xf32>
    %cst_51 = arith.constant 1.000000e+00 : f32
    %89 = vector.broadcast %cst_51 : f32 to vector<2x32xf32>
    %90 = arith.subf %89, %84 : vector<2x32xf32>
    %91 = arith.mulf %90, %88 : vector<2x32xf32>
    %92 = arith.mulf %84, %64 : vector<2x32xf32>
    %93 = arith.addf %91, %92 : vector<2x32xf32>
    %c2_52 = arith.constant 2 : index
    %c0_53 = arith.constant 0 : index
    %94 = vector.load %arg17[%c2_52, %c0_53] : memref<16x32xf32, #tpu.memory_space<vmem>>, vector<2x32xf32>
    tpu.vector_store %arg17[%c2_52, %c0_53], %93 {strides = array<i32>} : memref<16x32xf32, #tpu.memory_space<vmem>>, vector<2x32xf32>,
    %cst_54 = arith.constant dense<0.000000e+00> : vector<2x32xf32>
    %95 = tpu.matmul %93, %29, %cst_54 {dimension_numbers = #tpu.dot_dimension_numbers<[1], [0], [0], [1], [0, 0, 1, 1], [], []>} : vector<2x32xf32>, vector<32x32xf32>, vector<2x32xf32> -> vector<2x32xf32>
    %cst_55 = arith.constant dense<0.000000e+00> : vector<2x32xf32>
    %96 = tpu.matmul %93, %31, %cst_55 {dimension_numbers = #tpu.dot_dimension_numbers<[1], [0], [0], [1], [0, 0, 1, 1], [], []>} : vector<2x32xf32>, vector<32x32xf32>, vector<2x32xf32> -> vector<2x32xf32>
    %cst_56 = arith.constant dense<0.000000e+00> : vector<2x32xf32>
    %97 = tpu.matmul %93, %33, %cst_56 {dimension_numbers = #tpu.dot_dimension_numbers<[1], [0], [0], [1], [0, 0, 1, 1], [], []>} : vector<2x32xf32>, vector<32x32xf32>, vector<2x32xf32> -> vector<2x32xf32>
    %98 = vector.broadcast %35 : vector<1x32xf32> to vector<2x32xf32>
    %99 = arith.addf %97, %98 : vector<2x32xf32>
    %100 = vector.extract_strided_slice %10 {offsets = [4, 0], sizes = [2, 32], strides = [1, 1]} : vector<16x32xf32> to vector<2x32xf32>
    %101 = arith.addf %100, %95 : vector<2x32xf32>
    %102 = arith.negf %101 : vector<2x32xf32>
    %103 = math.exp %102 : vector<2x32xf32>
    %cst_57 = arith.constant 1.000000e+00 : f32
    %104 = vector.broadcast %cst_57 : f32 to vector<2x32xf32>
    %105 = arith.addf %104, %103 : vector<2x32xf32>
    %106 = arith.divf %104, %105 : vector<2x32xf32>
    %107 = vector.extract_strided_slice %20 {offsets = [4, 0], sizes = [2, 32], strides = [1, 1]} : vector<16x32xf32> to vector<2x32xf32>
    %108 = arith.addf %107, %96 : vector<2x32xf32>
    %109 = arith.negf %108 : vector<2x32xf32>
    %110 = math.exp %109 : vector<2x32xf32>
    %cst_58 = arith.constant 1.000000e+00 : f32
    %111 = vector.broadcast %cst_58 : f32 to vector<2x32xf32>
    %112 = arith.addf %111, %110 : vector<2x32xf32>
    %113 = arith.divf %111, %112 : vector<2x32xf32>
    %114 = vector.extract_strided_slice %27 {offsets = [4, 0], sizes = [2, 32], strides = [1, 1]} : vector<16x32xf32> to vector<2x32xf32>
    %115 = arith.mulf %106, %99 : vector<2x32xf32>
    %116 = arith.addf %114, %115 : vector<2x32xf32>
    %117 = math.tanh %116 : vector<2x32xf32>
    %cst_59 = arith.constant 1.000000e+00 : f32
    %118 = vector.broadcast %cst_59 : f32 to vector<2x32xf32>
    %119 = arith.subf %118, %113 : vector<2x32xf32>
    %120 = arith.mulf %119, %117 : vector<2x32xf32>
    %121 = arith.mulf %113, %93 : vector<2x32xf32>
    %122 = arith.addf %120, %121 : vector<2x32xf32>
    %c4 = arith.constant 4 : index
    %c0_60 = arith.constant 0 : index
    %123 = vector.load %arg17[%c4, %c0_60] : memref<16x32xf32, #tpu.memory_space<vmem>>, vector<2x32xf32>
    tpu.vector_store %arg17[%c4, %c0_60], %122 {strides = array<i32>} : memref<16x32xf32, #tpu.memory_space<vmem>>, vector<2x32xf32>,
    %cst_61 = arith.constant dense<0.000000e+00> : vector<2x32xf32>
    %124 = tpu.matmul %122, %29, %cst_61 {dimension_numbers = #tpu.dot_dimension_numbers<[1], [0], [0], [1], [0, 0, 1, 1], [], []>} : vector<2x32xf32>, vector<32x32xf32>, vector<2x32xf32> -> vector<2x32xf32>
    %cst_62 = arith.constant dense<0.000000e+00> : vector<2x32xf32>
    %125 = tpu.matmul %122, %31, %cst_62 {dimension_numbers = #tpu.dot_dimension_numbers<[1], [0], [0], [1], [0, 0, 1, 1], [], []>} : vector<2x32xf32>, vector<32x32xf32>, vector<2x32xf32> -> vector<2x32xf32>
    %cst_63 = arith.constant dense<0.000000e+00> : vector<2x32xf32>
    %126 = tpu.matmul %122, %33, %cst_63 {dimension_numbers = #tpu.dot_dimension_numbers<[1], [0], [0], [1], [0, 0, 1, 1], [], []>} : vector<2x32xf32>, vector<32x32xf32>, vector<2x32xf32> -> vector<2x32xf32>
    %127 = vector.broadcast %35 : vector<1x32xf32> to vector<2x32xf32>
    %128 = arith.addf %126, %127 : vector<2x32xf32>
    %129 = vector.extract_strided_slice %10 {offsets = [6, 0], sizes = [2, 32], strides = [1, 1]} : vector<16x32xf32> to vector<2x32xf32>
    %130 = arith.addf %129, %124 : vector<2x32xf32>
    %131 = arith.negf %130 : vector<2x32xf32>
    %132 = math.exp %131 : vector<2x32xf32>
    %cst_64 = arith.constant 1.000000e+00 : f32
    %133 = vector.broadcast %cst_64 : f32 to vector<2x32xf32>
    %134 = arith.addf %133, %132 : vector<2x32xf32>
    %135 = arith.divf %133, %134 : vector<2x32xf32>
    %136 = vector.extract_strided_slice %20 {offsets = [6, 0], sizes = [2, 32], strides = [1, 1]} : vector<16x32xf32> to vector<2x32xf32>
    %137 = arith.addf %136, %125 : vector<2x32xf32>
    %138 = arith.negf %137 : vector<2x32xf32>
    %139 = math.exp %138 : vector<2x32xf32>
    %cst_65 = arith.constant 1.000000e+00 : f32
    %140 = vector.broadcast %cst_65 : f32 to vector<2x32xf32>
    %141 = arith.addf %140, %139 : vector<2x32xf32>
    %142 = arith.divf %140, %141 : vector<2x32xf32>
    %143 = vector.extract_strided_slice %27 {offsets = [6, 0], sizes = [2, 32], strides = [1, 1]} : vector<16x32xf32> to vector<2x32xf32>
    %144 = arith.mulf %135, %128 : vector<2x32xf32>
    %145 = arith.addf %143, %144 : vector<2x32xf32>
    %146 = math.tanh %145 : vector<2x32xf32>
    %cst_66 = arith.constant 1.000000e+00 : f32
    %147 = vector.broadcast %cst_66 : f32 to vector<2x32xf32>
    %148 = arith.subf %147, %142 : vector<2x32xf32>
    %149 = arith.mulf %148, %146 : vector<2x32xf32>
    %150 = arith.mulf %142, %122 : vector<2x32xf32>
    %151 = arith.addf %149, %150 : vector<2x32xf32>
    %c6 = arith.constant 6 : index
    %c0_67 = arith.constant 0 : index
    %152 = vector.load %arg17[%c6, %c0_67] : memref<16x32xf32, #tpu.memory_space<vmem>>, vector<2x32xf32>
    tpu.vector_store %arg17[%c6, %c0_67], %151 {strides = array<i32>} : memref<16x32xf32, #tpu.memory_space<vmem>>, vector<2x32xf32>,
    %cst_68 = arith.constant dense<0.000000e+00> : vector<2x32xf32>
    %153 = tpu.matmul %151, %29, %cst_68 {dimension_numbers = #tpu.dot_dimension_numbers<[1], [0], [0], [1], [0, 0, 1, 1], [], []>} : vector<2x32xf32>, vector<32x32xf32>, vector<2x32xf32> -> vector<2x32xf32>
    %cst_69 = arith.constant dense<0.000000e+00> : vector<2x32xf32>
    %154 = tpu.matmul %151, %31, %cst_69 {dimension_numbers = #tpu.dot_dimension_numbers<[1], [0], [0], [1], [0, 0, 1, 1], [], []>} : vector<2x32xf32>, vector<32x32xf32>, vector<2x32xf32> -> vector<2x32xf32>
    %cst_70 = arith.constant dense<0.000000e+00> : vector<2x32xf32>
    %155 = tpu.matmul %151, %33, %cst_70 {dimension_numbers = #tpu.dot_dimension_numbers<[1], [0], [0], [1], [0, 0, 1, 1], [], []>} : vector<2x32xf32>, vector<32x32xf32>, vector<2x32xf32> -> vector<2x32xf32>
    %156 = vector.broadcast %35 : vector<1x32xf32> to vector<2x32xf32>
    %157 = arith.addf %155, %156 : vector<2x32xf32>
    %158 = vector.extract_strided_slice %10 {offsets = [8, 0], sizes = [2, 32], strides = [1, 1]} : vector<16x32xf32> to vector<2x32xf32>
    %159 = arith.addf %158, %153 : vector<2x32xf32>
    %160 = arith.negf %159 : vector<2x32xf32>
    %161 = math.exp %160 : vector<2x32xf32>
    %cst_71 = arith.constant 1.000000e+00 : f32
    %162 = vector.broadcast %cst_71 : f32 to vector<2x32xf32>
    %163 = arith.addf %162, %161 : vector<2x32xf32>
    %164 = arith.divf %162, %163 : vector<2x32xf32>
    %165 = vector.extract_strided_slice %20 {offsets = [8, 0], sizes = [2, 32], strides = [1, 1]} : vector<16x32xf32> to vector<2x32xf32>
    %166 = arith.addf %165, %154 : vector<2x32xf32>
    %167 = arith.negf %166 : vector<2x32xf32>
    %168 = math.exp %167 : vector<2x32xf32>
    %cst_72 = arith.constant 1.000000e+00 : f32
    %169 = vector.broadcast %cst_72 : f32 to vector<2x32xf32>
    %170 = arith.addf %169, %168 : vector<2x32xf32>
    %171 = arith.divf %169, %170 : vector<2x32xf32>
    %172 = vector.extract_strided_slice %27 {offsets = [8, 0], sizes = [2, 32], strides = [1, 1]} : vector<16x32xf32> to vector<2x32xf32>
    %173 = arith.mulf %164, %157 : vector<2x32xf32>
    %174 = arith.addf %172, %173 : vector<2x32xf32>
    %175 = math.tanh %174 : vector<2x32xf32>
    %cst_73 = arith.constant 1.000000e+00 : f32
    %176 = vector.broadcast %cst_73 : f32 to vector<2x32xf32>
    %177 = arith.subf %176, %171 : vector<2x32xf32>
    %178 = arith.mulf %177, %175 : vector<2x32xf32>
    %179 = arith.mulf %171, %151 : vector<2x32xf32>
    %180 = arith.addf %178, %179 : vector<2x32xf32>
    %c8 = arith.constant 8 : index
    %c0_74 = arith.constant 0 : index
    %181 = vector.load %arg17[%c8, %c0_74] : memref<16x32xf32, #tpu.memory_space<vmem>>, vector<2x32xf32>
    tpu.vector_store %arg17[%c8, %c0_74], %180 {strides = array<i32>} : memref<16x32xf32, #tpu.memory_space<vmem>>, vector<2x32xf32>,
    %cst_75 = arith.constant dense<0.000000e+00> : vector<2x32xf32>
    %182 = tpu.matmul %180, %29, %cst_75 {dimension_numbers = #tpu.dot_dimension_numbers<[1], [0], [0], [1], [0, 0, 1, 1], [], []>} : vector<2x32xf32>, vector<32x32xf32>, vector<2x32xf32> -> vector<2x32xf32>
    %cst_76 = arith.constant dense<0.000000e+00> : vector<2x32xf32>
    %183 = tpu.matmul %180, %31, %cst_76 {dimension_numbers = #tpu.dot_dimension_numbers<[1], [0], [0], [1], [0, 0, 1, 1], [], []>} : vector<2x32xf32>, vector<32x32xf32>, vector<2x32xf32> -> vector<2x32xf32>
    %cst_77 = arith.constant dense<0.000000e+00> : vector<2x32xf32>
    %184 = tpu.matmul %180, %33, %cst_77 {dimension_numbers = #tpu.dot_dimension_numbers<[1], [0], [0], [1], [0, 0, 1, 1], [], []>} : vector<2x32xf32>, vector<32x32xf32>, vector<2x32xf32> -> vector<2x32xf32>
    %185 = vector.broadcast %35 : vector<1x32xf32> to vector<2x32xf32>
    %186 = arith.addf %184, %185 : vector<2x32xf32>
    %187 = vector.extract_strided_slice %10 {offsets = [10, 0], sizes = [2, 32], strides = [1, 1]} : vector<16x32xf32> to vector<2x32xf32>
    %188 = arith.addf %187, %182 : vector<2x32xf32>
    %189 = arith.negf %188 : vector<2x32xf32>
    %190 = math.exp %189 : vector<2x32xf32>
    %cst_78 = arith.constant 1.000000e+00 : f32
    %191 = vector.broadcast %cst_78 : f32 to vector<2x32xf32>
    %192 = arith.addf %191, %190 : vector<2x32xf32>
    %193 = arith.divf %191, %192 : vector<2x32xf32>
    %194 = vector.extract_strided_slice %20 {offsets = [10, 0], sizes = [2, 32], strides = [1, 1]} : vector<16x32xf32> to vector<2x32xf32>
    %195 = arith.addf %194, %183 : vector<2x32xf32>
    %196 = arith.negf %195 : vector<2x32xf32>
    %197 = math.exp %196 : vector<2x32xf32>
    %cst_79 = arith.constant 1.000000e+00 : f32
    %198 = vector.broadcast %cst_79 : f32 to vector<2x32xf32>
    %199 = arith.addf %198, %197 : vector<2x32xf32>
    %200 = arith.divf %198, %199 : vector<2x32xf32>
    %201 = vector.extract_strided_slice %27 {offsets = [10, 0], sizes = [2, 32], strides = [1, 1]} : vector<16x32xf32> to vector<2x32xf32>
    %202 = arith.mulf %193, %186 : vector<2x32xf32>
    %203 = arith.addf %201, %202 : vector<2x32xf32>
    %204 = math.tanh %203 : vector<2x32xf32>
    %cst_80 = arith.constant 1.000000e+00 : f32
    %205 = vector.broadcast %cst_80 : f32 to vector<2x32xf32>
    %206 = arith.subf %205, %200 : vector<2x32xf32>
    %207 = arith.mulf %206, %204 : vector<2x32xf32>
    %208 = arith.mulf %200, %180 : vector<2x32xf32>
    %209 = arith.addf %207, %208 : vector<2x32xf32>
    %c10 = arith.constant 10 : index
    %c0_81 = arith.constant 0 : index
    %210 = vector.load %arg17[%c10, %c0_81] : memref<16x32xf32, #tpu.memory_space<vmem>>, vector<2x32xf32>
    tpu.vector_store %arg17[%c10, %c0_81], %209 {strides = array<i32>} : memref<16x32xf32, #tpu.memory_space<vmem>>, vector<2x32xf32>,
    %cst_82 = arith.constant dense<0.000000e+00> : vector<2x32xf32>
    %211 = tpu.matmul %209, %29, %cst_82 {dimension_numbers = #tpu.dot_dimension_numbers<[1], [0], [0], [1], [0, 0, 1, 1], [], []>} : vector<2x32xf32>, vector<32x32xf32>, vector<2x32xf32> -> vector<2x32xf32>
    %cst_83 = arith.constant dense<0.000000e+00> : vector<2x32xf32>
    %212 = tpu.matmul %209, %31, %cst_83 {dimension_numbers = #tpu.dot_dimension_numbers<[1], [0], [0], [1], [0, 0, 1, 1], [], []>} : vector<2x32xf32>, vector<32x32xf32>, vector<2x32xf32> -> vector<2x32xf32>
    %cst_84 = arith.constant dense<0.000000e+00> : vector<2x32xf32>
    %213 = tpu.matmul %209, %33, %cst_84 {dimension_numbers = #tpu.dot_dimension_numbers<[1], [0], [0], [1], [0, 0, 1, 1], [], []>} : vector<2x32xf32>, vector<32x32xf32>, vector<2x32xf32> -> vector<2x32xf32>
    %214 = vector.broadcast %35 : vector<1x32xf32> to vector<2x32xf32>
    %215 = arith.addf %213, %214 : vector<2x32xf32>
    %216 = vector.extract_strided_slice %10 {offsets = [12, 0], sizes = [2, 32], strides = [1, 1]} : vector<16x32xf32> to vector<2x32xf32>
    %217 = arith.addf %216, %211 : vector<2x32xf32>
    %218 = arith.negf %217 : vector<2x32xf32>
    %219 = math.exp %218 : vector<2x32xf32>
    %cst_85 = arith.constant 1.000000e+00 : f32
    %220 = vector.broadcast %cst_85 : f32 to vector<2x32xf32>
    %221 = arith.addf %220, %219 : vector<2x32xf32>
    %222 = arith.divf %220, %221 : vector<2x32xf32>
    %223 = vector.extract_strided_slice %20 {offsets = [12, 0], sizes = [2, 32], strides = [1, 1]} : vector<16x32xf32> to vector<2x32xf32>
    %224 = arith.addf %223, %212 : vector<2x32xf32>
    %225 = arith.negf %224 : vector<2x32xf32>
    %226 = math.exp %225 : vector<2x32xf32>
    %cst_86 = arith.constant 1.000000e+00 : f32
    %227 = vector.broadcast %cst_86 : f32 to vector<2x32xf32>
    %228 = arith.addf %227, %226 : vector<2x32xf32>
    %229 = arith.divf %227, %228 : vector<2x32xf32>
    %230 = vector.extract_strided_slice %27 {offsets = [12, 0], sizes = [2, 32], strides = [1, 1]} : vector<16x32xf32> to vector<2x32xf32>
    %231 = arith.mulf %222, %215 : vector<2x32xf32>
    %232 = arith.addf %230, %231 : vector<2x32xf32>
    %233 = math.tanh %232 : vector<2x32xf32>
    %cst_87 = arith.constant 1.000000e+00 : f32
    %234 = vector.broadcast %cst_87 : f32 to vector<2x32xf32>
    %235 = arith.subf %234, %229 : vector<2x32xf32>
    %236 = arith.mulf %235, %233 : vector<2x32xf32>
    %237 = arith.mulf %229, %209 : vector<2x32xf32>
    %238 = arith.addf %236, %237 : vector<2x32xf32>
    %c12 = arith.constant 12 : index
    %c0_88 = arith.constant 0 : index
    %239 = vector.load %arg17[%c12, %c0_88] : memref<16x32xf32, #tpu.memory_space<vmem>>, vector<2x32xf32>
    tpu.vector_store %arg17[%c12, %c0_88], %238 {strides = array<i32>} : memref<16x32xf32, #tpu.memory_space<vmem>>, vector<2x32xf32>,
    %cst_89 = arith.constant dense<0.000000e+00> : vector<2x32xf32>
    %240 = tpu.matmul %238, %29, %cst_89 {dimension_numbers = #tpu.dot_dimension_numbers<[1], [0], [0], [1], [0, 0, 1, 1], [], []>} : vector<2x32xf32>, vector<32x32xf32>, vector<2x32xf32> -> vector<2x32xf32>
    %cst_90 = arith.constant dense<0.000000e+00> : vector<2x32xf32>
    %241 = tpu.matmul %238, %31, %cst_90 {dimension_numbers = #tpu.dot_dimension_numbers<[1], [0], [0], [1], [0, 0, 1, 1], [], []>} : vector<2x32xf32>, vector<32x32xf32>, vector<2x32xf32> -> vector<2x32xf32>
    %cst_91 = arith.constant dense<0.000000e+00> : vector<2x32xf32>
    %242 = tpu.matmul %238, %33, %cst_91 {dimension_numbers = #tpu.dot_dimension_numbers<[1], [0], [0], [1], [0, 0, 1, 1], [], []>} : vector<2x32xf32>, vector<32x32xf32>, vector<2x32xf32> -> vector<2x32xf32>
    %243 = vector.broadcast %35 : vector<1x32xf32> to vector<2x32xf32>
    %244 = arith.addf %242, %243 : vector<2x32xf32>
    %245 = vector.extract_strided_slice %10 {offsets = [14, 0], sizes = [2, 32], strides = [1, 1]} : vector<16x32xf32> to vector<2x32xf32>
    %246 = arith.addf %245, %240 : vector<2x32xf32>
    %247 = arith.negf %246 : vector<2x32xf32>
    %248 = math.exp %247 : vector<2x32xf32>
    %cst_92 = arith.constant 1.000000e+00 : f32
    %249 = vector.broadcast %cst_92 : f32 to vector<2x32xf32>
    %250 = arith.addf %249, %248 : vector<2x32xf32>
    %251 = arith.divf %249, %250 : vector<2x32xf32>
    %252 = vector.extract_strided_slice %20 {offsets = [14, 0], sizes = [2, 32], strides = [1, 1]} : vector<16x32xf32> to vector<2x32xf32>
    %253 = arith.addf %252, %241 : vector<2x32xf32>
    %254 = arith.negf %253 : vector<2x32xf32>
    %255 = math.exp %254 : vector<2x32xf32>
    %cst_93 = arith.constant 1.000000e+00 : f32
    %256 = vector.broadcast %cst_93 : f32 to vector<2x32xf32>
    %257 = arith.addf %256, %255 : vector<2x32xf32>
    %258 = arith.divf %256, %257 : vector<2x32xf32>
    %259 = vector.extract_strided_slice %27 {offsets = [14, 0], sizes = [2, 32], strides = [1, 1]} : vector<16x32xf32> to vector<2x32xf32>
    %260 = arith.mulf %251, %244 : vector<2x32xf32>
    %261 = arith.addf %259, %260 : vector<2x32xf32>
    %262 = math.tanh %261 : vector<2x32xf32>
    %cst_94 = arith.constant 1.000000e+00 : f32
    %263 = vector.broadcast %cst_94 : f32 to vector<2x32xf32>
    %264 = arith.subf %263, %258 : vector<2x32xf32>
    %265 = arith.mulf %264, %262 : vector<2x32xf32>
    %266 = arith.mulf %258, %238 : vector<2x32xf32>
    %267 = arith.addf %265, %266 : vector<2x32xf32>
    %c14 = arith.constant 14 : index
    %c0_95 = arith.constant 0 : index
    %268 = vector.load %arg17[%c14, %c0_95] : memref<16x32xf32, #tpu.memory_space<vmem>>, vector<2x32xf32>
    tpu.vector_store %arg17[%c14, %c0_95], %267 {strides = array<i32>} : memref<16x32xf32, #tpu.memory_space<vmem>>, vector<2x32xf32>,
    %c0_96 = arith.constant 0 : index
    %c0_97 = arith.constant 0 : index
    %269 = vector.load %arg17[%c0_96, %c0_97] : memref<16x32xf32, #tpu.memory_space<vmem>>, vector<16x32xf32>
    %c0_98 = arith.constant 0 : index
    %c0_99 = arith.constant 0 : index
    %c0_100 = arith.constant 0 : index
    %270 = vector.load %arg5[%c0_98, %c0_99, %c0_100] : memref<3x32x32xf32, #tpu.memory_space<vmem>>, vector<1x32x32xf32>
    %271 = vector.shape_cast %270 : vector<1x32x32xf32> to vector<32x32xf32>
    %cst_101 = arith.constant dense<0.000000e+00> : vector<16x32xf32>
    %272 = tpu.matmul %269, %271, %cst_101 {dimension_numbers = #tpu.dot_dimension_numbers<[1], [0], [0], [1], [0, 0, 1, 1], [], []>} : vector<16x32xf32>, vector<32x32xf32>, vector<16x32xf32> -> vector<16x32xf32>
    %c0_102 = arith.constant 0 : index
    %c0_103 = arith.constant 0 : index
    %c0_104 = arith.constant 0 : index
    %273 = vector.load %arg7[%c0_102, %c0_103, %c0_104] : memref<3x1x32xf32, #tpu.memory_space<vmem>>, vector<1x1x32xf32>
    %274 = vector.shape_cast %273 : vector<1x1x32xf32> to vector<1x32xf32>
    %c0_105 = arith.constant 0 : index
    %c0_106 = arith.constant 0 : index
    %c0_107 = arith.constant 0 : index
    %275 = vector.load %arg8[%c0_105, %c0_106, %c0_107] : memref<3x1x32xf32, #tpu.memory_space<vmem>>, vector<1x1x32xf32>
    %276 = vector.shape_cast %275 : vector<1x1x32xf32> to vector<1x32xf32>
    %277 = arith.addf %274, %276 : vector<1x32xf32>
    %278 = vector.broadcast %277 : vector<1x32xf32> to vector<16x32xf32>
    %279 = arith.addf %272, %278 : vector<16x32xf32>
    %c1_108 = arith.constant 1 : index
    %c0_109 = arith.constant 0 : index
    %c0_110 = arith.constant 0 : index
    %280 = vector.load %arg5[%c1_108, %c0_109, %c0_110] : memref<3x32x32xf32, #tpu.memory_space<vmem>>, vector<1x32x32xf32>
    %281 = vector.shape_cast %280 : vector<1x32x32xf32> to vector<32x32xf32>
    %cst_111 = arith.constant dense<0.000000e+00> : vector<16x32xf32>
    %282 = tpu.matmul %269, %281, %cst_111 {dimension_numbers = #tpu.dot_dimension_numbers<[1], [0], [0], [1], [0, 0, 1, 1], [], []>} : vector<16x32xf32>, vector<32x32xf32>, vector<16x32xf32> -> vector<16x32xf32>
    %c1_112 = arith.constant 1 : index
    %c0_113 = arith.constant 0 : index
    %c0_114 = arith.constant 0 : index
    %283 = vector.load %arg7[%c1_112, %c0_113, %c0_114] : memref<3x1x32xf32, #tpu.memory_space<vmem>>, vector<1x1x32xf32>
    %284 = vector.shape_cast %283 : vector<1x1x32xf32> to vector<1x32xf32>
    %c1_115 = arith.constant 1 : index
    %c0_116 = arith.constant 0 : index
    %c0_117 = arith.constant 0 : index
    %285 = vector.load %arg8[%c1_115, %c0_116, %c0_117] : memref<3x1x32xf32, #tpu.memory_space<vmem>>, vector<1x1x32xf32>
    %286 = vector.shape_cast %285 : vector<1x1x32xf32> to vector<1x32xf32>
    %287 = arith.addf %284, %286 : vector<1x32xf32>
    %288 = vector.broadcast %287 : vector<1x32xf32> to vector<16x32xf32>
    %289 = arith.addf %282, %288 : vector<16x32xf32>
    %c2_118 = arith.constant 2 : index
    %c0_119 = arith.constant 0 : index
    %c0_120 = arith.constant 0 : index
    %290 = vector.load %arg5[%c2_118, %c0_119, %c0_120] : memref<3x32x32xf32, #tpu.memory_space<vmem>>, vector<1x32x32xf32>
    %291 = vector.shape_cast %290 : vector<1x32x32xf32> to vector<32x32xf32>
    %cst_121 = arith.constant dense<0.000000e+00> : vector<16x32xf32>
    %292 = tpu.matmul %269, %291, %cst_121 {dimension_numbers = #tpu.dot_dimension_numbers<[1], [0], [0], [1], [0, 0, 1, 1], [], []>} : vector<16x32xf32>, vector<32x32xf32>, vector<16x32xf32> -> vector<16x32xf32>
    %c2_122 = arith.constant 2 : index
    %c0_123 = arith.constant 0 : index
    %c0_124 = arith.constant 0 : index
    %293 = vector.load %arg7[%c2_122, %c0_123, %c0_124] : memref<3x1x32xf32, #tpu.memory_space<vmem>>, vector<1x1x32xf32>
    %294 = vector.shape_cast %293 : vector<1x1x32xf32> to vector<1x32xf32>
    %295 = vector.broadcast %294 : vector<1x32xf32> to vector<16x32xf32>
    %296 = arith.addf %292, %295 : vector<16x32xf32>
    %c0_125 = arith.constant 0 : index
    %c0_126 = arith.constant 0 : index
    %c0_127 = arith.constant 0 : index
    %297 = vector.load %arg6[%c0_125, %c0_126, %c0_127] : memref<3x32x32xf32, #tpu.memory_space<vmem>>, vector<1x32x32xf32>
    %298 = vector.shape_cast %297 : vector<1x32x32xf32> to vector<32x32xf32>
    %c1_128 = arith.constant 1 : index
    %c0_129 = arith.constant 0 : index
    %c0_130 = arith.constant 0 : index
    %299 = vector.load %arg6[%c1_128, %c0_129, %c0_130] : memref<3x32x32xf32, #tpu.memory_space<vmem>>, vector<1x32x32xf32>
    %300 = vector.shape_cast %299 : vector<1x32x32xf32> to vector<32x32xf32>
    %c2_131 = arith.constant 2 : index
    %c0_132 = arith.constant 0 : index
    %c0_133 = arith.constant 0 : index
    %301 = vector.load %arg6[%c2_131, %c0_132, %c0_133] : memref<3x32x32xf32, #tpu.memory_space<vmem>>, vector<1x32x32xf32>
    %302 = vector.shape_cast %301 : vector<1x32x32xf32> to vector<32x32xf32>
    %c2_134 = arith.constant 2 : index
    %c0_135 = arith.constant 0 : index
    %c0_136 = arith.constant 0 : index
    %303 = vector.load %arg8[%c2_134, %c0_135, %c0_136] : memref<3x1x32xf32, #tpu.memory_space<vmem>>, vector<1x1x32xf32>
    %304 = vector.shape_cast %303 : vector<1x1x32xf32> to vector<1x32xf32>
    %cst_137 = arith.constant 0.000000e+00 : f32
    %305 = vector.broadcast %cst_137 : f32 to vector<2x32xf32>
    %cst_138 = arith.constant dense<0.000000e+00> : vector<2x32xf32>
    %306 = tpu.matmul %305, %298, %cst_138 {dimension_numbers = #tpu.dot_dimension_numbers<[1], [0], [0], [1], [0, 0, 1, 1], [], []>} : vector<2x32xf32>, vector<32x32xf32>, vector<2x32xf32> -> vector<2x32xf32>
    %cst_139 = arith.constant dense<0.000000e+00> : vector<2x32xf32>
    %307 = tpu.matmul %305, %300, %cst_139 {dimension_numbers = #tpu.dot_dimension_numbers<[1], [0], [0], [1], [0, 0, 1, 1], [], []>} : vector<2x32xf32>, vector<32x32xf32>, vector<2x32xf32> -> vector<2x32xf32>
    %cst_140 = arith.constant dense<0.000000e+00> : vector<2x32xf32>
    %308 = tpu.matmul %305, %302, %cst_140 {dimension_numbers = #tpu.dot_dimension_numbers<[1], [0], [0], [1], [0, 0, 1, 1], [], []>} : vector<2x32xf32>, vector<32x32xf32>, vector<2x32xf32> -> vector<2x32xf32>
    %309 = vector.broadcast %304 : vector<1x32xf32> to vector<2x32xf32>
    %310 = arith.addf %308, %309 : vector<2x32xf32>
    %311 = vector.extract_strided_slice %279 {offsets = [0, 0], sizes = [2, 32], strides = [1, 1]} : vector<16x32xf32> to vector<2x32xf32>
    %312 = arith.addf %311, %306 : vector<2x32xf32>
    %313 = arith.negf %312 : vector<2x32xf32>
    %314 = math.exp %313 : vector<2x32xf32>
    %cst_141 = arith.constant 1.000000e+00 : f32
    %315 = vector.broadcast %cst_141 : f32 to vector<2x32xf32>
    %316 = arith.addf %315, %314 : vector<2x32xf32>
    %317 = arith.divf %315, %316 : vector<2x32xf32>
    %318 = vector.extract_strided_slice %289 {offsets = [0, 0], sizes = [2, 32], strides = [1, 1]} : vector<16x32xf32> to vector<2x32xf32>
    %319 = arith.addf %318, %307 : vector<2x32xf32>
    %320 = arith.negf %319 : vector<2x32xf32>
    %321 = math.exp %320 : vector<2x32xf32>
    %cst_142 = arith.constant 1.000000e+00 : f32
    %322 = vector.broadcast %cst_142 : f32 to vector<2x32xf32>
    %323 = arith.addf %322, %321 : vector<2x32xf32>
    %324 = arith.divf %322, %323 : vector<2x32xf32>
    %325 = vector.extract_strided_slice %296 {offsets = [0, 0], sizes = [2, 32], strides = [1, 1]} : vector<16x32xf32> to vector<2x32xf32>
    %326 = arith.mulf %317, %310 : vector<2x32xf32>
    %327 = arith.addf %325, %326 : vector<2x32xf32>
    %328 = math.tanh %327 : vector<2x32xf32>
    %cst_143 = arith.constant 1.000000e+00 : f32
    %329 = vector.broadcast %cst_143 : f32 to vector<2x32xf32>
    %330 = arith.subf %329, %324 : vector<2x32xf32>
    %331 = arith.mulf %330, %328 : vector<2x32xf32>
    %332 = arith.mulf %324, %305 : vector<2x32xf32>
    %333 = arith.addf %331, %332 : vector<2x32xf32>
    %cst_144 = arith.constant dense<0.000000e+00> : vector<2x32xf32>
    %334 = tpu.matmul %333, %298, %cst_144 {dimension_numbers = #tpu.dot_dimension_numbers<[1], [0], [0], [1], [0, 0, 1, 1], [], []>} : vector<2x32xf32>, vector<32x32xf32>, vector<2x32xf32> -> vector<2x32xf32>
    %cst_145 = arith.constant dense<0.000000e+00> : vector<2x32xf32>
    %335 = tpu.matmul %333, %300, %cst_145 {dimension_numbers = #tpu.dot_dimension_numbers<[1], [0], [0], [1], [0, 0, 1, 1], [], []>} : vector<2x32xf32>, vector<32x32xf32>, vector<2x32xf32> -> vector<2x32xf32>
    %cst_146 = arith.constant dense<0.000000e+00> : vector<2x32xf32>
    %336 = tpu.matmul %333, %302, %cst_146 {dimension_numbers = #tpu.dot_dimension_numbers<[1], [0], [0], [1], [0, 0, 1, 1], [], []>} : vector<2x32xf32>, vector<32x32xf32>, vector<2x32xf32> -> vector<2x32xf32>
    %337 = vector.broadcast %304 : vector<1x32xf32> to vector<2x32xf32>
    %338 = arith.addf %336, %337 : vector<2x32xf32>
    %339 = vector.extract_strided_slice %279 {offsets = [2, 0], sizes = [2, 32], strides = [1, 1]} : vector<16x32xf32> to vector<2x32xf32>
    %340 = arith.addf %339, %334 : vector<2x32xf32>
    %341 = arith.negf %340 : vector<2x32xf32>
    %342 = math.exp %341 : vector<2x32xf32>
    %cst_147 = arith.constant 1.000000e+00 : f32
    %343 = vector.broadcast %cst_147 : f32 to vector<2x32xf32>
    %344 = arith.addf %343, %342 : vector<2x32xf32>
    %345 = arith.divf %343, %344 : vector<2x32xf32>
    %346 = vector.extract_strided_slice %289 {offsets = [2, 0], sizes = [2, 32], strides = [1, 1]} : vector<16x32xf32> to vector<2x32xf32>
    %347 = arith.addf %346, %335 : vector<2x32xf32>
    %348 = arith.negf %347 : vector<2x32xf32>
    %349 = math.exp %348 : vector<2x32xf32>
    %cst_148 = arith.constant 1.000000e+00 : f32
    %350 = vector.broadcast %cst_148 : f32 to vector<2x32xf32>
    %351 = arith.addf %350, %349 : vector<2x32xf32>
    %352 = arith.divf %350, %351 : vector<2x32xf32>
    %353 = vector.extract_strided_slice %296 {offsets = [2, 0], sizes = [2, 32], strides = [1, 1]} : vector<16x32xf32> to vector<2x32xf32>
    %354 = arith.mulf %345, %338 : vector<2x32xf32>
    %355 = arith.addf %353, %354 : vector<2x32xf32>
    %356 = math.tanh %355 : vector<2x32xf32>
    %cst_149 = arith.constant 1.000000e+00 : f32
    %357 = vector.broadcast %cst_149 : f32 to vector<2x32xf32>
    %358 = arith.subf %357, %352 : vector<2x32xf32>
    %359 = arith.mulf %358, %356 : vector<2x32xf32>
    %360 = arith.mulf %352, %333 : vector<2x32xf32>
    %361 = arith.addf %359, %360 : vector<2x32xf32>
    %cst_150 = arith.constant dense<0.000000e+00> : vector<2x32xf32>
    %362 = tpu.matmul %361, %298, %cst_150 {dimension_numbers = #tpu.dot_dimension_numbers<[1], [0], [0], [1], [0, 0, 1, 1], [], []>} : vector<2x32xf32>, vector<32x32xf32>, vector<2x32xf32> -> vector<2x32xf32>
    %cst_151 = arith.constant dense<0.000000e+00> : vector<2x32xf32>
    %363 = tpu.matmul %361, %300, %cst_151 {dimension_numbers = #tpu.dot_dimension_numbers<[1], [0], [0], [1], [0, 0, 1, 1], [], []>} : vector<2x32xf32>, vector<32x32xf32>, vector<2x32xf32> -> vector<2x32xf32>
    %cst_152 = arith.constant dense<0.000000e+00> : vector<2x32xf32>
    %364 = tpu.matmul %361, %302, %cst_152 {dimension_numbers = #tpu.dot_dimension_numbers<[1], [0], [0], [1], [0, 0, 1, 1], [], []>} : vector<2x32xf32>, vector<32x32xf32>, vector<2x32xf32> -> vector<2x32xf32>
    %365 = vector.broadcast %304 : vector<1x32xf32> to vector<2x32xf32>
    %366 = arith.addf %364, %365 : vector<2x32xf32>
    %367 = vector.extract_strided_slice %279 {offsets = [4, 0], sizes = [2, 32], strides = [1, 1]} : vector<16x32xf32> to vector<2x32xf32>
    %368 = arith.addf %367, %362 : vector<2x32xf32>
    %369 = arith.negf %368 : vector<2x32xf32>
    %370 = math.exp %369 : vector<2x32xf32>
    %cst_153 = arith.constant 1.000000e+00 : f32
    %371 = vector.broadcast %cst_153 : f32 to vector<2x32xf32>
    %372 = arith.addf %371, %370 : vector<2x32xf32>
    %373 = arith.divf %371, %372 : vector<2x32xf32>
    %374 = vector.extract_strided_slice %289 {offsets = [4, 0], sizes = [2, 32], strides = [1, 1]} : vector<16x32xf32> to vector<2x32xf32>
    %375 = arith.addf %374, %363 : vector<2x32xf32>
    %376 = arith.negf %375 : vector<2x32xf32>
    %377 = math.exp %376 : vector<2x32xf32>
    %cst_154 = arith.constant 1.000000e+00 : f32
    %378 = vector.broadcast %cst_154 : f32 to vector<2x32xf32>
    %379 = arith.addf %378, %377 : vector<2x32xf32>
    %380 = arith.divf %378, %379 : vector<2x32xf32>
    %381 = vector.extract_strided_slice %296 {offsets = [4, 0], sizes = [2, 32], strides = [1, 1]} : vector<16x32xf32> to vector<2x32xf32>
    %382 = arith.mulf %373, %366 : vector<2x32xf32>
    %383 = arith.addf %381, %382 : vector<2x32xf32>
    %384 = math.tanh %383 : vector<2x32xf32>
    %cst_155 = arith.constant 1.000000e+00 : f32
    %385 = vector.broadcast %cst_155 : f32 to vector<2x32xf32>
    %386 = arith.subf %385, %380 : vector<2x32xf32>
    %387 = arith.mulf %386, %384 : vector<2x32xf32>
    %388 = arith.mulf %380, %361 : vector<2x32xf32>
    %389 = arith.addf %387, %388 : vector<2x32xf32>
    %cst_156 = arith.constant dense<0.000000e+00> : vector<2x32xf32>
    %390 = tpu.matmul %389, %298, %cst_156 {dimension_numbers = #tpu.dot_dimension_numbers<[1], [0], [0], [1], [0, 0, 1, 1], [], []>} : vector<2x32xf32>, vector<32x32xf32>, vector<2x32xf32> -> vector<2x32xf32>
    %cst_157 = arith.constant dense<0.000000e+00> : vector<2x32xf32>
    %391 = tpu.matmul %389, %300, %cst_157 {dimension_numbers = #tpu.dot_dimension_numbers<[1], [0], [0], [1], [0, 0, 1, 1], [], []>} : vector<2x32xf32>, vector<32x32xf32>, vector<2x32xf32> -> vector<2x32xf32>
    %cst_158 = arith.constant dense<0.000000e+00> : vector<2x32xf32>
    %392 = tpu.matmul %389, %302, %cst_158 {dimension_numbers = #tpu.dot_dimension_numbers<[1], [0], [0], [1], [0, 0, 1, 1], [], []>} : vector<2x32xf32>, vector<32x32xf32>, vector<2x32xf32> -> vector<2x32xf32>
    %393 = vector.broadcast %304 : vector<1x32xf32> to vector<2x32xf32>
    %394 = arith.addf %392, %393 : vector<2x32xf32>
    %395 = vector.extract_strided_slice %279 {offsets = [6, 0], sizes = [2, 32], strides = [1, 1]} : vector<16x32xf32> to vector<2x32xf32>
    %396 = arith.addf %395, %390 : vector<2x32xf32>
    %397 = arith.negf %396 : vector<2x32xf32>
    %398 = math.exp %397 : vector<2x32xf32>
    %cst_159 = arith.constant 1.000000e+00 : f32
    %399 = vector.broadcast %cst_159 : f32 to vector<2x32xf32>
    %400 = arith.addf %399, %398 : vector<2x32xf32>
    %401 = arith.divf %399, %400 : vector<2x32xf32>
    %402 = vector.extract_strided_slice %289 {offsets = [6, 0], sizes = [2, 32], strides = [1, 1]} : vector<16x32xf32> to vector<2x32xf32>
    %403 = arith.addf %402, %391 : vector<2x32xf32>
    %404 = arith.negf %403 : vector<2x32xf32>
    %405 = math.exp %404 : vector<2x32xf32>
    %cst_160 = arith.constant 1.000000e+00 : f32
    %406 = vector.broadcast %cst_160 : f32 to vector<2x32xf32>
    %407 = arith.addf %406, %405 : vector<2x32xf32>
    %408 = arith.divf %406, %407 : vector<2x32xf32>
    %409 = vector.extract_strided_slice %296 {offsets = [6, 0], sizes = [2, 32], strides = [1, 1]} : vector<16x32xf32> to vector<2x32xf32>
    %410 = arith.mulf %401, %394 : vector<2x32xf32>
    %411 = arith.addf %409, %410 : vector<2x32xf32>
    %412 = math.tanh %411 : vector<2x32xf32>
    %cst_161 = arith.constant 1.000000e+00 : f32
    %413 = vector.broadcast %cst_161 : f32 to vector<2x32xf32>
    %414 = arith.subf %413, %408 : vector<2x32xf32>
    %415 = arith.mulf %414, %412 : vector<2x32xf32>
    %416 = arith.mulf %408, %389 : vector<2x32xf32>
    %417 = arith.addf %415, %416 : vector<2x32xf32>
    %cst_162 = arith.constant dense<0.000000e+00> : vector<2x32xf32>
    %418 = tpu.matmul %417, %298, %cst_162 {dimension_numbers = #tpu.dot_dimension_numbers<[1], [0], [0], [1], [0, 0, 1, 1], [], []>} : vector<2x32xf32>, vector<32x32xf32>, vector<2x32xf32> -> vector<2x32xf32>
    %cst_163 = arith.constant dense<0.000000e+00> : vector<2x32xf32>
    %419 = tpu.matmul %417, %300, %cst_163 {dimension_numbers = #tpu.dot_dimension_numbers<[1], [0], [0], [1], [0, 0, 1, 1], [], []>} : vector<2x32xf32>, vector<32x32xf32>, vector<2x32xf32> -> vector<2x32xf32>
    %cst_164 = arith.constant dense<0.000000e+00> : vector<2x32xf32>
    %420 = tpu.matmul %417, %302, %cst_164 {dimension_numbers = #tpu.dot_dimension_numbers<[1], [0], [0], [1], [0, 0, 1, 1], [], []>} : vector<2x32xf32>, vector<32x32xf32>, vector<2x32xf32> -> vector<2x32xf32>
    %421 = vector.broadcast %304 : vector<1x32xf32> to vector<2x32xf32>
    %422 = arith.addf %420, %421 : vector<2x32xf32>
    %423 = vector.extract_strided_slice %279 {offsets = [8, 0], sizes = [2, 32], strides = [1, 1]} : vector<16x32xf32> to vector<2x32xf32>
    %424 = arith.addf %423, %418 : vector<2x32xf32>
    %425 = arith.negf %424 : vector<2x32xf32>
    %426 = math.exp %425 : vector<2x32xf32>
    %cst_165 = arith.constant 1.000000e+00 : f32
    %427 = vector.broadcast %cst_165 : f32 to vector<2x32xf32>
    %428 = arith.addf %427, %426 : vector<2x32xf32>
    %429 = arith.divf %427, %428 : vector<2x32xf32>
    %430 = vector.extract_strided_slice %289 {offsets = [8, 0], sizes = [2, 32], strides = [1, 1]} : vector<16x32xf32> to vector<2x32xf32>
    %431 = arith.addf %430, %419 : vector<2x32xf32>
    %432 = arith.negf %431 : vector<2x32xf32>
    %433 = math.exp %432 : vector<2x32xf32>
    %cst_166 = arith.constant 1.000000e+00 : f32
    %434 = vector.broadcast %cst_166 : f32 to vector<2x32xf32>
    %435 = arith.addf %434, %433 : vector<2x32xf32>
    %436 = arith.divf %434, %435 : vector<2x32xf32>
    %437 = vector.extract_strided_slice %296 {offsets = [8, 0], sizes = [2, 32], strides = [1, 1]} : vector<16x32xf32> to vector<2x32xf32>
    %438 = arith.mulf %429, %422 : vector<2x32xf32>
    %439 = arith.addf %437, %438 : vector<2x32xf32>
    %440 = math.tanh %439 : vector<2x32xf32>
    %cst_167 = arith.constant 1.000000e+00 : f32
    %441 = vector.broadcast %cst_167 : f32 to vector<2x32xf32>
    %442 = arith.subf %441, %436 : vector<2x32xf32>
    %443 = arith.mulf %442, %440 : vector<2x32xf32>
    %444 = arith.mulf %436, %417 : vector<2x32xf32>
    %445 = arith.addf %443, %444 : vector<2x32xf32>
    %cst_168 = arith.constant dense<0.000000e+00> : vector<2x32xf32>
    %446 = tpu.matmul %445, %298, %cst_168 {dimension_numbers = #tpu.dot_dimension_numbers<[1], [0], [0], [1], [0, 0, 1, 1], [], []>} : vector<2x32xf32>, vector<32x32xf32>, vector<2x32xf32> -> vector<2x32xf32>
    %cst_169 = arith.constant dense<0.000000e+00> : vector<2x32xf32>
    %447 = tpu.matmul %445, %300, %cst_169 {dimension_numbers = #tpu.dot_dimension_numbers<[1], [0], [0], [1], [0, 0, 1, 1], [], []>} : vector<2x32xf32>, vector<32x32xf32>, vector<2x32xf32> -> vector<2x32xf32>
    %cst_170 = arith.constant dense<0.000000e+00> : vector<2x32xf32>
    %448 = tpu.matmul %445, %302, %cst_170 {dimension_numbers = #tpu.dot_dimension_numbers<[1], [0], [0], [1], [0, 0, 1, 1], [], []>} : vector<2x32xf32>, vector<32x32xf32>, vector<2x32xf32> -> vector<2x32xf32>
    %449 = vector.broadcast %304 : vector<1x32xf32> to vector<2x32xf32>
    %450 = arith.addf %448, %449 : vector<2x32xf32>
    %451 = vector.extract_strided_slice %279 {offsets = [10, 0], sizes = [2, 32], strides = [1, 1]} : vector<16x32xf32> to vector<2x32xf32>
    %452 = arith.addf %451, %446 : vector<2x32xf32>
    %453 = arith.negf %452 : vector<2x32xf32>
    %454 = math.exp %453 : vector<2x32xf32>
    %cst_171 = arith.constant 1.000000e+00 : f32
    %455 = vector.broadcast %cst_171 : f32 to vector<2x32xf32>
    %456 = arith.addf %455, %454 : vector<2x32xf32>
    %457 = arith.divf %455, %456 : vector<2x32xf32>
    %458 = vector.extract_strided_slice %289 {offsets = [10, 0], sizes = [2, 32], strides = [1, 1]} : vector<16x32xf32> to vector<2x32xf32>
    %459 = arith.addf %458, %447 : vector<2x32xf32>
    %460 = arith.negf %459 : vector<2x32xf32>
    %461 = math.exp %460 : vector<2x32xf32>
    %cst_172 = arith.constant 1.000000e+00 : f32
    %462 = vector.broadcast %cst_172 : f32 to vector<2x32xf32>
    %463 = arith.addf %462, %461 : vector<2x32xf32>
    %464 = arith.divf %462, %463 : vector<2x32xf32>
    %465 = vector.extract_strided_slice %296 {offsets = [10, 0], sizes = [2, 32], strides = [1, 1]} : vector<16x32xf32> to vector<2x32xf32>
    %466 = arith.mulf %457, %450 : vector<2x32xf32>
    %467 = arith.addf %465, %466 : vector<2x32xf32>
    %468 = math.tanh %467 : vector<2x32xf32>
    %cst_173 = arith.constant 1.000000e+00 : f32
    %469 = vector.broadcast %cst_173 : f32 to vector<2x32xf32>
    %470 = arith.subf %469, %464 : vector<2x32xf32>
    %471 = arith.mulf %470, %468 : vector<2x32xf32>
    %472 = arith.mulf %464, %445 : vector<2x32xf32>
    %473 = arith.addf %471, %472 : vector<2x32xf32>
    %cst_174 = arith.constant dense<0.000000e+00> : vector<2x32xf32>
    %474 = tpu.matmul %473, %298, %cst_174 {dimension_numbers = #tpu.dot_dimension_numbers<[1], [0], [0], [1], [0, 0, 1, 1], [], []>} : vector<2x32xf32>, vector<32x32xf32>, vector<2x32xf32> -> vector<2x32xf32>
    %cst_175 = arith.constant dense<0.000000e+00> : vector<2x32xf32>
    %475 = tpu.matmul %473, %300, %cst_175 {dimension_numbers = #tpu.dot_dimension_numbers<[1], [0], [0], [1], [0, 0, 1, 1], [], []>} : vector<2x32xf32>, vector<32x32xf32>, vector<2x32xf32> -> vector<2x32xf32>
    %cst_176 = arith.constant dense<0.000000e+00> : vector<2x32xf32>
    %476 = tpu.matmul %473, %302, %cst_176 {dimension_numbers = #tpu.dot_dimension_numbers<[1], [0], [0], [1], [0, 0, 1, 1], [], []>} : vector<2x32xf32>, vector<32x32xf32>, vector<2x32xf32> -> vector<2x32xf32>
    %477 = vector.broadcast %304 : vector<1x32xf32> to vector<2x32xf32>
    %478 = arith.addf %476, %477 : vector<2x32xf32>
    %479 = vector.extract_strided_slice %279 {offsets = [12, 0], sizes = [2, 32], strides = [1, 1]} : vector<16x32xf32> to vector<2x32xf32>
    %480 = arith.addf %479, %474 : vector<2x32xf32>
    %481 = arith.negf %480 : vector<2x32xf32>
    %482 = math.exp %481 : vector<2x32xf32>
    %cst_177 = arith.constant 1.000000e+00 : f32
    %483 = vector.broadcast %cst_177 : f32 to vector<2x32xf32>
    %484 = arith.addf %483, %482 : vector<2x32xf32>
    %485 = arith.divf %483, %484 : vector<2x32xf32>
    %486 = vector.extract_strided_slice %289 {offsets = [12, 0], sizes = [2, 32], strides = [1, 1]} : vector<16x32xf32> to vector<2x32xf32>
    %487 = arith.addf %486, %475 : vector<2x32xf32>
    %488 = arith.negf %487 : vector<2x32xf32>
    %489 = math.exp %488 : vector<2x32xf32>
    %cst_178 = arith.constant 1.000000e+00 : f32
    %490 = vector.broadcast %cst_178 : f32 to vector<2x32xf32>
    %491 = arith.addf %490, %489 : vector<2x32xf32>
    %492 = arith.divf %490, %491 : vector<2x32xf32>
    %493 = vector.extract_strided_slice %296 {offsets = [12, 0], sizes = [2, 32], strides = [1, 1]} : vector<16x32xf32> to vector<2x32xf32>
    %494 = arith.mulf %485, %478 : vector<2x32xf32>
    %495 = arith.addf %493, %494 : vector<2x32xf32>
    %496 = math.tanh %495 : vector<2x32xf32>
    %cst_179 = arith.constant 1.000000e+00 : f32
    %497 = vector.broadcast %cst_179 : f32 to vector<2x32xf32>
    %498 = arith.subf %497, %492 : vector<2x32xf32>
    %499 = arith.mulf %498, %496 : vector<2x32xf32>
    %500 = arith.mulf %492, %473 : vector<2x32xf32>
    %501 = arith.addf %499, %500 : vector<2x32xf32>
    %cst_180 = arith.constant dense<0.000000e+00> : vector<2x32xf32>
    %502 = tpu.matmul %501, %298, %cst_180 {dimension_numbers = #tpu.dot_dimension_numbers<[1], [0], [0], [1], [0, 0, 1, 1], [], []>} : vector<2x32xf32>, vector<32x32xf32>, vector<2x32xf32> -> vector<2x32xf32>
    %cst_181 = arith.constant dense<0.000000e+00> : vector<2x32xf32>
    %503 = tpu.matmul %501, %300, %cst_181 {dimension_numbers = #tpu.dot_dimension_numbers<[1], [0], [0], [1], [0, 0, 1, 1], [], []>} : vector<2x32xf32>, vector<32x32xf32>, vector<2x32xf32> -> vector<2x32xf32>
    %cst_182 = arith.constant dense<0.000000e+00> : vector<2x32xf32>
    %504 = tpu.matmul %501, %302, %cst_182 {dimension_numbers = #tpu.dot_dimension_numbers<[1], [0], [0], [1], [0, 0, 1, 1], [], []>} : vector<2x32xf32>, vector<32x32xf32>, vector<2x32xf32> -> vector<2x32xf32>
    %505 = vector.broadcast %304 : vector<1x32xf32> to vector<2x32xf32>
    %506 = arith.addf %504, %505 : vector<2x32xf32>
    %507 = vector.extract_strided_slice %279 {offsets = [14, 0], sizes = [2, 32], strides = [1, 1]} : vector<16x32xf32> to vector<2x32xf32>
    %508 = arith.addf %507, %502 : vector<2x32xf32>
    %509 = arith.negf %508 : vector<2x32xf32>
    %510 = math.exp %509 : vector<2x32xf32>
    %cst_183 = arith.constant 1.000000e+00 : f32
    %511 = vector.broadcast %cst_183 : f32 to vector<2x32xf32>
    %512 = arith.addf %511, %510 : vector<2x32xf32>
    %513 = arith.divf %511, %512 : vector<2x32xf32>
    %514 = vector.extract_strided_slice %289 {offsets = [14, 0], sizes = [2, 32], strides = [1, 1]} : vector<16x32xf32> to vector<2x32xf32>
    %515 = arith.addf %514, %503 : vector<2x32xf32>
    %516 = arith.negf %515 : vector<2x32xf32>
    %517 = math.exp %516 : vector<2x32xf32>
    %cst_184 = arith.constant 1.000000e+00 : f32
    %518 = vector.broadcast %cst_184 : f32 to vector<2x32xf32>
    %519 = arith.addf %518, %517 : vector<2x32xf32>
    %520 = arith.divf %518, %519 : vector<2x32xf32>
    %521 = vector.extract_strided_slice %296 {offsets = [14, 0], sizes = [2, 32], strides = [1, 1]} : vector<16x32xf32> to vector<2x32xf32>
    %522 = arith.mulf %513, %506 : vector<2x32xf32>
    %523 = arith.addf %521, %522 : vector<2x32xf32>
    %524 = math.tanh %523 : vector<2x32xf32>
    %cst_185 = arith.constant 1.000000e+00 : f32
    %525 = vector.broadcast %cst_185 : f32 to vector<2x32xf32>
    %526 = arith.subf %525, %520 : vector<2x32xf32>
    %527 = arith.mulf %526, %524 : vector<2x32xf32>
    %528 = arith.mulf %520, %501 : vector<2x32xf32>
    %529 = arith.addf %527, %528 : vector<2x32xf32>
    %c0_186 = arith.constant 0 : index
    %c0_187 = arith.constant 0 : index
    %530 = vector.load %arg9[%c0_186, %c0_187] : memref<32x16xf32, #tpu.memory_space<vmem>>, vector<32x16xf32>
    %cst_188 = arith.constant dense<0.000000e+00> : vector<2x16xf32>
    %531 = tpu.matmul %529, %530, %cst_188 {dimension_numbers = #tpu.dot_dimension_numbers<[1], [0], [0], [1], [0, 0, 1, 1], [], []>} : vector<2x32xf32>, vector<32x16xf32>, vector<2x16xf32> -> vector<2x16xf32>
    %c0_189 = arith.constant 0 : index
    %c0_190 = arith.constant 0 : index
    %532 = vector.load %arg10[%c0_189, %c0_190] : memref<1x16xf32, #tpu.memory_space<vmem>>, vector<1x16xf32>
    %533 = vector.broadcast %532 : vector<1x16xf32> to vector<2x16xf32>
    %534 = arith.addf %531, %533 : vector<2x16xf32>
    %cst_191 = arith.constant 0.000000e+00 : f32
    %535 = vector.broadcast %cst_191 : f32 to vector<2x16xf32>
    %536 = arith.maximumf %534, %535 : vector<2x16xf32>
    %c0_192 = arith.constant 0 : index
    %c0_193 = arith.constant 0 : index
    %537 = vector.load %arg11[%c0_192, %c0_193] : memref<16x8xf32, #tpu.memory_space<vmem>>, vector<16x8xf32>
    %cst_194 = arith.constant dense<0.000000e+00> : vector<2x8xf32>
    %538 = tpu.matmul %536, %537, %cst_194 {dimension_numbers = #tpu.dot_dimension_numbers<[1], [0], [0], [1], [0, 0, 1, 1], [], []>} : vector<2x16xf32>, vector<16x8xf32>, vector<2x8xf32> -> vector<2x8xf32>
    %c0_195 = arith.constant 0 : index
    %c0_196 = arith.constant 0 : index
    %539 = vector.load %arg12[%c0_195, %c0_196] : memref<1x8xf32, #tpu.memory_space<vmem>>, vector<1x8xf32>
    %540 = vector.broadcast %539 : vector<1x8xf32> to vector<2x8xf32>
    %541 = arith.addf %538, %540 : vector<2x8xf32>
    %cst_197 = arith.constant 0.000000e+00 : f32
    %542 = vector.broadcast %cst_197 : f32 to vector<2x8xf32>
    %543 = arith.maximumf %541, %542 : vector<2x8xf32>
    %c0_198 = arith.constant 0 : index
    %c0_199 = arith.constant 0 : index
    %544 = vector.load %arg13[%c0_198, %c0_199] : memref<8x6xf32, #tpu.memory_space<vmem>>, vector<8x6xf32>
    %cst_200 = arith.constant dense<0.000000e+00> : vector<2x6xf32>
    %545 = tpu.matmul %543, %544, %cst_200 {dimension_numbers = #tpu.dot_dimension_numbers<[1], [0], [0], [1], [0, 0, 1, 1], [], []>} : vector<2x8xf32>, vector<8x6xf32>, vector<2x6xf32> -> vector<2x6xf32>
    %c0_201 = arith.constant 0 : index
    %c0_202 = arith.constant 0 : index
    %546 = vector.load %arg14[%c0_201, %c0_202] : memref<1x6xf32, #tpu.memory_space<vmem>>, vector<1x6xf32>
    %547 = vector.broadcast %546 : vector<1x6xf32> to vector<2x6xf32>
    %548 = arith.addf %545, %547 : vector<2x6xf32>
    %c0_203 = arith.constant 0 : index
    %c0_204 = arith.constant 0 : index
    %549 = vector.load %arg15[%c0_203, %c0_204] : memref<2x32xf32, #tpu.memory_space<vmem>>, vector<2x32xf32>
    tpu.vector_store %arg15[%c0_203, %c0_204], %529 {strides = array<i32>} : memref<2x32xf32, #tpu.memory_space<vmem>>, vector<2x32xf32>,
    %c0_205 = arith.constant 0 : index
    %c0_206 = arith.constant 0 : index
    %550 = vector.load %arg16[%c0_205, %c0_206] : memref<2x6xf32, #tpu.memory_space<vmem>>, vector<2x6xf32>
    tpu.vector_store %arg16[%c0_205, %c0_206], %548 {strides = array<i32>} : memref<2x6xf32, #tpu.memory_space<vmem>>, vector<2x6xf32>,
    return
  }
}

</mosaic_0001>

<llo_original>
// kernel: tpu_custom_call.1
$region0: #{tpu_custom_call.1}
  #allocation0 [shape = 'u32[]', space=smem, size = 0x4, offset = 0x4, fixed_abs, tag = 'smem constant byte address 0x4 - core index']
  #allocation1 [shape = 'u32[72,128]{1,0:T(1,128)}', space=vmem, size = 0x9000, scoped, tag = 'internal scratch']
  #allocation2 [shape = 'f32[16,32]{1,0:T(8,128)}', space=vmem, size = 0x2000, scoped, tag = 'scratch operand']
  %s0 = inlined_call_operand.hbm [shape: f32[16,16], index: 0, kind: input, shape index: {}]
  %s1 = inlined_call_operand.vmem [shape: f32[3,16,32], index: 1, kind: input, shape index: {}]
  %s2 = inlined_call_operand.hbm [shape: f32[3,32,32], index: 2, kind: input, shape index: {}]
  %s3 = inlined_call_operand.hbm [shape: f32[3,1,32], index: 3, kind: input, shape index: {}]
  %s4 = inlined_call_operand.hbm [shape: f32[3,1,32], index: 4, kind: input, shape index: {}]
  %s5 = inlined_call_operand.hbm [shape: f32[3,32,32], index: 5, kind: input, shape index: {}]
  %s6 = inlined_call_operand.hbm [shape: f32[3,32,32], index: 6, kind: input, shape index: {}]
  %s7 = inlined_call_operand.hbm [shape: f32[3,1,32], index: 7, kind: input, shape index: {}]
  %s8 = inlined_call_operand.hbm [shape: f32[3,1,32], index: 8, kind: input, shape index: {}]
  %s9 = inlined_call_operand.vmem [shape: f32[32,16], index: 9, kind: input, shape index: {}]
  %s10 = inlined_call_operand.vmem [shape: f32[1,16], index: 10, kind: input, shape index: {}]
  %s11 = inlined_call_operand.vmem [shape: f32[16,8], index: 11, kind: input, shape index: {}]
  %s12 = inlined_call_operand.vmem [shape: f32[1,8], index: 12, kind: input, shape index: {}]
  %s13 = inlined_call_operand.vmem [shape: f32[8,6], index: 13, kind: input, shape index: {}]
  %s14 = inlined_call_operand.vmem [shape: f32[1,6], index: 14, kind: input, shape index: {}]
  %s15 = inlined_call_operand.hbm [shape: f32[2,32], index: 15, kind: output, shape index: {0}]
  %s16 = inlined_call_operand.hbm [shape: f32[2,6], index: 16, kind: output, shape index: {1}]
  %17 = xla_tuple %s15, %s16
  %s18 = sld [smem:[#allocation0]]
  $region110: #{tpu_custom_call.1} parent=0
    _
  %s20 = ssub.s32 1, %s18
  %s21 = scalar_select 0, %s20, %s18
  $region1: #{tpu_custom_call.1} parent=0
    #allocation3 [shape = 'u8[8192]{0}', space=vmem, size = 0x2000, scoped, tag = 'input window, operand 0, single buffered']
    #allocation4 [shape = 's32[1]{0}', space=sflag, size = 0x4, scoped, tag = 'scoped memory for tpu_custom_call.1']
    #allocation5 [shape = 's32[1]{0}', space=sflag, size = 0x4, scoped, tag = 'scoped memory for tpu_custom_call.1']
    #allocation6 [shape = 'u8[49152]{0}', space=vmem, size = 0xc000, scoped, tag = 'input window, operand 2, single buffered']
    #allocation7 [shape = 's32[1]{0}', space=sflag, size = 0x4, scoped, tag = 'scoped memory for tpu_custom_call.1']
    #allocation8 [shape = 'u8[1536]{0}', space=vmem, size = 0x800, scoped, tag = 'input window, operand 3, single buffered']
    #allocation9 [shape = 'u8[1536]{0}', space=vmem, size = 0x800, scoped, tag = 'input window, operand 4, single buffered']
    #allocation10 [shape = 's32[1]{0}', space=sflag, size = 0x4, scoped, tag = 'scoped memory for tpu_custom_call.1']
    #allocation11 [shape = 'u8[49152]{0}', space=vmem, size = 0xc000, scoped, tag = 'input window, operand 5, single buffered']
    #allocation12 [shape = 'u8[49152]{0}', space=vmem, size = 0xc000, scoped, tag = 'input window, operand 6, single buffered']
    #allocation13 [shape = 's32[1]{0}', space=sflag, size = 0x4, scoped, tag = 'scoped memory for tpu_custom_call.1']
    #allocation14 [shape = 'u8[1536]{0}', space=vmem, size = 0x800, scoped, tag = 'input window, operand 7, single buffered']
    #allocation15 [shape = 'u8[1536]{0}', space=vmem, size = 0x800, scoped, tag = 'input window, operand 8, single buffered']
    #allocation16 [shape = 's32[1]{0}', space=sflag, size = 0x4, scoped, tag = 'scoped memory for tpu_custom_call.1']
    #allocation17 [shape = 'u8[1024]{0}', space=vmem, size = 0x400, scoped, tag = 'output window, operand 0, single buffered']
    #allocation18 [shape = 'u8[1024]{0}', space=vmem, size = 0x400, scoped, tag = 'output window, operand 1, single buffered']
    #allocation19 [shape = 's32[1]{0}', space=sflag, size = 0x4, scoped, tag = 'scoped memory for tpu_custom_call.1']
    %22 = vsyncpa [#allocation4], 0
    %23 = vsyncpa [#allocation7], 0
    %24 = vsyncpa [#allocation10], 0
    %25 = vsyncpa [#allocation13], 0
    %26 = vsyncpa [#allocation16], 0
    %27 = vsyncpa [#allocation5], 0
    %28 = vsyncpa [#allocation19], 0
    // Predicated region
    $region2: #{tpu_custom_call.1} parent=1 // pred_check
      _
    $region3: #{tpu_custom_call.1} parent=1 // pred_check_branch
      %30 = sbr.rel (0) target = $region5
    $region4: #{tpu_custom_call.1} parent=1 // pred_region
      %32 = vsyncadd [#allocation4], 0
      %s33 = sshll.u32 %s0, 4
      %s34 = int_to_ptr.hbm [resolvable:$true] %s33
      %s35 = sshll.u32 [#allocation3], 4
      %s36 = int_to_ptr.vmem [resolvable:$true] %s35
      %41 = dma.hbm_to_vmem [thread:$0]  %s34, 256, %s36, [#allocation4], 128, 128, 8
    $region5: #{tpu_custom_call.1} parent=1 // pred_fallthru
      _
    // Predicated region
    $region6: #{tpu_custom_call.1} parent=1 // pred_check
      _
    $region7: #{tpu_custom_call.1} parent=1 // pred_check_branch
      %43 = sbr.rel (0) target = $region9
    $region8: #{tpu_custom_call.1} parent=1 // pred_region
      _
    $region9: #{tpu_custom_call.1} parent=1 // pred_fallthru
      _
    // Predicated region
    $region10: #{tpu_custom_call.1} parent=1 // pred_check
      _
    $region11: #{tpu_custom_call.1} parent=1 // pred_check_branch
      %45 = sbr.rel (0) target = $region13
    $region12: #{tpu_custom_call.1} parent=1 // pred_region
      %47 = vsyncadd [#allocation7], 0
      %s48 = sshll.u32 %s2, 4
      %s49 = int_to_ptr.hbm [resolvable:$true] %s48
      %s50 = sshll.u32 [#allocation6], 4
      %s51 = int_to_ptr.vmem [resolvable:$true] %s50
      %56 = dma.hbm_to_vmem [thread:$0]  %s49, 1536, %s51, [#allocation7], 128, 128, 8
    $region13: #{tpu_custom_call.1} parent=1 // pred_fallthru
      _
    // Predicated region
    $region14: #{tpu_custom_call.1} parent=1 // pred_check
      _
    $region15: #{tpu_custom_call.1} parent=1 // pred_check_branch
      %58 = sbr.rel (0) target = $region17
    $region16: #{tpu_custom_call.1} parent=1 // pred_region
      %60 = vsyncadd [#allocation7], 0
      %s61 = sshll.u32 %s3, 4
      %s62 = int_to_ptr.hbm [resolvable:$true] %s61
      %s63 = sshll.u32 [#allocation8], 4
      %s64 = int_to_ptr.vmem [resolvable:$true] %s63
      %69 = dma.hbm_to_vmem [thread:$0]  %s62, 48, %s64, [#allocation7], 16, 16, 1
    $region17: #{tpu_custom_call.1} parent=1 // pred_fallthru
      _
    // Predicated region
    $region18: #{tpu_custom_call.1} parent=1 // pred_check
      _
    $region19: #{tpu_custom_call.1} parent=1 // pred_check_branch
      %71 = sbr.rel (0) target = $region21
    $region20: #{tpu_custom_call.1} parent=1 // pred_region
      %73 = vsyncadd [#allocation10], 0
      %s74 = sshll.u32 %s4, 4
      %s75 = int_to_ptr.hbm [resolvable:$true] %s74
      %s76 = sshll.u32 [#allocation9], 4
      %s77 = int_to_ptr.vmem [resolvable:$true] %s76
      %82 = dma.hbm_to_vmem [thread:$0]  %s75, 48, %s77, [#allocation10], 16, 16, 1
    $region21: #{tpu_custom_call.1} parent=1 // pred_fallthru
      _
    // Predicated region
    $region22: #{tpu_custom_call.1} parent=1 // pred_check
      _
    $region23: #{tpu_custom_call.1} parent=1 // pred_check_branch
      %84 = sbr.rel (0) target = $region25
    $region24: #{tpu_custom_call.1} parent=1 // pred_region
      %86 = vsyncadd [#allocation10], 0
      %s87 = sshll.u32 %s5, 4
      %s88 = int_to_ptr.hbm [resolvable:$true] %s87
      %s89 = sshll.u32 [#allocation11], 4
      %s90 = int_to_ptr.vmem [resolvable:$true] %s89
      %95 = dma.hbm_to_vmem [thread:$0]  %s88, 1536, %s90, [#allocation10], 128, 128, 8
    $region25: #{tpu_custom_call.1} parent=1 // pred_fallthru
      _
    // Predicated region
    $region26: #{tpu_custom_call.1} parent=1 // pred_check
      _
    $region27: #{tpu_custom_call.1} parent=1 // pred_check_branch
      %97 = sbr.rel (0) target = $region29
    $region28: #{tpu_custom_call.1} parent=1 // pred_region
      %99 = vsyncadd [#allocation13], 0
      %s100 = sshll.u32 %s6, 4
      %s101 = int_to_ptr.hbm [resolvable:$true] %s100
      %s102 = sshll.u32 [#allocation12], 4
      %s103 = int_to_ptr.vmem [resolvable:$true] %s102
      %108 = dma.hbm_to_vmem [thread:$0]  %s101, 1536, %s103, [#allocation13], 128, 128, 8
    $region29: #{tpu_custom_call.1} parent=1 // pred_fallthru
      _
    // Predicated region
    $region30: #{tpu_custom_call.1} parent=1 // pred_check
      _
    $region31: #{tpu_custom_call.1} parent=1 // pred_check_branch
      %110 = sbr.rel (0) target = $region33
    $region32: #{tpu_custom_call.1} parent=1 // pred_region
      %112 = vsyncadd [#allocation13], 0
      %s113 = sshll.u32 %s7, 4
      %s114 = int_to_ptr.hbm [resolvable:$true] %s113
      %s115 = sshll.u32 [#allocation14], 4
      %s116 = int_to_ptr.vmem [resolvable:$true] %s115
      %121 = dma.hbm_to_vmem [thread:$0]  %s114, 48, %s116, [#allocation13], 16, 16, 1
    $region33: #{tpu_custom_call.1} parent=1 // pred_fallthru
      _
    // Predicated region
    $region34: #{tpu_custom_call.1} parent=1 // pred_check
      _
    $region35: #{tpu_custom_call.1} parent=1 // pred_check_branch
      %123 = sbr.rel (0) target = $region37
    $region36: #{tpu_custom_call.1} parent=1 // pred_region
      %125 = vsyncadd [#allocation16], 0
      %s126 = sshll.u32 %s8, 4
      %s127 = int_to_ptr.hbm [resolvable:$true] %s126
      %s128 = sshll.u32 [#allocation15], 4
      %s129 = int_to_ptr.vmem [resolvable:$true] %s128
      %134 = dma.hbm_to_vmem [thread:$0]  %s127, 48, %s129, [#allocation16], 16, 16, 1
    $region37: #{tpu_custom_call.1} parent=1 // pred_fallthru
      _
    // Predicated region
    $region38: #{tpu_custom_call.1} parent=1 // pred_check
      _
    $region39: #{tpu_custom_call.1} parent=1 // pred_check_branch
      %136 = sbr.rel (0) target = $region41
    $region40: #{tpu_custom_call.1} parent=1 // pred_region
      _
    $region41: #{tpu_custom_call.1} parent=1 // pred_fallthru
      _
    // Predicated region
    $region42: #{tpu_custom_call.1} parent=1 // pred_check
      _
    $region43: #{tpu_custom_call.1} parent=1 // pred_check_branch
      %138 = sbr.rel (0) target = $region45
    $region44: #{tpu_custom_call.1} parent=1 // pred_region
      _
    $region45: #{tpu_custom_call.1} parent=1 // pred_fallthru
      _
    // Predicated region
    $region46: #{tpu_custom_call.1} parent=1 // pred_check
      _
    $region47: #{tpu_custom_call.1} parent=1 // pred_check_branch
      %140 = sbr.rel (0) target = $region49
    $region48: #{tpu_custom_call.1} parent=1 // pred_region
      _
    $region49: #{tpu_custom_call.1} parent=1 // pred_fallthru
      _
    // Predicated region
    $region50: #{tpu_custom_call.1} parent=1 // pred_check
      _
    $region51: #{tpu_custom_call.1} parent=1 // pred_check_branch
      %142 = sbr.rel (0) target = $region53
    $region52: #{tpu_custom_call.1} parent=1 // pred_region
      _
    $region53: #{tpu_custom_call.1} parent=1 // pred_fallthru
      _
    // Predicated region
    $region54: #{tpu_custom_call.1} parent=1 // pred_check
      _
    $region55: #{tpu_custom_call.1} parent=1 // pred_check_branch
      %144 = sbr.rel (0) target = $region57
    $region56: #{tpu_custom_call.1} parent=1 // pred_region
      _
    $region57: #{tpu_custom_call.1} parent=1 // pred_fallthru
      _
    // Predicated region
    $region58: #{tpu_custom_call.1} parent=1 // pred_check
      _
    $region59: #{tpu_custom_call.1} parent=1 // pred_check_branch
      %146 = sbr.rel (0) target = $region61
    $region60: #{tpu_custom_call.1} parent=1 // pred_region
      _
    $region61: #{tpu_custom_call.1} parent=1 // pred_fallthru
      _
    // Predicated region
    $region62: #{tpu_custom_call.1} parent=1 // pred_check
      _
    $region63: #{tpu_custom_call.1} parent=1 // pred_check_branch
      %148 = sbr.rel (0) target = $region65
    $region64: #{tpu_custom_call.1} parent=1 // pred_region
      %150 = dma.done [#allocation4], 256
    $region65: #{tpu_custom_call.1} parent=1 // pred_fallthru
      _
    // Predicated region
    $region66: #{tpu_custom_call.1} parent=1 // pred_check
      _
    $region67: #{tpu_custom_call.1} parent=1 // pred_check_branch
      %152 = sbr.rel (0) target = $region69
    $region68: #{tpu_custom_call.1} parent=1 // pred_region
      %154 = dma.done [#allocation7], 1536
    $region69: #{tpu_custom_call.1} parent=1 // pred_fallthru
      _
    // Predicated region
    $region70: #{tpu_custom_call.1} parent=1 // pred_check
      _
    $region71: #{tpu_custom_call.1} parent=1 // pred_check_branch
      %156 = sbr.rel (0) target = $region73
    $region72: #{tpu_custom_call.1} parent=1 // pred_region
      %158 = dma.done [#allocation7], 48
    $region73: #{tpu_custom_call.1} parent=1 // pred_fallthru
      _
    // Predicated region
    $region74: #{tpu_custom_call.1} parent=1 // pred_check
      _
    $region75: #{tpu_custom_call.1} parent=1 // pred_check_branch
      %160 = sbr.rel (0) target = $region77
    $region76: #{tpu_custom_call.1} parent=1 // pred_region
      %162 = dma.done [#allocation10], 48
    $region77: #{tpu_custom_call.1} parent=1 // pred_fallthru
      _
    // Predicated region
    $region78: #{tpu_custom_call.1} parent=1 // pred_check
      _
    $region79: #{tpu_custom_call.1} parent=1 // pred_check_branch
      %164 = sbr.rel (0) target = $region81
    $region80: #{tpu_custom_call.1} parent=1 // pred_region
      %166 = dma.done [#allocation10], 1536
    $region81: #{tpu_custom_call.1} parent=1 // pred_fallthru
      _
    // Predicated region
    $region82: #{tpu_custom_call.1} parent=1 // pred_check
      _
    $region83: #{tpu_custom_call.1} parent=1 // pred_check_branch
      %168 = sbr.rel (0) target = $region85
    $region84: #{tpu_custom_call.1} parent=1 // pred_region
      %170 = dma.done [#allocation13], 1536
    $region85: #{tpu_custom_call.1} parent=1 // pred_fallthru
      _
    // Predicated region
    $region86: #{tpu_custom_call.1} parent=1 // pred_check
      _
    $region87: #{tpu_custom_call.1} parent=1 // pred_check_branch
      %172 = sbr.rel (0) target = $region89
    $region88: #{tpu_custom_call.1} parent=1 // pred_region
      %174 = dma.done [#allocation13], 48
    $region89: #{tpu_custom_call.1} parent=1 // pred_fallthru
      _
    // Predicated region
    $region90: #{tpu_custom_call.1} parent=1 // pred_check
      _
    $region91: #{tpu_custom_call.1} parent=1 // pred_check_branch
      %176 = sbr.rel (0) target = $region93
    $region92: #{tpu_custom_call.1} parent=1 // pred_region
      %178 = dma.done [#allocation16], 48
    $region93: #{tpu_custom_call.1} parent=1 // pred_fallthru
      _
    %v179 = vld [vmem:[#allocation3] sm:$0xff]
    %v180 = vld [vmem:[#allocation3 + $0x8] sm:$0xff]
    %v181 = vld [vmem:[%s1] sm:$0xff]
    %v182 = vld [vmem:[%s1 + $0x8] sm:$0xff]
    %v183 = vld [vmem:[#allocation8] sm:$0x1]
    %v184 = vld [vmem:[#allocation9] sm:$0x1]
    %v185 = vadd.f32 %v183, %v184
    %v187 = vperm.slane %v185, 0
    %vm189 = vcmask 130048
    %v191 = vsel %vm189, %v179, 0
    %v194 = vsel %vm189, %v180, 0
    %196 = vmatpush.msra.mxu0 0.0
    %197 = vmatpush.msra.mxu0 0.0
    %198 = vmatpush.msra.mxu0 0.0
    %199 = vmatpush.msra.mxu0 0.0
    %200 = vmatpush.msra.mxu0 0.0
    %201 = vmatpush.msra.mxu0 0.0
    %202 = vmatpush.msra.mxu0 0.0
    %203 = vmatpush.msra.mxu0 0.0
    %204 = vmatpush.msra.mxu0 0.0
    %205 = vmatpush.msra.mxu0 0.0
    %206 = vmatpush.msra.mxu0 0.0
    %207 = vmatpush.msra.mxu0 0.0
    %208 = vmatpush.msra.mxu0 0.0
    %209 = vmatpush.msra.mxu0 0.0
    %210 = vmatpush.msra.mxu0 %v182
    %211 = vmatpush.msra.mxu0 %v181
    %212 = vmatmul.f32.gmra.mxu0 %v191
    %v213 = vpop.f32.mrf.mxu0
    %v214 = vadd.f32 %v187, %v213
    %215 = vmatmul.f32.gmra.mxu0 %v194
    %v216 = vpop.f32.mrf.mxu0
    %v217 = vadd.f32 %v187, %v216
    %218 = vdwg.mxu0
    %s219 = scalar_lea.vmem %s1, 16
    %v220 = vld [vmem:[%s219] sm:$0xff]
    %v221 = vld [vmem:[%s219 + $0x8] sm:$0xff]
    %s222 = scalar_lea.vmem [#allocation8], 1
    %v223 = vld [vmem:[%s222] sm:$0x1]
    %s224 = scalar_lea.vmem [#allocation9], 1
    %v225 = vld [vmem:[%s224] sm:$0x1]
    %v226 = vadd.f32 %v223, %v225
    %v228 = vperm.slane %v226, 0
    %230 = vmatpush.msra.mxu0 0.0
    %231 = vmatpush.msra.mxu0 0.0
    %232 = vmatpush.msra.mxu0 0.0
    %233 = vmatpush.msra.mxu0 0.0
    %234 = vmatpush.msra.mxu0 0.0
    %235 = vmatpush.msra.mxu0 0.0
    %236 = vmatpush.msra.mxu0 0.0
    %237 = vmatpush.msra.mxu0 0.0
    %238 = vmatpush.msra.mxu0 0.0
    %239 = vmatpush.msra.mxu0 0.0
    %240 = vmatpush.msra.mxu0 0.0
    %241 = vmatpush.msra.mxu0 0.0
    %242 = vmatpush.msra.mxu0 0.0
    %243 = vmatpush.msra.mxu0 0.0
    %244 = vmatpush.msra.mxu0 %v221
    %245 = vmatpush.msra.mxu0 %v220
    %246 = vmatmul.f32.gmra.mxu0 %v191
    %v247 = vpop.f32.mrf.mxu0
    %v248 = vadd.f32 %v228, %v247
    %249 = vmatmul.f32.gmra.mxu0 %v194
    %v250 = vpop.f32.mrf.mxu0
    %v251 = vadd.f32 %v228, %v250
    %252 = vdwg.mxu0
    %s253 = scalar_lea.vmem %s1, 32
    %v254 = vld [vmem:[%s253] sm:$0xff]
    %v255 = vld [vmem:[%s253 + $0x8] sm:$0xff]
    %s256 = scalar_lea.vmem [#allocation8], 2
    %v257 = vld [vmem:[%s256] sm:$0x1]
    %v259 = vperm.slane %v257, 0
    %261 = vmatpush.msra.mxu0 0.0
    %262 = vmatpush.msra.mxu0 0.0
    %263 = vmatpush.msra.mxu0 0.0
    %264 = vmatpush.msra.mxu0 0.0
    %265 = vmatpush.msra.mxu0 0.0
    %266 = vmatpush.msra.mxu0 0.0
    %267 = vmatpush.msra.mxu0 0.0
    %268 = vmatpush.msra.mxu0 0.0
    %269 = vmatpush.msra.mxu0 0.0
    %270 = vmatpush.msra.mxu0 0.0
    %271 = vmatpush.msra.mxu0 0.0
    %272 = vmatpush.msra.mxu0 0.0
    %273 = vmatpush.msra.mxu0 0.0
    %274 = vmatpush.msra.mxu0 0.0
    %275 = vmatpush.msra.mxu0 %v255
    %276 = vmatpush.msra.mxu0 %v254
    %277 = vmatmul.f32.gmra.mxu0 %v191
    %v278 = vpop.f32.mrf.mxu0
    %v279 = vadd.f32 %v259, %v278
    %280 = vmatmul.f32.gmra.mxu0 %v194
    %v281 = vpop.f32.mrf.mxu0
    %v282 = vadd.f32 %v259, %v281
    %283 = vdwg.mxu0
    %v284 = vld [vmem:[#allocation6] sm:$0xff]
    %v285 = vld [vmem:[#allocation6 + $0x8] sm:$0xff]
    %v286 = vld [vmem:[#allocation6 + $0x10] sm:$0xff]
    %v287 = vld [vmem:[#allocation6 + $0x18] sm:$0xff]
    %s288 = scalar_lea.vmem [#allocation6], 32
    %v289 = vld [vmem:[%s288] sm:$0xff]
    %v290 = vld [vmem:[%s288 + $0x8] sm:$0xff]
    %v291 = vld [vmem:[%s288 + $0x10] sm:$0xff]
    %v292 = vld [vmem:[%s288 + $0x18] sm:$0xff]
    %s293 = scalar_lea.vmem [#allocation6], 64
    %v294 = vld [vmem:[%s293] sm:$0xff]
    %v295 = vld [vmem:[%s293 + $0x8] sm:$0xff]
    %v296 = vld [vmem:[%s293 + $0x10] sm:$0xff]
    %v297 = vld [vmem:[%s293 + $0x18] sm:$0xff]
    %s298 = scalar_lea.vmem [#allocation9], 2
    %v299 = vld [vmem:[%s298] sm:$0x1]
    %vm300 = vcmask 261120
    %v302 = vsel %vm300, 0.0, 0
    %304 = vmatpush.msra.mxu0 0.0
    %305 = vmatpush.msra.mxu0 0.0
    %306 = vmatpush.msra.mxu0 0.0
    %307 = vmatpush.msra.mxu0 0.0
    %308 = vmatpush.msra.mxu0 0.0
    %309 = vmatpush.msra.mxu0 0.0
    %310 = vmatpush.msra.mxu0 0.0
    %311 = vmatpush.msra.mxu0 0.0
    %312 = vmatpush.msra.mxu0 0.0
    %313 = vmatpush.msra.mxu0 0.0
    %314 = vmatpush.msra.mxu0 0.0
    %315 = vmatpush.msra.mxu0 0.0
    %316 = vmatpush.msra.mxu0 %v287
    %317 = vmatpush.msra.mxu0 %v286
    %318 = vmatpush.msra.mxu0 %v285
    %319 = vmatpush.msra.mxu0 %v284
    %320 = vmatmul.f32.gmra.mxu0 %v302
    %v321 = vpop.f32.mrf.mxu0
    %v322 = vadd.f32 0.0, %v321
    %323 = vdwg.mxu0
    %324 = vmatpush.msra.mxu0 0.0
    %325 = vmatpush.msra.mxu0 0.0
    %326 = vmatpush.msra.mxu0 0.0
    %327 = vmatpush.msra.mxu0 0.0
    %328 = vmatpush.msra.mxu0 0.0
    %329 = vmatpush.msra.mxu0 0.0
    %330 = vmatpush.msra.mxu0 0.0
    %331 = vmatpush.msra.mxu0 0.0
    %332 = vmatpush.msra.mxu0 0.0
    %333 = vmatpush.msra.mxu0 0.0
    %334 = vmatpush.msra.mxu0 0.0
    %335 = vmatpush.msra.mxu0 0.0
    %336 = vmatpush.msra.mxu0 %v292
    %337 = vmatpush.msra.mxu0 %v291
    %338 = vmatpush.msra.mxu0 %v290
    %339 = vmatpush.msra.mxu0 %v289
    %340 = vmatmul.f32.gmra.mxu0 %v302
    %v341 = vpop.f32.mrf.mxu0
    %v342 = vadd.f32 0.0, %v341
    %343 = vdwg.mxu0
    %v345 = vperm.slane %v299, 0
    %347 = vmatpush.msra.mxu0 0.0
    %348 = vmatpush.msra.mxu0 0.0
    %349 = vmatpush.msra.mxu0 0.0
    %350 = vmatpush.msra.mxu0 0.0
    %351 = vmatpush.msra.mxu0 0.0
    %352 = vmatpush.msra.mxu0 0.0
    %353 = vmatpush.msra.mxu0 0.0
    %354 = vmatpush.msra.mxu0 0.0
    %355 = vmatpush.msra.mxu0 0.0
    %356 = vmatpush.msra.mxu0 0.0
    %357 = vmatpush.msra.mxu0 0.0
    %358 = vmatpush.msra.mxu0 0.0
    %359 = vmatpush.msra.mxu0 %v297
    %360 = vmatpush.msra.mxu0 %v296
    %361 = vmatpush.msra.mxu0 %v295
    %362 = vmatpush.msra.mxu0 %v294
    %363 = vmatmul.f32.gmra.mxu0 %v302
    %v364 = vpop.f32.mrf.mxu0
    %v365 = vadd.f32 %v345, %v364
    %366 = vdwg.mxu0
    %v367 = vadd.f32 %v214, %v322
    %v368 = vxor.u32 %v367, 2147483648
    %v369 = vmul.f32 %v368, 1.442695
    %v370 = vpow.pop %v369
    %v371 = vadd.f32 %v370, 1.0
    %v372 = vrcp.pop %v371
    %v373 = vmul.f32 %v371, %v372
    %v374 = vsub.f32 1.0, %v373
    %v375 = vmul.f32 %v372, %v374
    %v376 = vadd.f32 %v372, %v375
    %vm377 = vweird.f32 %v371
    %vm378 = vweird.f32 %v372
    %vm379 = vmor %vm377, %vm378
    %v380 = vsel %vm379, %v372, %v376
    %v381 = vand.u32 2147483647, %v371
    %vm382 = vcmp.eq.f32.partialorder %v381, 8.507059e+37
    %v383 = vand.u32 %v371, 2147483648
    %v384 = vor.u32 1.1754944e-38, %v383
    %v385 = vsel %vm382, %v384, %v380
    %v386 = vmul.f32 1.0, %v385
    %v387 = vadd.f32 %v248, %v342
    %v388 = vxor.u32 %v387, 2147483648
    %v389 = vmul.f32 %v388, 1.442695
    %v390 = vpow.pop %v389
    %v391 = vadd.f32 %v390, 1.0
    %v392 = vrcp.pop %v391
    %v393 = vmul.f32 %v391, %v392
    %v394 = vsub.f32 1.0, %v393
    %v395 = vmul.f32 %v392, %v394
    %v396 = vadd.f32 %v392, %v395
    %vm397 = vweird.f32 %v391
    %vm398 = vweird.f32 %v392
    %vm399 = vmor %vm397, %vm398
    %v400 = vsel %vm399, %v392, %v396
    %v401 = vand.u32 2147483647, %v391
    %vm402 = vcmp.eq.f32.partialorder %v401, 8.507059e+37
    %v403 = vand.u32 %v391, 2147483648
    %v404 = vor.u32 1.1754944e-38, %v403
    %v405 = vsel %vm402, %v404, %v400
    %v406 = vmul.f32 1.0, %v405
    %v407 = vmul.f32 %v386, %v365
    %v408 = vadd.f32 %v279, %v407
    %v409 = vtanh.pop %v408
    %v410 = vsub.f32 1.0, %v406
    %v411 = vmul.f32 %v410, %v409
    %v412 = vmul.f32 %v406, 0.0
    %v413 = vadd.f32 %v411, %v412
    %vm414 = vcmask 254976
    %415 = vst.msk [vmem:[#allocation2] sm:$0x3] %vm414, %v413
    %v417 = vsel %vm300, %v413, 0
    %419 = vmatpush.msra.mxu0 0.0
    %420 = vmatpush.msra.mxu0 0.0
    %421 = vmatpush.msra.mxu0 0.0
    %422 = vmatpush.msra.mxu0 0.0
    %423 = vmatpush.msra.mxu0 0.0
    %424 = vmatpush.msra.mxu0 0.0
    %425 = vmatpush.msra.mxu0 0.0
    %426 = vmatpush.msra.mxu0 0.0
    %427 = vmatpush.msra.mxu0 0.0
    %428 = vmatpush.msra.mxu0 0.0
    %429 = vmatpush.msra.mxu0 0.0
    %430 = vmatpush.msra.mxu0 0.0
    %431 = vmatpush.msra.mxu0 %v287
    %432 = vmatpush.msra.mxu0 %v286
    %433 = vmatpush.msra.mxu0 %v285
    %434 = vmatpush.msra.mxu0 %v284
    %435 = vmatmul.f32.gmra.mxu0 %v417
    %v436 = vpop.f32.mrf.mxu0
    %v437 = vadd.f32 0.0, %v436
    %438 = vdwg.mxu0
    %439 = vmatpush.msra.mxu0 0.0
    %440 = vmatpush.msra.mxu0 0.0
    %441 = vmatpush.msra.mxu0 0.0
    %442 = vmatpush.msra.mxu0 0.0
    %443 = vmatpush.msra.mxu0 0.0
    %444 = vmatpush.msra.mxu0 0.0
    %445 = vmatpush.msra.mxu0 0.0
    %446 = vmatpush.msra.mxu0 0.0
    %447 = vmatpush.msra.mxu0 0.0
    %448 = vmatpush.msra.mxu0 0.0
    %449 = vmatpush.msra.mxu0 0.0
    %450 = vmatpush.msra.mxu0 0.0
    %451 = vmatpush.msra.mxu0 %v292
    %452 = vmatpush.msra.mxu0 %v291
    %453 = vmatpush.msra.mxu0 %v290
    %454 = vmatpush.msra.mxu0 %v289
    %455 = vmatmul.f32.gmra.mxu0 %v417
    %v456 = vpop.f32.mrf.mxu0
    %v457 = vadd.f32 0.0, %v456
    %458 = vdwg.mxu0
    %459 = vmatpush.msra.mxu0 0.0
    %460 = vmatpush.msra.mxu0 0.0
    %461 = vmatpush.msra.mxu0 0.0
    %462 = vmatpush.msra.mxu0 0.0
    %463 = vmatpush.msra.mxu0 0.0
    %464 = vmatpush.msra.mxu0 0.0
    %465 = vmatpush.msra.mxu0 0.0
    %466 = vmatpush.msra.mxu0 0.0
    %467 = vmatpush.msra.mxu0 0.0
    %468 = vmatpush.msra.mxu0 0.0
    %469 = vmatpush.msra.mxu0 0.0
    %470 = vmatpush.msra.mxu0 0.0
    %471 = vmatpush.msra.mxu0 %v297
    %472 = vmatpush.msra.mxu0 %v296
    %473 = vmatpush.msra.mxu0 %v295
    %474 = vmatpush.msra.mxu0 %v294
    %475 = vmatmul.f32.gmra.mxu0 %v417
    %v476 = vpop.f32.mrf.mxu0
    %v477 = vadd.f32 %v345, %v476
    %478 = vdwg.mxu0
    %v480 = vrot.slane %v437, 6
    %v482 = vadd.f32 %v214, %v480
    %v483 = vxor.u32 %v482, 2147483648
    %v484 = vmul.f32 %v483, 1.442695
    %v485 = vpow.pop %v484
    %v486 = vadd.f32 %v485, 1.0
    %v487 = vrcp.pop %v486
    %v488 = vmul.f32 %v486, %v487
    %v489 = vsub.f32 1.0, %v488
    %v490 = vmul.f32 %v487, %v489
    %v491 = vadd.f32 %v487, %v490
    %vm492 = vweird.f32 %v486
    %vm493 = vweird.f32 %v487
    %vm494 = vmor %vm492, %vm493
    %v495 = vsel %vm494, %v487, %v491
    %v496 = vand.u32 2147483647, %v486
    %vm497 = vcmp.eq.f32.partialorder %v496, 8.507059e+37
    %v498 = vand.u32 %v486, 2147483648
    %v499 = vor.u32 1.1754944e-38, %v498
    %v500 = vsel %vm497, %v499, %v495
    %v501 = vmul.f32 1.0, %v500
    %v503 = vrot.slane %v457, 6
    %v505 = vadd.f32 %v248, %v503
    %v506 = vxor.u32 %v505, 2147483648
    %v507 = vmul.f32 %v506, 1.442695
    %v508 = vpow.pop %v507
    %v509 = vadd.f32 %v508, 1.0
    %v510 = vrcp.pop %v509
    %v511 = vmul.f32 %v509, %v510
    %v512 = vsub.f32 1.0, %v511
    %v513 = vmul.f32 %v510, %v512
    %v514 = vadd.f32 %v510, %v513
    %vm515 = vweird.f32 %v509
    %vm516 = vweird.f32 %v510
    %vm517 = vmor %vm515, %vm516
    %v518 = vsel %vm517, %v510, %v514
    %v519 = vand.u32 2147483647, %v509
    %vm520 = vcmp.eq.f32.partialorder %v519, 8.507059e+37
    %v521 = vand.u32 %v509, 2147483648
    %v522 = vor.u32 1.1754944e-38, %v521
    %v523 = vsel %vm520, %v522, %v518
    %v524 = vmul.f32 1.0, %v523
    %v526 = vrot.slane %v477, 6
    %v528 = vmul.f32 %v501, %v526
    %v529 = vadd.f32 %v279, %v528
    %v530 = vtanh.pop %v529
    %v531 = vsub.f32 1.0, %v524
    %v532 = vmul.f32 %v531, %v530
    %v533 = vrot.slane %v413, 6
    %v535 = vmul.f32 %v524, %v533
    %v536 = vadd.f32 %v532, %v535
    %vm537 = vcmask 257026
    %538 = vst.msk [vmem:[#allocation2] sm:$0xc] %vm537, %v536
    %v540 = vrot.slane %v536, 2
    %v541 = vsel %vm300, %v540, 0
    %543 = vmatpush.msra.mxu0 0.0
    %544 = vmatpush.msra.mxu0 0.0
    %545 = vmatpush.msra.mxu0 0.0
    %546 = vmatpush.msra.mxu0 0.0
    %547 = vmatpush.msra.mxu0 0.0
    %548 = vmatpush.msra.mxu0 0.0
    %549 = vmatpush.msra.mxu0 0.0
    %550 = vmatpush.msra.mxu0 0.0
    %551 = vmatpush.msra.mxu0 0.0
    %552 = vmatpush.msra.mxu0 0.0
    %553 = vmatpush.msra.mxu0 0.0
    %554 = vmatpush.msra.mxu0 0.0
    %555 = vmatpush.msra.mxu0 %v287
    %556 = vmatpush.msra.mxu0 %v286
    %557 = vmatpush.msra.mxu0 %v285
    %558 = vmatpush.msra.mxu0 %v284
    %559 = vmatmul.f32.gmra.mxu0 %v541
    %v560 = vpop.f32.mrf.mxu0
    %v561 = vadd.f32 0.0, %v560
    %562 = vdwg.mxu0
    %563 = vmatpush.msra.mxu0 0.0
    %564 = vmatpush.msra.mxu0 0.0
    %565 = vmatpush.msra.mxu0 0.0
    %566 = vmatpush.msra.mxu0 0.0
    %567 = vmatpush.msra.mxu0 0.0
    %568 = vmatpush.msra.mxu0 0.0
    %569 = vmatpush.msra.mxu0 0.0
    %570 = vmatpush.msra.mxu0 0.0
    %571 = vmatpush.msra.mxu0 0.0
    %572 = vmatpush.msra.mxu0 0.0
    %573 = vmatpush.msra.mxu0 0.0
    %574 = vmatpush.msra.mxu0 0.0
    %575 = vmatpush.msra.mxu0 %v292
    %576 = vmatpush.msra.mxu0 %v291
    %577 = vmatpush.msra.mxu0 %v290
    %578 = vmatpush.msra.mxu0 %v289
    %579 = vmatmul.f32.gmra.mxu0 %v541
    %v580 = vpop.f32.mrf.mxu0
    %v581 = vadd.f32 0.0, %v580
    %582 = vdwg.mxu0
    %583 = vmatpush.msra.mxu0 0.0
    %584 = vmatpush.msra.mxu0 0.0
    %585 = vmatpush.msra.mxu0 0.0
    %586 = vmatpush.msra.mxu0 0.0
    %587 = vmatpush.msra.mxu0 0.0
    %588 = vmatpush.msra.mxu0 0.0
    %589 = vmatpush.msra.mxu0 0.0
    %590 = vmatpush.msra.mxu0 0.0
    %591 = vmatpush.msra.mxu0 0.0
    %592 = vmatpush.msra.mxu0 0.0
    %593 = vmatpush.msra.mxu0 0.0
    %594 = vmatpush.msra.mxu0 0.0
    %595 = vmatpush.msra.mxu0 %v297
    %596 = vmatpush.msra.mxu0 %v296
    %597 = vmatpush.msra.mxu0 %v295
    %598 = vmatpush.msra.mxu0 %v294
    %599 = vmatmul.f32.gmra.mxu0 %v541
    %v600 = vpop.f32.mrf.mxu0
    %v601 = vadd.f32 %v345, %v600
    %602 = vdwg.mxu0
    %v604 = vrot.slane %v561, 4
    %v606 = vadd.f32 %v214, %v604
    %v607 = vxor.u32 %v606, 2147483648
    %v608 = vmul.f32 %v607, 1.442695
    %v609 = vpow.pop %v608
    %v610 = vadd.f32 %v609, 1.0
    %v611 = vrcp.pop %v610
    %v612 = vmul.f32 %v610, %v611
    %v613 = vsub.f32 1.0, %v612
    %v614 = vmul.f32 %v611, %v613
    %v615 = vadd.f32 %v611, %v614
    %vm616 = vweird.f32 %v610
    %vm617 = vweird.f32 %v611
    %vm618 = vmor %vm616, %vm617
    %v619 = vsel %vm618, %v611, %v615
    %v620 = vand.u32 2147483647, %v610
    %vm621 = vcmp.eq.f32.partialorder %v620, 8.507059e+37
    %v622 = vand.u32 %v610, 2147483648
    %v623 = vor.u32 1.1754944e-38, %v622
    %v624 = vsel %vm621, %v623, %v619
    %v625 = vmul.f32 1.0, %v624
    %v627 = vrot.slane %v581, 4
    %v629 = vadd.f32 %v248, %v627
    %v630 = vxor.u32 %v629, 2147483648
    %v631 = vmul.f32 %v630, 1.442695
    %v632 = vpow.pop %v631
    %v633 = vadd.f32 %v632, 1.0
    %v634 = vrcp.pop %v633
    %v635 = vmul.f32 %v633, %v634
    %v636 = vsub.f32 1.0, %v635
    %v637 = vmul.f32 %v634, %v636
    %v638 = vadd.f32 %v634, %v637
    %vm639 = vweird.f32 %v633
    %vm640 = vweird.f32 %v634
    %vm641 = vmor %vm639, %vm640
    %v642 = vsel %vm641, %v634, %v638
    %v643 = vand.u32 2147483647, %v633
    %vm644 = vcmp.eq.f32.partialorder %v643, 8.507059e+37
    %v645 = vand.u32 %v633, 2147483648
    %v646 = vor.u32 1.1754944e-38, %v645
    %v647 = vsel %vm644, %v646, %v642
    %v648 = vmul.f32 1.0, %v647
    %v650 = vrot.slane %v601, 4
    %v652 = vmul.f32 %v625, %v650
    %v653 = vadd.f32 %v279, %v652
    %v654 = vtanh.pop %v653
    %v655 = vsub.f32 1.0, %v648
    %v656 = vmul.f32 %v655, %v654
    %v657 = vrot.slane %v536, 6
    %v659 = vmul.f32 %v648, %v657
    %v660 = vadd.f32 %v656, %v659
    %vm661 = vcmask 259076
    %662 = vst.msk [vmem:[#allocation2] sm:$0x30] %vm661, %v660
    %v664 = vrot.slane %v660, 4
    %v665 = vsel %vm300, %v664, 0
    %667 = vmatpush.msra.mxu0 0.0
    %668 = vmatpush.msra.mxu0 0.0
    %669 = vmatpush.msra.mxu0 0.0
    %670 = vmatpush.msra.mxu0 0.0
    %671 = vmatpush.msra.mxu0 0.0
    %672 = vmatpush.msra.mxu0 0.0
    %673 = vmatpush.msra.mxu0 0.0
    %674 = vmatpush.msra.mxu0 0.0
    %675 = vmatpush.msra.mxu0 0.0
    %676 = vmatpush.msra.mxu0 0.0
    %677 = vmatpush.msra.mxu0 0.0
    %678 = vmatpush.msra.mxu0 0.0
    %679 = vmatpush.msra.mxu0 %v287
    %680 = vmatpush.msra.mxu0 %v286
    %681 = vmatpush.msra.mxu0 %v285
    %682 = vmatpush.msra.mxu0 %v284
    %683 = vmatmul.f32.gmra.mxu0 %v665
    %v684 = vpop.f32.mrf.mxu0
    %v685 = vadd.f32 0.0, %v684
    %686 = vdwg.mxu0
    %687 = vmatpush.msra.mxu0 0.0
    %688 = vmatpush.msra.mxu0 0.0
    %689 = vmatpush.msra.mxu0 0.0
    %690 = vmatpush.msra.mxu0 0.0
    %691 = vmatpush.msra.mxu0 0.0
    %692 = vmatpush.msra.mxu0 0.0
    %693 = vmatpush.msra.mxu0 0.0
    %694 = vmatpush.msra.mxu0 0.0
    %695 = vmatpush.msra.mxu0 0.0
    %696 = vmatpush.msra.mxu0 0.0
    %697 = vmatpush.msra.mxu0 0.0
    %698 = vmatpush.msra.mxu0 0.0
    %699 = vmatpush.msra.mxu0 %v292
    %700 = vmatpush.msra.mxu0 %v291
    %701 = vmatpush.msra.mxu0 %v290
    %702 = vmatpush.msra.mxu0 %v289
    %703 = vmatmul.f32.gmra.mxu0 %v665
    %v704 = vpop.f32.mrf.mxu0
    %v705 = vadd.f32 0.0, %v704
    %706 = vdwg.mxu0
    %707 = vmatpush.msra.mxu0 0.0
    %708 = vmatpush.msra.mxu0 0.0
    %709 = vmatpush.msra.mxu0 0.0
    %710 = vmatpush.msra.mxu0 0.0
    %711 = vmatpush.msra.mxu0 0.0
    %712 = vmatpush.msra.mxu0 0.0
    %713 = vmatpush.msra.mxu0 0.0
    %714 = vmatpush.msra.mxu0 0.0
    %715 = vmatpush.msra.mxu0 0.0
    %716 = vmatpush.msra.mxu0 0.0
    %717 = vmatpush.msra.mxu0 0.0
    %718 = vmatpush.msra.mxu0 0.0
    %719 = vmatpush.msra.mxu0 %v297
    %720 = vmatpush.msra.mxu0 %v296
    %721 = vmatpush.msra.mxu0 %v295
    %722 = vmatpush.msra.mxu0 %v294
    %723 = vmatmul.f32.gmra.mxu0 %v665
    %v724 = vpop.f32.mrf.mxu0
    %v725 = vadd.f32 %v345, %v724
    %726 = vdwg.mxu0
    %v728 = vrot.slane %v685, 2
    %v730 = vadd.f32 %v214, %v728
    %v731 = vxor.u32 %v730, 2147483648
    %v732 = vmul.f32 %v731, 1.442695
    %v733 = vpow.pop %v732
    %v734 = vadd.f32 %v733, 1.0
    %v735 = vrcp.pop %v734
    %v736 = vmul.f32 %v734, %v735
    %v737 = vsub.f32 1.0, %v736
    %v738 = vmul.f32 %v735, %v737
    %v739 = vadd.f32 %v735, %v738
    %vm740 = vweird.f32 %v734
    %vm741 = vweird.f32 %v735
    %vm742 = vmor %vm740, %vm741
    %v743 = vsel %vm742, %v735, %v739
    %v744 = vand.u32 2147483647, %v734
    %vm745 = vcmp.eq.f32.partialorder %v744, 8.507059e+37
    %v746 = vand.u32 %v734, 2147483648
    %v747 = vor.u32 1.1754944e-38, %v746
    %v748 = vsel %vm745, %v747, %v743
    %v749 = vmul.f32 1.0, %v748
    %v751 = vrot.slane %v705, 2
    %v753 = vadd.f32 %v248, %v751
    %v754 = vxor.u32 %v753, 2147483648
    %v755 = vmul.f32 %v754, 1.442695
    %v756 = vpow.pop %v755
    %v757 = vadd.f32 %v756, 1.0
    %v758 = vrcp.pop %v757
    %v759 = vmul.f32 %v757, %v758
    %v760 = vsub.f32 1.0, %v759
    %v761 = vmul.f32 %v758, %v760
    %v762 = vadd.f32 %v758, %v761
    %vm763 = vweird.f32 %v757
    %vm764 = vweird.f32 %v758
    %vm765 = vmor %vm763, %vm764
    %v766 = vsel %vm765, %v758, %v762
    %v767 = vand.u32 2147483647, %v757
    %vm768 = vcmp.eq.f32.partialorder %v767, 8.507059e+37
    %v769 = vand.u32 %v757, 2147483648
    %v770 = vor.u32 1.1754944e-38, %v769
    %v771 = vsel %vm768, %v770, %v766
    %v772 = vmul.f32 1.0, %v771
    %v774 = vrot.slane %v725, 2
    %v776 = vmul.f32 %v749, %v774
    %v777 = vadd.f32 %v279, %v776
    %v778 = vtanh.pop %v777
    %v779 = vsub.f32 1.0, %v772
    %v780 = vmul.f32 %v779, %v778
    %v781 = vrot.slane %v660, 6
    %v783 = vmul.f32 %v772, %v781
    %v784 = vadd.f32 %v780, %v783
    %vm785 = vcmask 261126
    %786 = vst.msk [vmem:[#allocation2] sm:$0xc0] %vm785, %v784
    %v788 = vrot.slane %v784, 6
    %v789 = vsel %vm300, %v788, 0
    %791 = vmatpush.msra.mxu0 0.0
    %792 = vmatpush.msra.mxu0 0.0
    %793 = vmatpush.msra.mxu0 0.0
    %794 = vmatpush.msra.mxu0 0.0
    %795 = vmatpush.msra.mxu0 0.0
    %796 = vmatpush.msra.mxu0 0.0
    %797 = vmatpush.msra.mxu0 0.0
    %798 = vmatpush.msra.mxu0 0.0
    %799 = vmatpush.msra.mxu0 0.0
    %800 = vmatpush.msra.mxu0 0.0
    %801 = vmatpush.msra.mxu0 0.0
    %802 = vmatpush.msra.mxu0 0.0
    %803 = vmatpush.msra.mxu0 %v287
    %804 = vmatpush.msra.mxu0 %v286
    %805 = vmatpush.msra.mxu0 %v285
    %806 = vmatpush.msra.mxu0 %v284
    %807 = vmatmul.f32.gmra.mxu0 %v789
    %v808 = vpop.f32.mrf.mxu0
    %v809 = vadd.f32 0.0, %v808
    %810 = vdwg.mxu0
    %811 = vmatpush.msra.mxu0 0.0
    %812 = vmatpush.msra.mxu0 0.0
    %813 = vmatpush.msra.mxu0 0.0
    %814 = vmatpush.msra.mxu0 0.0
    %815 = vmatpush.msra.mxu0 0.0
    %816 = vmatpush.msra.mxu0 0.0
    %817 = vmatpush.msra.mxu0 0.0
    %818 = vmatpush.msra.mxu0 0.0
    %819 = vmatpush.msra.mxu0 0.0
    %820 = vmatpush.msra.mxu0 0.0
    %821 = vmatpush.msra.mxu0 0.0
    %822 = vmatpush.msra.mxu0 0.0
    %823 = vmatpush.msra.mxu0 %v292
    %824 = vmatpush.msra.mxu0 %v291
    %825 = vmatpush.msra.mxu0 %v290
    %826 = vmatpush.msra.mxu0 %v289
    %827 = vmatmul.f32.gmra.mxu0 %v789
    %v828 = vpop.f32.mrf.mxu0
    %v829 = vadd.f32 0.0, %v828
    %830 = vdwg.mxu0
    %831 = vmatpush.msra.mxu0 0.0
    %832 = vmatpush.msra.mxu0 0.0
    %833 = vmatpush.msra.mxu0 0.0
    %834 = vmatpush.msra.mxu0 0.0
    %835 = vmatpush.msra.mxu0 0.0
    %836 = vmatpush.msra.mxu0 0.0
    %837 = vmatpush.msra.mxu0 0.0
    %838 = vmatpush.msra.mxu0 0.0
    %839 = vmatpush.msra.mxu0 0.0
    %840 = vmatpush.msra.mxu0 0.0
    %841 = vmatpush.msra.mxu0 0.0
    %842 = vmatpush.msra.mxu0 0.0
    %843 = vmatpush.msra.mxu0 %v297
    %844 = vmatpush.msra.mxu0 %v296
    %845 = vmatpush.msra.mxu0 %v295
    %846 = vmatpush.msra.mxu0 %v294
    %847 = vmatmul.f32.gmra.mxu0 %v789
    %v848 = vpop.f32.mrf.mxu0
    %v849 = vadd.f32 %v345, %v848
    %850 = vdwg.mxu0
    %v851 = vadd.f32 %v217, %v809
    %v852 = vxor.u32 %v851, 2147483648
    %v853 = vmul.f32 %v852, 1.442695
    %v854 = vpow.pop %v853
    %v855 = vadd.f32 %v854, 1.0
    %v856 = vrcp.pop %v855
    %v857 = vmul.f32 %v855, %v856
    %v858 = vsub.f32 1.0, %v857
    %v859 = vmul.f32 %v856, %v858
    %v860 = vadd.f32 %v856, %v859
    %vm861 = vweird.f32 %v855
    %vm862 = vweird.f32 %v856
    %vm863 = vmor %vm861, %vm862
    %v864 = vsel %vm863, %v856, %v860
    %v865 = vand.u32 2147483647, %v855
    %vm866 = vcmp.eq.f32.partialorder %v865, 8.507059e+37
    %v867 = vand.u32 %v855, 2147483648
    %v868 = vor.u32 1.1754944e-38, %v867
    %v869 = vsel %vm866, %v868, %v864
    %v870 = vmul.f32 1.0, %v869
    %v871 = vadd.f32 %v251, %v829
    %v872 = vxor.u32 %v871, 2147483648
    %v873 = vmul.f32 %v872, 1.442695
    %v874 = vpow.pop %v873
    %v875 = vadd.f32 %v874, 1.0
    %v876 = vrcp.pop %v875
    %v877 = vmul.f32 %v875, %v876
    %v878 = vsub.f32 1.0, %v877
    %v879 = vmul.f32 %v876, %v878
    %v880 = vadd.f32 %v876, %v879
    %vm881 = vweird.f32 %v875
    %vm882 = vweird.f32 %v876
    %vm883 = vmor %vm881, %vm882
    %v884 = vsel %vm883, %v876, %v880
    %v885 = vand.u32 2147483647, %v875
    %vm886 = vcmp.eq.f32.partialorder %v885, 8.507059e+37
    %v887 = vand.u32 %v875, 2147483648
    %v888 = vor.u32 1.1754944e-38, %v887
    %v889 = vsel %vm886, %v888, %v884
    %v890 = vmul.f32 1.0, %v889
    %v891 = vmul.f32 %v870, %v849
    %v892 = vadd.f32 %v282, %v891
    %v893 = vtanh.pop %v892
    %v894 = vsub.f32 1.0, %v890
    %v895 = vmul.f32 %v894, %v893
    %v897 = vmul.f32 %v890, %v788
    %v898 = vadd.f32 %v895, %v897
    %899 = vst.msk [vmem:[#allocation2 + $0x8] sm:$0x3] %vm414, %v898
    %v901 = vsel %vm300, %v898, 0
    %903 = vmatpush.msra.mxu0 0.0
    %904 = vmatpush.msra.mxu0 0.0
    %905 = vmatpush.msra.mxu0 0.0
    %906 = vmatpush.msra.mxu0 0.0
    %907 = vmatpush.msra.mxu0 0.0
    %908 = vmatpush.msra.mxu0 0.0
    %909 = vmatpush.msra.mxu0 0.0
    %910 = vmatpush.msra.mxu0 0.0
    %911 = vmatpush.msra.mxu0 0.0
    %912 = vmatpush.msra.mxu0 0.0
    %913 = vmatpush.msra.mxu0 0.0
    %914 = vmatpush.msra.mxu0 0.0
    %915 = vmatpush.msra.mxu0 %v287
    %916 = vmatpush.msra.mxu0 %v286
    %917 = vmatpush.msra.mxu0 %v285
    %918 = vmatpush.msra.mxu0 %v284
    %919 = vmatmul.f32.gmra.mxu0 %v901
    %v920 = vpop.f32.mrf.mxu0
    %v921 = vadd.f32 0.0, %v920
    %922 = vdwg.mxu0
    %923 = vmatpush.msra.mxu0 0.0
    %924 = vmatpush.msra.mxu0 0.0
    %925 = vmatpush.msra.mxu0 0.0
    %926 = vmatpush.msra.mxu0 0.0
    %927 = vmatpush.msra.mxu0 0.0
    %928 = vmatpush.msra.mxu0 0.0
    %929 = vmatpush.msra.mxu0 0.0
    %930 = vmatpush.msra.mxu0 0.0
    %931 = vmatpush.msra.mxu0 0.0
    %932 = vmatpush.msra.mxu0 0.0
    %933 = vmatpush.msra.mxu0 0.0
    %934 = vmatpush.msra.mxu0 0.0
    %935 = vmatpush.msra.mxu0 %v292
    %936 = vmatpush.msra.mxu0 %v291
    %937 = vmatpush.msra.mxu0 %v290
    %938 = vmatpush.msra.mxu0 %v289
    %939 = vmatmul.f32.gmra.mxu0 %v901
    %v940 = vpop.f32.mrf.mxu0
    %v941 = vadd.f32 0.0, %v940
    %942 = vdwg.mxu0
    %943 = vmatpush.msra.mxu0 0.0
    %944 = vmatpush.msra.mxu0 0.0
    %945 = vmatpush.msra.mxu0 0.0
    %946 = vmatpush.msra.mxu0 0.0
    %947 = vmatpush.msra.mxu0 0.0
    %948 = vmatpush.msra.mxu0 0.0
    %949 = vmatpush.msra.mxu0 0.0
    %950 = vmatpush.msra.mxu0 0.0
    %951 = vmatpush.msra.mxu0 0.0
    %952 = vmatpush.msra.mxu0 0.0
    %953 = vmatpush.msra.mxu0 0.0
    %954 = vmatpush.msra.mxu0 0.0
    %955 = vmatpush.msra.mxu0 %v297
    %956 = vmatpush.msra.mxu0 %v296
    %957 = vmatpush.msra.mxu0 %v295
    %958 = vmatpush.msra.mxu0 %v294
    %959 = vmatmul.f32.gmra.mxu0 %v901
    %v960 = vpop.f32.mrf.mxu0
    %v961 = vadd.f32 %v345, %v960
    %962 = vdwg.mxu0
    %v964 = vrot.slane %v921, 6
    %v966 = vadd.f32 %v217, %v964
    %v967 = vxor.u32 %v966, 2147483648
    %v968 = vmul.f32 %v967, 1.442695
    %v969 = vpow.pop %v968
    %v970 = vadd.f32 %v969, 1.0
    %v971 = vrcp.pop %v970
    %v972 = vmul.f32 %v970, %v971
    %v973 = vsub.f32 1.0, %v972
    %v974 = vmul.f32 %v971, %v973
    %v975 = vadd.f32 %v971, %v974
    %vm976 = vweird.f32 %v970
    %vm977 = vweird.f32 %v971
    %vm978 = vmor %vm976, %vm977
    %v979 = vsel %vm978, %v971, %v975
    %v980 = vand.u32 2147483647, %v970
    %vm981 = vcmp.eq.f32.partialorder %v980, 8.507059e+37
    %v982 = vand.u32 %v970, 2147483648
    %v983 = vor.u32 1.1754944e-38, %v982
    %v984 = vsel %vm981, %v983, %v979
    %v985 = vmul.f32 1.0, %v984
    %v987 = vrot.slane %v941, 6
    %v989 = vadd.f32 %v251, %v987
    %v990 = vxor.u32 %v989, 2147483648
    %v991 = vmul.f32 %v990, 1.442695
    %v992 = vpow.pop %v991
    %v993 = vadd.f32 %v992, 1.0
    %v994 = vrcp.pop %v993
    %v995 = vmul.f32 %v993, %v994
    %v996 = vsub.f32 1.0, %v995
    %v997 = vmul.f32 %v994, %v996
    %v998 = vadd.f32 %v994, %v997
    %vm999 = vweird.f32 %v993
    %vm1000 = vweird.f32 %v994
    %vm1001 = vmor %vm999, %vm1000
    %v1002 = vsel %vm1001, %v994, %v998
    %v1003 = vand.u32 2147483647, %v993
    %vm1004 = vcmp.eq.f32.partialorder %v1003, 8.507059e+37
    %v1005 = vand.u32 %v993, 2147483648
    %v1006 = vor.u32 1.1754944e-38, %v1005
    %v1007 = vsel %vm1004, %v1006, %v1002
    %v1008 = vmul.f32 1.0, %v1007
    %v1010 = vrot.slane %v961, 6
    %v1012 = vmul.f32 %v985, %v1010
    %v1013 = vadd.f32 %v282, %v1012
    %v1014 = vtanh.pop %v1013
    %v1015 = vsub.f32 1.0, %v1008
    %v1016 = vmul.f32 %v1015, %v1014
    %v1017 = vrot.slane %v898, 6
    %v1019 = vmul.f32 %v1008, %v1017
    %v1020 = vadd.f32 %v1016, %v1019
    %1021 = vst.msk [vmem:[#allocation2 + $0x8] sm:$0xc] %vm537, %v1020
    %v1023 = vrot.slane %v1020, 2
    %v1024 = vsel %vm300, %v1023, 0
    %1026 = vmatpush.msra.mxu0 0.0
    %1027 = vmatpush.msra.mxu0 0.0
    %1028 = vmatpush.msra.mxu0 0.0
    %1029 = vmatpush.msra.mxu0 0.0
    %1030 = vmatpush.msra.mxu0 0.0
    %1031 = vmatpush.msra.mxu0 0.0
    %1032 = vmatpush.msra.mxu0 0.0
    %1033 = vmatpush.msra.mxu0 0.0
    %1034 = vmatpush.msra.mxu0 0.0
    %1035 = vmatpush.msra.mxu0 0.0
    %1036 = vmatpush.msra.mxu0 0.0
    %1037 = vmatpush.msra.mxu0 0.0
    %1038 = vmatpush.msra.mxu0 %v287
    %1039 = vmatpush.msra.mxu0 %v286
    %1040 = vmatpush.msra.mxu0 %v285
    %1041 = vmatpush.msra.mxu0 %v284
    %1042 = vmatmul.f32.gmra.mxu0 %v1024
    %v1043 = vpop.f32.mrf.mxu0
    %v1044 = vadd.f32 0.0, %v1043
    %1045 = vdwg.mxu0
    %1046 = vmatpush.msra.mxu0 0.0
    %1047 = vmatpush.msra.mxu0 0.0
    %1048 = vmatpush.msra.mxu0 0.0
    %1049 = vmatpush.msra.mxu0 0.0
    %1050 = vmatpush.msra.mxu0 0.0
    %1051 = vmatpush.msra.mxu0 0.0
    %1052 = vmatpush.msra.mxu0 0.0
    %1053 = vmatpush.msra.mxu0 0.0
    %1054 = vmatpush.msra.mxu0 0.0
    %1055 = vmatpush.msra.mxu0 0.0
    %1056 = vmatpush.msra.mxu0 0.0
    %1057 = vmatpush.msra.mxu0 0.0
    %1058 = vmatpush.msra.mxu0 %v292
    %1059 = vmatpush.msra.mxu0 %v291
    %1060 = vmatpush.msra.mxu0 %v290
    %1061 = vmatpush.msra.mxu0 %v289
    %1062 = vmatmul.f32.gmra.mxu0 %v1024
    %v1063 = vpop.f32.mrf.mxu0
    %v1064 = vadd.f32 0.0, %v1063
    %1065 = vdwg.mxu0
    %1066 = vmatpush.msra.mxu0 0.0
    %1067 = vmatpush.msra.mxu0 0.0
    %1068 = vmatpush.msra.mxu0 0.0
    %1069 = vmatpush.msra.mxu0 0.0
    %1070 = vmatpush.msra.mxu0 0.0
    %1071 = vmatpush.msra.mxu0 0.0
    %1072 = vmatpush.msra.mxu0 0.0
    %1073 = vmatpush.msra.mxu0 0.0
    %1074 = vmatpush.msra.mxu0 0.0
    %1075 = vmatpush.msra.mxu0 0.0
    %1076 = vmatpush.msra.mxu0 0.0
    %1077 = vmatpush.msra.mxu0 0.0
    %1078 = vmatpush.msra.mxu0 %v297
    %1079 = vmatpush.msra.mxu0 %v296
    %1080 = vmatpush.msra.mxu0 %v295
    %1081 = vmatpush.msra.mxu0 %v294
    %1082 = vmatmul.f32.gmra.mxu0 %v1024
    %v1083 = vpop.f32.mrf.mxu0
    %v1084 = vadd.f32 %v345, %v1083
    %1085 = vdwg.mxu0
    %v1087 = vrot.slane %v1044, 4
    %v1089 = vadd.f32 %v217, %v1087
    %v1090 = vxor.u32 %v1089, 2147483648
    %v1091 = vmul.f32 %v1090, 1.442695
    %v1092 = vpow.pop %v1091
    %v1093 = vadd.f32 %v1092, 1.0
    %v1094 = vrcp.pop %v1093
    %v1095 = vmul.f32 %v1093, %v1094
    %v1096 = vsub.f32 1.0, %v1095
    %v1097 = vmul.f32 %v1094, %v1096
    %v1098 = vadd.f32 %v1094, %v1097
    %vm1099 = vweird.f32 %v1093
    %vm1100 = vweird.f32 %v1094
    %vm1101 = vmor %vm1099, %vm1100
    %v1102 = vsel %vm1101, %v1094, %v1098
    %v1103 = vand.u32 2147483647, %v1093
    %vm1104 = vcmp.eq.f32.partialorder %v1103, 8.507059e+37
    %v1105 = vand.u32 %v1093, 2147483648
    %v1106 = vor.u32 1.1754944e-38, %v1105
    %v1107 = vsel %vm1104, %v1106, %v1102
    %v1108 = vmul.f32 1.0, %v1107
    %v1110 = vrot.slane %v1064, 4
    %v1112 = vadd.f32 %v251, %v1110
    %v1113 = vxor.u32 %v1112, 2147483648
    %v1114 = vmul.f32 %v1113, 1.442695
    %v1115 = vpow.pop %v1114
    %v1116 = vadd.f32 %v1115, 1.0
    %v1117 = vrcp.pop %v1116
    %v1118 = vmul.f32 %v1116, %v1117
    %v1119 = vsub.f32 1.0, %v1118
    %v1120 = vmul.f32 %v1117, %v1119
    %v1121 = vadd.f32 %v1117, %v1120
    %vm1122 = vweird.f32 %v1116
    %vm1123 = vweird.f32 %v1117
    %vm1124 = vmor %vm1122, %vm1123
    %v1125 = vsel %vm1124, %v1117, %v1121
    %v1126 = vand.u32 2147483647, %v1116
    %vm1127 = vcmp.eq.f32.partialorder %v1126, 8.507059e+37
    %v1128 = vand.u32 %v1116, 2147483648
    %v1129 = vor.u32 1.1754944e-38, %v1128
    %v1130 = vsel %vm1127, %v1129, %v1125
    %v1131 = vmul.f32 1.0, %v1130
    %v1133 = vrot.slane %v1084, 4
    %v1135 = vmul.f32 %v1108, %v1133
    %v1136 = vadd.f32 %v282, %v1135
    %v1137 = vtanh.pop %v1136
    %v1138 = vsub.f32 1.0, %v1131
    %v1139 = vmul.f32 %v1138, %v1137
    %v1140 = vrot.slane %v1020, 6
    %v1142 = vmul.f32 %v1131, %v1140
    %v1143 = vadd.f32 %v1139, %v1142
    %1144 = vst.msk [vmem:[#allocation2 + $0x8] sm:$0x30] %vm661, %v1143
    %v1146 = vrot.slane %v1143, 4
    %v1147 = vsel %vm300, %v1146, 0
    %1149 = vmatpush.msra.mxu0 0.0
    %1150 = vmatpush.msra.mxu0 0.0
    %1151 = vmatpush.msra.mxu0 0.0
    %1152 = vmatpush.msra.mxu0 0.0
    %1153 = vmatpush.msra.mxu0 0.0
    %1154 = vmatpush.msra.mxu0 0.0
    %1155 = vmatpush.msra.mxu0 0.0
    %1156 = vmatpush.msra.mxu0 0.0
    %1157 = vmatpush.msra.mxu0 0.0
    %1158 = vmatpush.msra.mxu0 0.0
    %1159 = vmatpush.msra.mxu0 0.0
    %1160 = vmatpush.msra.mxu0 0.0
    %1161 = vmatpush.msra.mxu0 %v287
    %1162 = vmatpush.msra.mxu0 %v286
    %1163 = vmatpush.msra.mxu0 %v285
    %1164 = vmatpush.msra.mxu0 %v284
    %1165 = vmatmul.f32.gmra.mxu0 %v1147
    %v1166 = vpop.f32.mrf.mxu0
    %v1167 = vadd.f32 0.0, %v1166
    %1168 = vdwg.mxu0
    %1169 = vmatpush.msra.mxu0 0.0
    %1170 = vmatpush.msra.mxu0 0.0
    %1171 = vmatpush.msra.mxu0 0.0
    %1172 = vmatpush.msra.mxu0 0.0
    %1173 = vmatpush.msra.mxu0 0.0
    %1174 = vmatpush.msra.mxu0 0.0
    %1175 = vmatpush.msra.mxu0 0.0
    %1176 = vmatpush.msra.mxu0 0.0
    %1177 = vmatpush.msra.mxu0 0.0
    %1178 = vmatpush.msra.mxu0 0.0
    %1179 = vmatpush.msra.mxu0 0.0
    %1180 = vmatpush.msra.mxu0 0.0
    %1181 = vmatpush.msra.mxu0 %v292
    %1182 = vmatpush.msra.mxu0 %v291
    %1183 = vmatpush.msra.mxu0 %v290
    %1184 = vmatpush.msra.mxu0 %v289
    %1185 = vmatmul.f32.gmra.mxu0 %v1147
    %v1186 = vpop.f32.mrf.mxu0
    %v1187 = vadd.f32 0.0, %v1186
    %1188 = vdwg.mxu0
    %1189 = vmatpush.msra.mxu0 0.0
    %1190 = vmatpush.msra.mxu0 0.0
    %1191 = vmatpush.msra.mxu0 0.0
    %1192 = vmatpush.msra.mxu0 0.0
    %1193 = vmatpush.msra.mxu0 0.0
    %1194 = vmatpush.msra.mxu0 0.0
    %1195 = vmatpush.msra.mxu0 0.0
    %1196 = vmatpush.msra.mxu0 0.0
    %1197 = vmatpush.msra.mxu0 0.0
    %1198 = vmatpush.msra.mxu0 0.0
    %1199 = vmatpush.msra.mxu0 0.0
    %1200 = vmatpush.msra.mxu0 0.0
    %1201 = vmatpush.msra.mxu0 %v297
    %1202 = vmatpush.msra.mxu0 %v296
    %1203 = vmatpush.msra.mxu0 %v295
    %1204 = vmatpush.msra.mxu0 %v294
    %1205 = vmatmul.f32.gmra.mxu0 %v1147
    %v1206 = vpop.f32.mrf.mxu0
    %v1207 = vadd.f32 %v345, %v1206
    %1208 = vdwg.mxu0
    %v1210 = vrot.slane %v1167, 2
    %v1212 = vadd.f32 %v217, %v1210
    %v1213 = vxor.u32 %v1212, 2147483648
    %v1214 = vmul.f32 %v1213, 1.442695
    %v1215 = vpow.pop %v1214
    %v1216 = vadd.f32 %v1215, 1.0
    %v1217 = vrcp.pop %v1216
    %v1218 = vmul.f32 %v1216, %v1217
    %v1219 = vsub.f32 1.0, %v1218
    %v1220 = vmul.f32 %v1217, %v1219
    %v1221 = vadd.f32 %v1217, %v1220
    %vm1222 = vweird.f32 %v1216
    %vm1223 = vweird.f32 %v1217
    %vm1224 = vmor %vm1222, %vm1223
    %v1225 = vsel %vm1224, %v1217, %v1221
    %v1226 = vand.u32 2147483647, %v1216
    %vm1227 = vcmp.eq.f32.partialorder %v1226, 8.507059e+37
    %v1228 = vand.u32 %v1216, 2147483648
    %v1229 = vor.u32 1.1754944e-38, %v1228
    %v1230 = vsel %vm1227, %v1229, %v1225
    %v1231 = vmul.f32 1.0, %v1230
    %v1233 = vrot.slane %v1187, 2
    %v1235 = vadd.f32 %v251, %v1233
    %v1236 = vxor.u32 %v1235, 2147483648
    %v1237 = vmul.f32 %v1236, 1.442695
    %v1238 = vpow.pop %v1237
    %v1239 = vadd.f32 %v1238, 1.0
    %v1240 = vrcp.pop %v1239
    %v1241 = vmul.f32 %v1239, %v1240
    %v1242 = vsub.f32 1.0, %v1241
    %v1243 = vmul.f32 %v1240, %v1242
    %v1244 = vadd.f32 %v1240, %v1243
    %vm1245 = vweird.f32 %v1239
    %vm1246 = vweird.f32 %v1240
    %vm1247 = vmor %vm1245, %vm1246
    %v1248 = vsel %vm1247, %v1240, %v1244
    %v1249 = vand.u32 2147483647, %v1239
    %vm1250 = vcmp.eq.f32.partialorder %v1249, 8.507059e+37
    %v1251 = vand.u32 %v1239, 2147483648
    %v1252 = vor.u32 1.1754944e-38, %v1251
    %v1253 = vsel %vm1250, %v1252, %v1248
    %v1254 = vmul.f32 1.0, %v1253
    %v1256 = vrot.slane %v1207, 2
    %v1258 = vmul.f32 %v1231, %v1256
    %v1259 = vadd.f32 %v282, %v1258
    %v1260 = vtanh.pop %v1259
    %v1261 = vsub.f32 1.0, %v1254
    %v1262 = vmul.f32 %v1261, %v1260
    %v1263 = vrot.slane %v1143, 6
    %v1265 = vmul.f32 %v1254, %v1263
    %v1266 = vadd.f32 %v1262, %v1265
    %1267 = vst.msk [vmem:[#allocation2 + $0x8] sm:$0xc0] %vm785, %v1266
    %v1268 = vld [vmem:[#allocation2] sm:$0xff]
    %v1269 = vld [vmem:[#allocation2 + $0x8] sm:$0xff]
    %v1270 = vld [vmem:[#allocation11] sm:$0xff]
    %v1271 = vld [vmem:[#allocation11 + $0x8] sm:$0xff]
    %v1272 = vld [vmem:[#allocation11 + $0x10] sm:$0xff]
    %v1273 = vld [vmem:[#allocation11 + $0x18] sm:$0xff]
    %v1274 = vld [vmem:[#allocation14] sm:$0x1]
    %v1275 = vld [vmem:[#allocation15] sm:$0x1]
    %v1276 = vadd.f32 %v1274, %v1275
    %v1278 = vperm.slane %v1276, 0
    %v1281 = vsel %vm300, %v1268, 0
    %v1284 = vsel %vm300, %v1269, 0
    %1286 = vmatpush.msra.mxu0 0.0
    %1287 = vmatpush.msra.mxu0 0.0
    %1288 = vmatpush.msra.mxu0 0.0
    %1289 = vmatpush.msra.mxu0 0.0
    %1290 = vmatpush.msra.mxu0 0.0
    %1291 = vmatpush.msra.mxu0 0.0
    %1292 = vmatpush.msra.mxu0 0.0
    %1293 = vmatpush.msra.mxu0 0.0
    %1294 = vmatpush.msra.mxu0 0.0
    %1295 = vmatpush.msra.mxu0 0.0
    %1296 = vmatpush.msra.mxu0 0.0
    %1297 = vmatpush.msra.mxu0 0.0
    %1298 = vmatpush.msra.mxu0 %v1273
    %1299 = vmatpush.msra.mxu0 %v1272
    %1300 = vmatpush.msra.mxu0 %v1271
    %1301 = vmatpush.msra.mxu0 %v1270
    %1302 = vmatmul.f32.gmra.mxu0 %v1281
    %v1303 = vpop.f32.mrf.mxu0
    %v1304 = vadd.f32 %v1278, %v1303
    %1305 = vmatmul.f32.gmra.mxu0 %v1284
    %v1306 = vpop.f32.mrf.mxu0
    %v1307 = vadd.f32 %v1278, %v1306
    %1308 = vdwg.mxu0
    %s1309 = scalar_lea.vmem [#allocation11], 32
    %v1310 = vld [vmem:[%s1309] sm:$0xff]
    %v1311 = vld [vmem:[%s1309 + $0x8] sm:$0xff]
    %v1312 = vld [vmem:[%s1309 + $0x10] sm:$0xff]
    %v1313 = vld [vmem:[%s1309 + $0x18] sm:$0xff]
    %s1314 = scalar_lea.vmem [#allocation14], 1
    %v1315 = vld [vmem:[%s1314] sm:$0x1]
    %s1316 = scalar_lea.vmem [#allocation15], 1
    %v1317 = vld [vmem:[%s1316] sm:$0x1]
    %v1318 = vadd.f32 %v1315, %v1317
    %v1320 = vperm.slane %v1318, 0
    %1322 = vmatpush.msra.mxu0 0.0
    %1323 = vmatpush.msra.mxu0 0.0
    %1324 = vmatpush.msra.mxu0 0.0
    %1325 = vmatpush.msra.mxu0 0.0
    %1326 = vmatpush.msra.mxu0 0.0
    %1327 = vmatpush.msra.mxu0 0.0
    %1328 = vmatpush.msra.mxu0 0.0
    %1329 = vmatpush.msra.mxu0 0.0
    %1330 = vmatpush.msra.mxu0 0.0
    %1331 = vmatpush.msra.mxu0 0.0
    %1332 = vmatpush.msra.mxu0 0.0
    %1333 = vmatpush.msra.mxu0 0.0
    %1334 = vmatpush.msra.mxu0 %v1313
    %1335 = vmatpush.msra.mxu0 %v1312
    %1336 = vmatpush.msra.mxu0 %v1311
    %1337 = vmatpush.msra.mxu0 %v1310
    %1338 = vmatmul.f32.gmra.mxu0 %v1281
    %v1339 = vpop.f32.mrf.mxu0
    %v1340 = vadd.f32 %v1320, %v1339
    %1341 = vmatmul.f32.gmra.mxu0 %v1284
    %v1342 = vpop.f32.mrf.mxu0
    %v1343 = vadd.f32 %v1320, %v1342
    %1344 = vdwg.mxu0
    %s1345 = scalar_lea.vmem [#allocation11], 64
    %v1346 = vld [vmem:[%s1345] sm:$0xff]
    %v1347 = vld [vmem:[%s1345 + $0x8] sm:$0xff]
    %v1348 = vld [vmem:[%s1345 + $0x10] sm:$0xff]
    %v1349 = vld [vmem:[%s1345 + $0x18] sm:$0xff]
    %s1350 = scalar_lea.vmem [#allocation14], 2
    %v1351 = vld [vmem:[%s1350] sm:$0x1]
    %v1353 = vperm.slane %v1351, 0
    %1355 = vmatpush.msra.mxu0 0.0
    %1356 = vmatpush.msra.mxu0 0.0
    %1357 = vmatpush.msra.mxu0 0.0
    %1358 = vmatpush.msra.mxu0 0.0
    %1359 = vmatpush.msra.mxu0 0.0
    %1360 = vmatpush.msra.mxu0 0.0
    %1361 = vmatpush.msra.mxu0 0.0
    %1362 = vmatpush.msra.mxu0 0.0
    %1363 = vmatpush.msra.mxu0 0.0
    %1364 = vmatpush.msra.mxu0 0.0
    %1365 = vmatpush.msra.mxu0 0.0
    %1366 = vmatpush.msra.mxu0 0.0
    %1367 = vmatpush.msra.mxu0 %v1349
    %1368 = vmatpush.msra.mxu0 %v1348
    %1369 = vmatpush.msra.mxu0 %v1347
    %1370 = vmatpush.msra.mxu0 %v1346
    %1371 = vmatmul.f32.gmra.mxu0 %v1281
    %v1372 = vpop.f32.mrf.mxu0
    %v1373 = vadd.f32 %v1353, %v1372
    %1374 = vmatmul.f32.gmra.mxu0 %v1284
    %v1375 = vpop.f32.mrf.mxu0
    %v1376 = vadd.f32 %v1353, %v1375
    %1377 = vdwg.mxu0
    %v1378 = vld [vmem:[#allocation12] sm:$0xff]
    %v1379 = vld [vmem:[#allocation12 + $0x8] sm:$0xff]
    %v1380 = vld [vmem:[#allocation12 + $0x10] sm:$0xff]
    %v1381 = vld [vmem:[#allocation12 + $0x18] sm:$0xff]
    %s1382 = scalar_lea.vmem [#allocation12], 32
    %v1383 = vld [vmem:[%s1382] sm:$0xff]
    %v1384 = vld [vmem:[%s1382 + $0x8] sm:$0xff]
    %v1385 = vld [vmem:[%s1382 + $0x10] sm:$0xff]
    %v1386 = vld [vmem:[%s1382 + $0x18] sm:$0xff]
    %s1387 = scalar_lea.vmem [#allocation12], 64
    %v1388 = vld [vmem:[%s1387] sm:$0xff]
    %v1389 = vld [vmem:[%s1387 + $0x8] sm:$0xff]
    %v1390 = vld [vmem:[%s1387 + $0x10] sm:$0xff]
    %v1391 = vld [vmem:[%s1387 + $0x18] sm:$0xff]
    %s1392 = scalar_lea.vmem [#allocation15], 2
    %v1393 = vld [vmem:[%s1392] sm:$0x1]
    %1394 = vmatpush.msra.mxu0 0.0
    %1395 = vmatpush.msra.mxu0 0.0
    %1396 = vmatpush.msra.mxu0 0.0
    %1397 = vmatpush.msra.mxu0 0.0
    %1398 = vmatpush.msra.mxu0 0.0
    %1399 = vmatpush.msra.mxu0 0.0
    %1400 = vmatpush.msra.mxu0 0.0
    %1401 = vmatpush.msra.mxu0 0.0
    %1402 = vmatpush.msra.mxu0 0.0
    %1403 = vmatpush.msra.mxu0 0.0
    %1404 = vmatpush.msra.mxu0 0.0
    %1405 = vmatpush.msra.mxu0 0.0
    %1406 = vmatpush.msra.mxu0 %v1381
    %1407 = vmatpush.msra.mxu0 %v1380
    %1408 = vmatpush.msra.mxu0 %v1379
    %1409 = vmatpush.msra.mxu0 %v1378
    %1410 = vmatmul.f32.gmra.mxu0 %v302
    %v1411 = vpop.f32.mrf.mxu0
    %v1412 = vadd.f32 0.0, %v1411
    %1413 = vdwg.mxu0
    %1414 = vmatpush.msra.mxu0 0.0
    %1415 = vmatpush.msra.mxu0 0.0
    %1416 = vmatpush.msra.mxu0 0.0
    %1417 = vmatpush.msra.mxu0 0.0
    %1418 = vmatpush.msra.mxu0 0.0
    %1419 = vmatpush.msra.mxu0 0.0
    %1420 = vmatpush.msra.mxu0 0.0
    %1421 = vmatpush.msra.mxu0 0.0
    %1422 = vmatpush.msra.mxu0 0.0
    %1423 = vmatpush.msra.mxu0 0.0
    %1424 = vmatpush.msra.mxu0 0.0
    %1425 = vmatpush.msra.mxu0 0.0
    %1426 = vmatpush.msra.mxu0 %v1386
    %1427 = vmatpush.msra.mxu0 %v1385
    %1428 = vmatpush.msra.mxu0 %v1384
    %1429 = vmatpush.msra.mxu0 %v1383
    %1430 = vmatmul.f32.gmra.mxu0 %v302
    %v1431 = vpop.f32.mrf.mxu0
    %v1432 = vadd.f32 0.0, %v1431
    %1433 = vdwg.mxu0
    %v1435 = vperm.slane %v1393, 0
    %1437 = vmatpush.msra.mxu0 0.0
    %1438 = vmatpush.msra.mxu0 0.0
    %1439 = vmatpush.msra.mxu0 0.0
    %1440 = vmatpush.msra.mxu0 0.0
    %1441 = vmatpush.msra.mxu0 0.0
    %1442 = vmatpush.msra.mxu0 0.0
    %1443 = vmatpush.msra.mxu0 0.0
    %1444 = vmatpush.msra.mxu0 0.0
    %1445 = vmatpush.msra.mxu0 0.0
    %1446 = vmatpush.msra.mxu0 0.0
    %1447 = vmatpush.msra.mxu0 0.0
    %1448 = vmatpush.msra.mxu0 0.0
    %1449 = vmatpush.msra.mxu0 %v1391
    %1450 = vmatpush.msra.mxu0 %v1390
    %1451 = vmatpush.msra.mxu0 %v1389
    %1452 = vmatpush.msra.mxu0 %v1388
    %1453 = vmatmul.f32.gmra.mxu0 %v302
    %v1454 = vpop.f32.mrf.mxu0
    %v1455 = vadd.f32 %v1435, %v1454
    %1456 = vdwg.mxu0
    %v1457 = vadd.f32 %v1304, %v1412
    %v1458 = vxor.u32 %v1457, 2147483648
    %v1459 = vmul.f32 %v1458, 1.442695
    %v1460 = vpow.pop %v1459
    %v1461 = vadd.f32 %v1460, 1.0
    %v1462 = vrcp.pop %v1461
    %v1463 = vmul.f32 %v1461, %v1462
    %v1464 = vsub.f32 1.0, %v1463
    %v1465 = vmul.f32 %v1462, %v1464
    %v1466 = vadd.f32 %v1462, %v1465
    %vm1467 = vweird.f32 %v1461
    %vm1468 = vweird.f32 %v1462
    %vm1469 = vmor %vm1467, %vm1468
    %v1470 = vsel %vm1469, %v1462, %v1466
    %v1471 = vand.u32 2147483647, %v1461
    %vm1472 = vcmp.eq.f32.partialorder %v1471, 8.507059e+37
    %v1473 = vand.u32 %v1461, 2147483648
    %v1474 = vor.u32 1.1754944e-38, %v1473
    %v1475 = vsel %vm1472, %v1474, %v1470
    %v1476 = vmul.f32 1.0, %v1475
    %v1477 = vadd.f32 %v1340, %v1432
    %v1478 = vxor.u32 %v1477, 2147483648
    %v1479 = vmul.f32 %v1478, 1.442695
    %v1480 = vpow.pop %v1479
    %v1481 = vadd.f32 %v1480, 1.0
    %v1482 = vrcp.pop %v1481
    %v1483 = vmul.f32 %v1481, %v1482
    %v1484 = vsub.f32 1.0, %v1483
    %v1485 = vmul.f32 %v1482, %v1484
    %v1486 = vadd.f32 %v1482, %v1485
    %vm1487 = vweird.f32 %v1481
    %vm1488 = vweird.f32 %v1482
    %vm1489 = vmor %vm1487, %vm1488
    %v1490 = vsel %vm1489, %v1482, %v1486
    %v1491 = vand.u32 2147483647, %v1481
    %vm1492 = vcmp.eq.f32.partialorder %v1491, 8.507059e+37
    %v1493 = vand.u32 %v1481, 2147483648
    %v1494 = vor.u32 1.1754944e-38, %v1493
    %v1495 = vsel %vm1492, %v1494, %v1490
    %v1496 = vmul.f32 1.0, %v1495
    %v1497 = vmul.f32 %v1476, %v1455
    %v1498 = vadd.f32 %v1373, %v1497
    %v1499 = vtanh.pop %v1498
    %v1500 = vsub.f32 1.0, %v1496
    %v1501 = vmul.f32 %v1500, %v1499
    %v1502 = vmul.f32 %v1496, 0.0
    %v1503 = vadd.f32 %v1501, %v1502
    %v1505 = vsel %vm300, %v1503, 0
    %1507 = vmatpush.msra.mxu0 0.0
    %1508 = vmatpush.msra.mxu0 0.0
    %1509 = vmatpush.msra.mxu0 0.0
    %1510 = vmatpush.msra.mxu0 0.0
    %1511 = vmatpush.msra.mxu0 0.0
    %1512 = vmatpush.msra.mxu0 0.0
    %1513 = vmatpush.msra.mxu0 0.0
    %1514 = vmatpush.msra.mxu0 0.0
    %1515 = vmatpush.msra.mxu0 0.0
    %1516 = vmatpush.msra.mxu0 0.0
    %1517 = vmatpush.msra.mxu0 0.0
    %1518 = vmatpush.msra.mxu0 0.0
    %1519 = vmatpush.msra.mxu0 %v1381
    %1520 = vmatpush.msra.mxu0 %v1380
    %1521 = vmatpush.msra.mxu0 %v1379
    %1522 = vmatpush.msra.mxu0 %v1378
    %1523 = vmatmul.f32.gmra.mxu0 %v1505
    %v1524 = vpop.f32.mrf.mxu0
    %v1525 = vadd.f32 0.0, %v1524
    %1526 = vdwg.mxu0
    %1527 = vmatpush.msra.mxu0 0.0
    %1528 = vmatpush.msra.mxu0 0.0
    %1529 = vmatpush.msra.mxu0 0.0
    %1530 = vmatpush.msra.mxu0 0.0
    %1531 = vmatpush.msra.mxu0 0.0
    %1532 = vmatpush.msra.mxu0 0.0
    %1533 = vmatpush.msra.mxu0 0.0
    %1534 = vmatpush.msra.mxu0 0.0
    %1535 = vmatpush.msra.mxu0 0.0
    %1536 = vmatpush.msra.mxu0 0.0
    %1537 = vmatpush.msra.mxu0 0.0
    %1538 = vmatpush.msra.mxu0 0.0
    %1539 = vmatpush.msra.mxu0 %v1386
    %1540 = vmatpush.msra.mxu0 %v1385
    %1541 = vmatpush.msra.mxu0 %v1384
    %1542 = vmatpush.msra.mxu0 %v1383
    %1543 = vmatmul.f32.gmra.mxu0 %v1505
    %v1544 = vpop.f32.mrf.mxu0
    %v1545 = vadd.f32 0.0, %v1544
    %1546 = vdwg.mxu0
    %1547 = vmatpush.msra.mxu0 0.0
    %1548 = vmatpush.msra.mxu0 0.0
    %1549 = vmatpush.msra.mxu0 0.0
    %1550 = vmatpush.msra.mxu0 0.0
    %1551 = vmatpush.msra.mxu0 0.0
    %1552 = vmatpush.msra.mxu0 0.0
    %1553 = vmatpush.msra.mxu0 0.0
    %1554 = vmatpush.msra.mxu0 0.0
    %1555 = vmatpush.msra.mxu0 0.0
    %1556 = vmatpush.msra.mxu0 0.0
    %1557 = vmatpush.msra.mxu0 0.0
    %1558 = vmatpush.msra.mxu0 0.0
    %1559 = vmatpush.msra.mxu0 %v1391
    %1560 = vmatpush.msra.mxu0 %v1390
    %1561 = vmatpush.msra.mxu0 %v1389
    %1562 = vmatpush.msra.mxu0 %v1388
    %1563 = vmatmul.f32.gmra.mxu0 %v1505
    %v1564 = vpop.f32.mrf.mxu0
    %v1565 = vadd.f32 %v1435, %v1564
    %1566 = vdwg.mxu0
    %v1568 = vrot.slane %v1525, 6
    %v1570 = vadd.f32 %v1304, %v1568
    %v1571 = vxor.u32 %v1570, 2147483648
    %v1572 = vmul.f32 %v1571, 1.442695
    %v1573 = vpow.pop %v1572
    %v1574 = vadd.f32 %v1573, 1.0
    %v1575 = vrcp.pop %v1574
    %v1576 = vmul.f32 %v1574, %v1575
    %v1577 = vsub.f32 1.0, %v1576
    %v1578 = vmul.f32 %v1575, %v1577
    %v1579 = vadd.f32 %v1575, %v1578
    %vm1580 = vweird.f32 %v1574
    %vm1581 = vweird.f32 %v1575
    %vm1582 = vmor %vm1580, %vm1581
    %v1583 = vsel %vm1582, %v1575, %v1579
    %v1584 = vand.u32 2147483647, %v1574
    %vm1585 = vcmp.eq.f32.partialorder %v1584, 8.507059e+37
    %v1586 = vand.u32 %v1574, 2147483648
    %v1587 = vor.u32 1.1754944e-38, %v1586
    %v1588 = vsel %vm1585, %v1587, %v1583
    %v1589 = vmul.f32 1.0, %v1588
    %v1591 = vrot.slane %v1545, 6
    %v1593 = vadd.f32 %v1340, %v1591
    %v1594 = vxor.u32 %v1593, 2147483648
    %v1595 = vmul.f32 %v1594, 1.442695
    %v1596 = vpow.pop %v1595
    %v1597 = vadd.f32 %v1596, 1.0
    %v1598 = vrcp.pop %v1597
    %v1599 = vmul.f32 %v1597, %v1598
    %v1600 = vsub.f32 1.0, %v1599
    %v1601 = vmul.f32 %v1598, %v1600
    %v1602 = vadd.f32 %v1598, %v1601
    %vm1603 = vweird.f32 %v1597
    %vm1604 = vweird.f32 %v1598
    %vm1605 = vmor %vm1603, %vm1604
    %v1606 = vsel %vm1605, %v1598, %v1602
    %v1607 = vand.u32 2147483647, %v1597
    %vm1608 = vcmp.eq.f32.partialorder %v1607, 8.507059e+37
    %v1609 = vand.u32 %v1597, 2147483648
    %v1610 = vor.u32 1.1754944e-38, %v1609
    %v1611 = vsel %vm1608, %v1610, %v1606
    %v1612 = vmul.f32 1.0, %v1611
    %v1614 = vrot.slane %v1565, 6
    %v1616 = vmul.f32 %v1589, %v1614
    %v1617 = vadd.f32 %v1373, %v1616
    %v1618 = vtanh.pop %v1617
    %v1619 = vsub.f32 1.0, %v1612
    %v1620 = vmul.f32 %v1619, %v1618
    %v1621 = vrot.slane %v1503, 6
    %v1623 = vmul.f32 %v1612, %v1621
    %v1624 = vadd.f32 %v1620, %v1623
    %v1626 = vrot.slane %v1624, 2
    %v1627 = vsel %vm300, %v1626, 0
    %1629 = vmatpush.msra.mxu0 0.0
    %1630 = vmatpush.msra.mxu0 0.0
    %1631 = vmatpush.msra.mxu0 0.0
    %1632 = vmatpush.msra.mxu0 0.0
    %1633 = vmatpush.msra.mxu0 0.0
    %1634 = vmatpush.msra.mxu0 0.0
    %1635 = vmatpush.msra.mxu0 0.0
    %1636 = vmatpush.msra.mxu0 0.0
    %1637 = vmatpush.msra.mxu0 0.0
    %1638 = vmatpush.msra.mxu0 0.0
    %1639 = vmatpush.msra.mxu0 0.0
    %1640 = vmatpush.msra.mxu0 0.0
    %1641 = vmatpush.msra.mxu0 %v1381
    %1642 = vmatpush.msra.mxu0 %v1380
    %1643 = vmatpush.msra.mxu0 %v1379
    %1644 = vmatpush.msra.mxu0 %v1378
    %1645 = vmatmul.f32.gmra.mxu0 %v1627
    %v1646 = vpop.f32.mrf.mxu0
    %v1647 = vadd.f32 0.0, %v1646
    %1648 = vdwg.mxu0
    %1649 = vmatpush.msra.mxu0 0.0
    %1650 = vmatpush.msra.mxu0 0.0
    %1651 = vmatpush.msra.mxu0 0.0
    %1652 = vmatpush.msra.mxu0 0.0
    %1653 = vmatpush.msra.mxu0 0.0
    %1654 = vmatpush.msra.mxu0 0.0
    %1655 = vmatpush.msra.mxu0 0.0
    %1656 = vmatpush.msra.mxu0 0.0
    %1657 = vmatpush.msra.mxu0 0.0
    %1658 = vmatpush.msra.mxu0 0.0
    %1659 = vmatpush.msra.mxu0 0.0
    %1660 = vmatpush.msra.mxu0 0.0
    %1661 = vmatpush.msra.mxu0 %v1386
    %1662 = vmatpush.msra.mxu0 %v1385
    %1663 = vmatpush.msra.mxu0 %v1384
    %1664 = vmatpush.msra.mxu0 %v1383
    %1665 = vmatmul.f32.gmra.mxu0 %v1627
    %v1666 = vpop.f32.mrf.mxu0
    %v1667 = vadd.f32 0.0, %v1666
    %1668 = vdwg.mxu0
    %1669 = vmatpush.msra.mxu0 0.0
    %1670 = vmatpush.msra.mxu0 0.0
    %1671 = vmatpush.msra.mxu0 0.0
    %1672 = vmatpush.msra.mxu0 0.0
    %1673 = vmatpush.msra.mxu0 0.0
    %1674 = vmatpush.msra.mxu0 0.0
    %1675 = vmatpush.msra.mxu0 0.0
    %1676 = vmatpush.msra.mxu0 0.0
    %1677 = vmatpush.msra.mxu0 0.0
    %1678 = vmatpush.msra.mxu0 0.0
    %1679 = vmatpush.msra.mxu0 0.0
    %1680 = vmatpush.msra.mxu0 0.0
    %1681 = vmatpush.msra.mxu0 %v1391
    %1682 = vmatpush.msra.mxu0 %v1390
    %1683 = vmatpush.msra.mxu0 %v1389
    %1684 = vmatpush.msra.mxu0 %v1388
    %1685 = vmatmul.f32.gmra.mxu0 %v1627
    %v1686 = vpop.f32.mrf.mxu0
    %v1687 = vadd.f32 %v1435, %v1686
    %1688 = vdwg.mxu0
    %v1690 = vrot.slane %v1647, 4
    %v1692 = vadd.f32 %v1304, %v1690
    %v1693 = vxor.u32 %v1692, 2147483648
    %v1694 = vmul.f32 %v1693, 1.442695
    %v1695 = vpow.pop %v1694
    %v1696 = vadd.f32 %v1695, 1.0
    %v1697 = vrcp.pop %v1696
    %v1698 = vmul.f32 %v1696, %v1697
    %v1699 = vsub.f32 1.0, %v1698
    %v1700 = vmul.f32 %v1697, %v1699
    %v1701 = vadd.f32 %v1697, %v1700
    %vm1702 = vweird.f32 %v1696
    %vm1703 = vweird.f32 %v1697
    %vm1704 = vmor %vm1702, %vm1703
    %v1705 = vsel %vm1704, %v1697, %v1701
    %v1706 = vand.u32 2147483647, %v1696
    %vm1707 = vcmp.eq.f32.partialorder %v1706, 8.507059e+37
    %v1708 = vand.u32 %v1696, 2147483648
    %v1709 = vor.u32 1.1754944e-38, %v1708
    %v1710 = vsel %vm1707, %v1709, %v1705
    %v1711 = vmul.f32 1.0, %v1710
    %v1713 = vrot.slane %v1667, 4
    %v1715 = vadd.f32 %v1340, %v1713
    %v1716 = vxor.u32 %v1715, 2147483648
    %v1717 = vmul.f32 %v1716, 1.442695
    %v1718 = vpow.pop %v1717
    %v1719 = vadd.f32 %v1718, 1.0
    %v1720 = vrcp.pop %v1719
    %v1721 = vmul.f32 %v1719, %v1720
    %v1722 = vsub.f32 1.0, %v1721
    %v1723 = vmul.f32 %v1720, %v1722
    %v1724 = vadd.f32 %v1720, %v1723
    %vm1725 = vweird.f32 %v1719
    %vm1726 = vweird.f32 %v1720
    %vm1727 = vmor %vm1725, %vm1726
    %v1728 = vsel %vm1727, %v1720, %v1724
    %v1729 = vand.u32 2147483647, %v1719
    %vm1730 = vcmp.eq.f32.partialorder %v1729, 8.507059e+37
    %v1731 = vand.u32 %v1719, 2147483648
    %v1732 = vor.u32 1.1754944e-38, %v1731
    %v1733 = vsel %vm1730, %v1732, %v1728
    %v1734 = vmul.f32 1.0, %v1733
    %v1736 = vrot.slane %v1687, 4
    %v1738 = vmul.f32 %v1711, %v1736
    %v1739 = vadd.f32 %v1373, %v1738
    %v1740 = vtanh.pop %v1739
    %v1741 = vsub.f32 1.0, %v1734
    %v1742 = vmul.f32 %v1741, %v1740
    %v1743 = vrot.slane %v1624, 6
    %v1745 = vmul.f32 %v1734, %v1743
    %v1746 = vadd.f32 %v1742, %v1745
    %v1748 = vrot.slane %v1746, 4
    %v1749 = vsel %vm300, %v1748, 0
    %1751 = vmatpush.msra.mxu0 0.0
    %1752 = vmatpush.msra.mxu0 0.0
    %1753 = vmatpush.msra.mxu0 0.0
    %1754 = vmatpush.msra.mxu0 0.0
    %1755 = vmatpush.msra.mxu0 0.0
    %1756 = vmatpush.msra.mxu0 0.0
    %1757 = vmatpush.msra.mxu0 0.0
    %1758 = vmatpush.msra.mxu0 0.0
    %1759 = vmatpush.msra.mxu0 0.0
    %1760 = vmatpush.msra.mxu0 0.0
    %1761 = vmatpush.msra.mxu0 0.0
    %1762 = vmatpush.msra.mxu0 0.0
    %1763 = vmatpush.msra.mxu0 %v1381
    %1764 = vmatpush.msra.mxu0 %v1380
    %1765 = vmatpush.msra.mxu0 %v1379
    %1766 = vmatpush.msra.mxu0 %v1378
    %1767 = vmatmul.f32.gmra.mxu0 %v1749
    %v1768 = vpop.f32.mrf.mxu0
    %v1769 = vadd.f32 0.0, %v1768
    %1770 = vdwg.mxu0
    %1771 = vmatpush.msra.mxu0 0.0
    %1772 = vmatpush.msra.mxu0 0.0
    %1773 = vmatpush.msra.mxu0 0.0
    %1774 = vmatpush.msra.mxu0 0.0
    %1775 = vmatpush.msra.mxu0 0.0
    %1776 = vmatpush.msra.mxu0 0.0
    %1777 = vmatpush.msra.mxu0 0.0
    %1778 = vmatpush.msra.mxu0 0.0
    %1779 = vmatpush.msra.mxu0 0.0
    %1780 = vmatpush.msra.mxu0 0.0
    %1781 = vmatpush.msra.mxu0 0.0
    %1782 = vmatpush.msra.mxu0 0.0
    %1783 = vmatpush.msra.mxu0 %v1386
    %1784 = vmatpush.msra.mxu0 %v1385
    %1785 = vmatpush.msra.mxu0 %v1384
    %1786 = vmatpush.msra.mxu0 %v1383
    %1787 = vmatmul.f32.gmra.mxu0 %v1749
    %v1788 = vpop.f32.mrf.mxu0
    %v1789 = vadd.f32 0.0, %v1788
    %1790 = vdwg.mxu0
    %1791 = vmatpush.msra.mxu0 0.0
    %1792 = vmatpush.msra.mxu0 0.0
    %1793 = vmatpush.msra.mxu0 0.0
    %1794 = vmatpush.msra.mxu0 0.0
    %1795 = vmatpush.msra.mxu0 0.0
    %1796 = vmatpush.msra.mxu0 0.0
    %1797 = vmatpush.msra.mxu0 0.0
    %1798 = vmatpush.msra.mxu0 0.0
    %1799 = vmatpush.msra.mxu0 0.0
    %1800 = vmatpush.msra.mxu0 0.0
    %1801 = vmatpush.msra.mxu0 0.0
    %1802 = vmatpush.msra.mxu0 0.0
    %1803 = vmatpush.msra.mxu0 %v1391
    %1804 = vmatpush.msra.mxu0 %v1390
    %1805 = vmatpush.msra.mxu0 %v1389
    %1806 = vmatpush.msra.mxu0 %v1388
    %1807 = vmatmul.f32.gmra.mxu0 %v1749
    %v1808 = vpop.f32.mrf.mxu0
    %v1809 = vadd.f32 %v1435, %v1808
    %1810 = vdwg.mxu0
    %v1812 = vrot.slane %v1769, 2
    %v1814 = vadd.f32 %v1304, %v1812
    %v1815 = vxor.u32 %v1814, 2147483648
    %v1816 = vmul.f32 %v1815, 1.442695
    %v1817 = vpow.pop %v1816
    %v1818 = vadd.f32 %v1817, 1.0
    %v1819 = vrcp.pop %v1818
    %v1820 = vmul.f32 %v1818, %v1819
    %v1821 = vsub.f32 1.0, %v1820
    %v1822 = vmul.f32 %v1819, %v1821
    %v1823 = vadd.f32 %v1819, %v1822
    %vm1824 = vweird.f32 %v1818
    %vm1825 = vweird.f32 %v1819
    %vm1826 = vmor %vm1824, %vm1825
    %v1827 = vsel %vm1826, %v1819, %v1823
    %v1828 = vand.u32 2147483647, %v1818
    %vm1829 = vcmp.eq.f32.partialorder %v1828, 8.507059e+37
    %v1830 = vand.u32 %v1818, 2147483648
    %v1831 = vor.u32 1.1754944e-38, %v1830
    %v1832 = vsel %vm1829, %v1831, %v1827
    %v1833 = vmul.f32 1.0, %v1832
    %v1835 = vrot.slane %v1789, 2
    %v1837 = vadd.f32 %v1340, %v1835
    %v1838 = vxor.u32 %v1837, 2147483648
    %v1839 = vmul.f32 %v1838, 1.442695
    %v1840 = vpow.pop %v1839
    %v1841 = vadd.f32 %v1840, 1.0
    %v1842 = vrcp.pop %v1841
    %v1843 = vmul.f32 %v1841, %v1842
    %v1844 = vsub.f32 1.0, %v1843
    %v1845 = vmul.f32 %v1842, %v1844
    %v1846 = vadd.f32 %v1842, %v1845
    %vm1847 = vweird.f32 %v1841
    %vm1848 = vweird.f32 %v1842
    %vm1849 = vmor %vm1847, %vm1848
    %v1850 = vsel %vm1849, %v1842, %v1846
    %v1851 = vand.u32 2147483647, %v1841
    %vm1852 = vcmp.eq.f32.partialorder %v1851, 8.507059e+37
    %v1853 = vand.u32 %v1841, 2147483648
    %v1854 = vor.u32 1.1754944e-38, %v1853
    %v1855 = vsel %vm1852, %v1854, %v1850
    %v1856 = vmul.f32 1.0, %v1855
    %v1858 = vrot.slane %v1809, 2
    %v1860 = vmul.f32 %v1833, %v1858
    %v1861 = vadd.f32 %v1373, %v1860
    %v1862 = vtanh.pop %v1861
    %v1863 = vsub.f32 1.0, %v1856
    %v1864 = vmul.f32 %v1863, %v1862
    %v1865 = vrot.slane %v1746, 6
    %v1867 = vmul.f32 %v1856, %v1865
    %v1868 = vadd.f32 %v1864, %v1867
    %v1870 = vrot.slane %v1868, 6
    %v1871 = vsel %vm300, %v1870, 0
    %1873 = vmatpush.msra.mxu0 0.0
    %1874 = vmatpush.msra.mxu0 0.0
    %1875 = vmatpush.msra.mxu0 0.0
    %1876 = vmatpush.msra.mxu0 0.0
    %1877 = vmatpush.msra.mxu0 0.0
    %1878 = vmatpush.msra.mxu0 0.0
    %1879 = vmatpush.msra.mxu0 0.0
    %1880 = vmatpush.msra.mxu0 0.0
    %1881 = vmatpush.msra.mxu0 0.0
    %1882 = vmatpush.msra.mxu0 0.0
    %1883 = vmatpush.msra.mxu0 0.0
    %1884 = vmatpush.msra.mxu0 0.0
    %1885 = vmatpush.msra.mxu0 %v1381
    %1886 = vmatpush.msra.mxu0 %v1380
    %1887 = vmatpush.msra.mxu0 %v1379
    %1888 = vmatpush.msra.mxu0 %v1378
    %1889 = vmatmul.f32.gmra.mxu0 %v1871
    %v1890 = vpop.f32.mrf.mxu0
    %v1891 = vadd.f32 0.0, %v1890
    %1892 = vdwg.mxu0
    %1893 = vmatpush.msra.mxu0 0.0
    %1894 = vmatpush.msra.mxu0 0.0
    %1895 = vmatpush.msra.mxu0 0.0
    %1896 = vmatpush.msra.mxu0 0.0
    %1897 = vmatpush.msra.mxu0 0.0
    %1898 = vmatpush.msra.mxu0 0.0
    %1899 = vmatpush.msra.mxu0 0.0
    %1900 = vmatpush.msra.mxu0 0.0
    %1901 = vmatpush.msra.mxu0 0.0
    %1902 = vmatpush.msra.mxu0 0.0
    %1903 = vmatpush.msra.mxu0 0.0
    %1904 = vmatpush.msra.mxu0 0.0
    %1905 = vmatpush.msra.mxu0 %v1386
    %1906 = vmatpush.msra.mxu0 %v1385
    %1907 = vmatpush.msra.mxu0 %v1384
    %1908 = vmatpush.msra.mxu0 %v1383
    %1909 = vmatmul.f32.gmra.mxu0 %v1871
    %v1910 = vpop.f32.mrf.mxu0
    %v1911 = vadd.f32 0.0, %v1910
    %1912 = vdwg.mxu0
    %1913 = vmatpush.msra.mxu0 0.0
    %1914 = vmatpush.msra.mxu0 0.0
    %1915 = vmatpush.msra.mxu0 0.0
    %1916 = vmatpush.msra.mxu0 0.0
    %1917 = vmatpush.msra.mxu0 0.0
    %1918 = vmatpush.msra.mxu0 0.0
    %1919 = vmatpush.msra.mxu0 0.0
    %1920 = vmatpush.msra.mxu0 0.0
    %1921 = vmatpush.msra.mxu0 0.0
    %1922 = vmatpush.msra.mxu0 0.0
    %1923 = vmatpush.msra.mxu0 0.0
    %1924 = vmatpush.msra.mxu0 0.0
    %1925 = vmatpush.msra.mxu0 %v1391
    %1926 = vmatpush.msra.mxu0 %v1390
    %1927 = vmatpush.msra.mxu0 %v1389
    %1928 = vmatpush.msra.mxu0 %v1388
    %1929 = vmatmul.f32.gmra.mxu0 %v1871
    %v1930 = vpop.f32.mrf.mxu0
    %v1931 = vadd.f32 %v1435, %v1930
    %1932 = vdwg.mxu0
    %v1933 = vadd.f32 %v1307, %v1891
    %v1934 = vxor.u32 %v1933, 2147483648
    %v1935 = vmul.f32 %v1934, 1.442695
    %v1936 = vpow.pop %v1935
    %v1937 = vadd.f32 %v1936, 1.0
    %v1938 = vrcp.pop %v1937
    %v1939 = vmul.f32 %v1937, %v1938
    %v1940 = vsub.f32 1.0, %v1939
    %v1941 = vmul.f32 %v1938, %v1940
    %v1942 = vadd.f32 %v1938, %v1941
    %vm1943 = vweird.f32 %v1937
    %vm1944 = vweird.f32 %v1938
    %vm1945 = vmor %vm1943, %vm1944
    %v1946 = vsel %vm1945, %v1938, %v1942
    %v1947 = vand.u32 2147483647, %v1937
    %vm1948 = vcmp.eq.f32.partialorder %v1947, 8.507059e+37
    %v1949 = vand.u32 %v1937, 2147483648
    %v1950 = vor.u32 1.1754944e-38, %v1949
    %v1951 = vsel %vm1948, %v1950, %v1946
    %v1952 = vmul.f32 1.0, %v1951
    %v1953 = vadd.f32 %v1343, %v1911
    %v1954 = vxor.u32 %v1953, 2147483648
    %v1955 = vmul.f32 %v1954, 1.442695
    %v1956 = vpow.pop %v1955
    %v1957 = vadd.f32 %v1956, 1.0
    %v1958 = vrcp.pop %v1957
    %v1959 = vmul.f32 %v1957, %v1958
    %v1960 = vsub.f32 1.0, %v1959
    %v1961 = vmul.f32 %v1958, %v1960
    %v1962 = vadd.f32 %v1958, %v1961
    %vm1963 = vweird.f32 %v1957
    %vm1964 = vweird.f32 %v1958
    %vm1965 = vmor %vm1963, %vm1964
    %v1966 = vsel %vm1965, %v1958, %v1962
    %v1967 = vand.u32 2147483647, %v1957
    %vm1968 = vcmp.eq.f32.partialorder %v1967, 8.507059e+37
    %v1969 = vand.u32 %v1957, 2147483648
    %v1970 = vor.u32 1.1754944e-38, %v1969
    %v1971 = vsel %vm1968, %v1970, %v1966
    %v1972 = vmul.f32 1.0, %v1971
    %v1973 = vmul.f32 %v1952, %v1931
    %v1974 = vadd.f32 %v1376, %v1973
    %v1975 = vtanh.pop %v1974
    %v1976 = vsub.f32 1.0, %v1972
    %v1977 = vmul.f32 %v1976, %v1975
    %v1979 = vmul.f32 %v1972, %v1870
    %v1980 = vadd.f32 %v1977, %v1979
    %v1982 = vsel %vm300, %v1980, 0
    %1984 = vmatpush.msra.mxu0 0.0
    %1985 = vmatpush.msra.mxu0 0.0
    %1986 = vmatpush.msra.mxu0 0.0
    %1987 = vmatpush.msra.mxu0 0.0
    %1988 = vmatpush.msra.mxu0 0.0
    %1989 = vmatpush.msra.mxu0 0.0
    %1990 = vmatpush.msra.mxu0 0.0
    %1991 = vmatpush.msra.mxu0 0.0
    %1992 = vmatpush.msra.mxu0 0.0
    %1993 = vmatpush.msra.mxu0 0.0
    %1994 = vmatpush.msra.mxu0 0.0
    %1995 = vmatpush.msra.mxu0 0.0
    %1996 = vmatpush.msra.mxu0 %v1381
    %1997 = vmatpush.msra.mxu0 %v1380
    %1998 = vmatpush.msra.mxu0 %v1379
    %1999 = vmatpush.msra.mxu0 %v1378
    %2000 = vmatmul.f32.gmra.mxu0 %v1982
    %v2001 = vpop.f32.mrf.mxu0
    %v2002 = vadd.f32 0.0, %v2001
    %2003 = vdwg.mxu0
    %2004 = vmatpush.msra.mxu0 0.0
    %2005 = vmatpush.msra.mxu0 0.0
    %2006 = vmatpush.msra.mxu0 0.0
    %2007 = vmatpush.msra.mxu0 0.0
    %2008 = vmatpush.msra.mxu0 0.0
    %2009 = vmatpush.msra.mxu0 0.0
    %2010 = vmatpush.msra.mxu0 0.0
    %2011 = vmatpush.msra.mxu0 0.0
    %2012 = vmatpush.msra.mxu0 0.0
    %2013 = vmatpush.msra.mxu0 0.0
    %2014 = vmatpush.msra.mxu0 0.0
    %2015 = vmatpush.msra.mxu0 0.0
    %2016 = vmatpush.msra.mxu0 %v1386
    %2017 = vmatpush.msra.mxu0 %v1385
    %2018 = vmatpush.msra.mxu0 %v1384
    %2019 = vmatpush.msra.mxu0 %v1383
    %2020 = vmatmul.f32.gmra.mxu0 %v1982
    %v2021 = vpop.f32.mrf.mxu0
    %v2022 = vadd.f32 0.0, %v2021
    %2023 = vdwg.mxu0
    %2024 = vmatpush.msra.mxu0 0.0
    %2025 = vmatpush.msra.mxu0 0.0
    %2026 = vmatpush.msra.mxu0 0.0
    %2027 = vmatpush.msra.mxu0 0.0
    %2028 = vmatpush.msra.mxu0 0.0
    %2029 = vmatpush.msra.mxu0 0.0
    %2030 = vmatpush.msra.mxu0 0.0
    %2031 = vmatpush.msra.mxu0 0.0
    %2032 = vmatpush.msra.mxu0 0.0
    %2033 = vmatpush.msra.mxu0 0.0
    %2034 = vmatpush.msra.mxu0 0.0
    %2035 = vmatpush.msra.mxu0 0.0
    %2036 = vmatpush.msra.mxu0 %v1391
    %2037 = vmatpush.msra.mxu0 %v1390
    %2038 = vmatpush.msra.mxu0 %v1389
    %2039 = vmatpush.msra.mxu0 %v1388
    %2040 = vmatmul.f32.gmra.mxu0 %v1982
    %v2041 = vpop.f32.mrf.mxu0
    %v2042 = vadd.f32 %v1435, %v2041
    %2043 = vdwg.mxu0
    %v2045 = vrot.slane %v2002, 6
    %v2047 = vadd.f32 %v1307, %v2045
    %v2048 = vxor.u32 %v2047, 2147483648
    %v2049 = vmul.f32 %v2048, 1.442695
    %v2050 = vpow.pop %v2049
    %v2051 = vadd.f32 %v2050, 1.0
    %v2052 = vrcp.pop %v2051
    %v2053 = vmul.f32 %v2051, %v2052
    %v2054 = vsub.f32 1.0, %v2053
    %v2055 = vmul.f32 %v2052, %v2054
    %v2056 = vadd.f32 %v2052, %v2055
    %vm2057 = vweird.f32 %v2051
    %vm2058 = vweird.f32 %v2052
    %vm2059 = vmor %vm2057, %vm2058
    %v2060 = vsel %vm2059, %v2052, %v2056
    %v2061 = vand.u32 2147483647, %v2051
    %vm2062 = vcmp.eq.f32.partialorder %v2061, 8.507059e+37
    %v2063 = vand.u32 %v2051, 2147483648
    %v2064 = vor.u32 1.1754944e-38, %v2063
    %v2065 = vsel %vm2062, %v2064, %v2060
    %v2066 = vmul.f32 1.0, %v2065
    %v2068 = vrot.slane %v2022, 6
    %v2070 = vadd.f32 %v1343, %v2068
    %v2071 = vxor.u32 %v2070, 2147483648
    %v2072 = vmul.f32 %v2071, 1.442695
    %v2073 = vpow.pop %v2072
    %v2074 = vadd.f32 %v2073, 1.0
    %v2075 = vrcp.pop %v2074
    %v2076 = vmul.f32 %v2074, %v2075
    %v2077 = vsub.f32 1.0, %v2076
    %v2078 = vmul.f32 %v2075, %v2077
    %v2079 = vadd.f32 %v2075, %v2078
    %vm2080 = vweird.f32 %v2074
    %vm2081 = vweird.f32 %v2075
    %vm2082 = vmor %vm2080, %vm2081
    %v2083 = vsel %vm2082, %v2075, %v2079
    %v2084 = vand.u32 2147483647, %v2074
    %vm2085 = vcmp.eq.f32.partialorder %v2084, 8.507059e+37
    %v2086 = vand.u32 %v2074, 2147483648
    %v2087 = vor.u32 1.1754944e-38, %v2086
    %v2088 = vsel %vm2085, %v2087, %v2083
    %v2089 = vmul.f32 1.0, %v2088
    %v2091 = vrot.slane %v2042, 6
    %v2093 = vmul.f32 %v2066, %v2091
    %v2094 = vadd.f32 %v1376, %v2093
    %v2095 = vtanh.pop %v2094
    %v2096 = vsub.f32 1.0, %v2089
    %v2097 = vmul.f32 %v2096, %v2095
    %v2098 = vrot.slane %v1980, 6
    %v2100 = vmul.f32 %v2089, %v2098
    %v2101 = vadd.f32 %v2097, %v2100
    %v2103 = vrot.slane %v2101, 2
    %v2104 = vsel %vm300, %v2103, 0
    %2106 = vmatpush.msra.mxu0 0.0
    %2107 = vmatpush.msra.mxu0 0.0
    %2108 = vmatpush.msra.mxu0 0.0
    %2109 = vmatpush.msra.mxu0 0.0
    %2110 = vmatpush.msra.mxu0 0.0
    %2111 = vmatpush.msra.mxu0 0.0
    %2112 = vmatpush.msra.mxu0 0.0
    %2113 = vmatpush.msra.mxu0 0.0
    %2114 = vmatpush.msra.mxu0 0.0
    %2115 = vmatpush.msra.mxu0 0.0
    %2116 = vmatpush.msra.mxu0 0.0
    %2117 = vmatpush.msra.mxu0 0.0
    %2118 = vmatpush.msra.mxu0 %v1381
    %2119 = vmatpush.msra.mxu0 %v1380
    %2120 = vmatpush.msra.mxu0 %v1379
    %2121 = vmatpush.msra.mxu0 %v1378
    %2122 = vmatmul.f32.gmra.mxu0 %v2104
    %v2123 = vpop.f32.mrf.mxu0
    %v2124 = vadd.f32 0.0, %v2123
    %2125 = vdwg.mxu0
    %2126 = vmatpush.msra.mxu0 0.0
    %2127 = vmatpush.msra.mxu0 0.0
    %2128 = vmatpush.msra.mxu0 0.0
    %2129 = vmatpush.msra.mxu0 0.0
    %2130 = vmatpush.msra.mxu0 0.0
    %2131 = vmatpush.msra.mxu0 0.0
    %2132 = vmatpush.msra.mxu0 0.0
    %2133 = vmatpush.msra.mxu0 0.0
    %2134 = vmatpush.msra.mxu0 0.0
    %2135 = vmatpush.msra.mxu0 0.0
    %2136 = vmatpush.msra.mxu0 0.0
    %2137 = vmatpush.msra.mxu0 0.0
    %2138 = vmatpush.msra.mxu0 %v1386
    %2139 = vmatpush.msra.mxu0 %v1385
    %2140 = vmatpush.msra.mxu0 %v1384
    %2141 = vmatpush.msra.mxu0 %v1383
    %2142 = vmatmul.f32.gmra.mxu0 %v2104
    %v2143 = vpop.f32.mrf.mxu0
    %v2144 = vadd.f32 0.0, %v2143
    %2145 = vdwg.mxu0
    %2146 = vmatpush.msra.mxu0 0.0
    %2147 = vmatpush.msra.mxu0 0.0
    %2148 = vmatpush.msra.mxu0 0.0
    %2149 = vmatpush.msra.mxu0 0.0
    %2150 = vmatpush.msra.mxu0 0.0
    %2151 = vmatpush.msra.mxu0 0.0
    %2152 = vmatpush.msra.mxu0 0.0
    %2153 = vmatpush.msra.mxu0 0.0
    %2154 = vmatpush.msra.mxu0 0.0
    %2155 = vmatpush.msra.mxu0 0.0
    %2156 = vmatpush.msra.mxu0 0.0
    %2157 = vmatpush.msra.mxu0 0.0
    %2158 = vmatpush.msra.mxu0 %v1391
    %2159 = vmatpush.msra.mxu0 %v1390
    %2160 = vmatpush.msra.mxu0 %v1389
    %2161 = vmatpush.msra.mxu0 %v1388
    %2162 = vmatmul.f32.gmra.mxu0 %v2104
    %v2163 = vpop.f32.mrf.mxu0
    %v2164 = vadd.f32 %v1435, %v2163
    %2165 = vdwg.mxu0
    %v2167 = vrot.slane %v2124, 4
    %v2169 = vadd.f32 %v1307, %v2167
    %v2170 = vxor.u32 %v2169, 2147483648
    %v2171 = vmul.f32 %v2170, 1.442695
    %v2172 = vpow.pop %v2171
    %v2173 = vadd.f32 %v2172, 1.0
    %v2174 = vrcp.pop %v2173
    %v2175 = vmul.f32 %v2173, %v2174
    %v2176 = vsub.f32 1.0, %v2175
    %v2177 = vmul.f32 %v2174, %v2176
    %v2178 = vadd.f32 %v2174, %v2177
    %vm2179 = vweird.f32 %v2173
    %vm2180 = vweird.f32 %v2174
    %vm2181 = vmor %vm2179, %vm2180
    %v2182 = vsel %vm2181, %v2174, %v2178
    %v2183 = vand.u32 2147483647, %v2173
    %vm2184 = vcmp.eq.f32.partialorder %v2183, 8.507059e+37
    %v2185 = vand.u32 %v2173, 2147483648
    %v2186 = vor.u32 1.1754944e-38, %v2185
    %v2187 = vsel %vm2184, %v2186, %v2182
    %v2188 = vmul.f32 1.0, %v2187
    %v2190 = vrot.slane %v2144, 4
    %v2192 = vadd.f32 %v1343, %v2190
    %v2193 = vxor.u32 %v2192, 2147483648
    %v2194 = vmul.f32 %v2193, 1.442695
    %v2195 = vpow.pop %v2194
    %v2196 = vadd.f32 %v2195, 1.0
    %v2197 = vrcp.pop %v2196
    %v2198 = vmul.f32 %v2196, %v2197
    %v2199 = vsub.f32 1.0, %v2198
    %v2200 = vmul.f32 %v2197, %v2199
    %v2201 = vadd.f32 %v2197, %v2200
    %vm2202 = vweird.f32 %v2196
    %vm2203 = vweird.f32 %v2197
    %vm2204 = vmor %vm2202, %vm2203
    %v2205 = vsel %vm2204, %v2197, %v2201
    %v2206 = vand.u32 2147483647, %v2196
    %vm2207 = vcmp.eq.f32.partialorder %v2206, 8.507059e+37
    %v2208 = vand.u32 %v2196, 2147483648
    %v2209 = vor.u32 1.1754944e-38, %v2208
    %v2210 = vsel %vm2207, %v2209, %v2205
    %v2211 = vmul.f32 1.0, %v2210
    %v2213 = vrot.slane %v2164, 4
    %v2215 = vmul.f32 %v2188, %v2213
    %v2216 = vadd.f32 %v1376, %v2215
    %v2217 = vtanh.pop %v2216
    %v2218 = vsub.f32 1.0, %v2211
    %v2219 = vmul.f32 %v2218, %v2217
    %v2220 = vrot.slane %v2101, 6
    %v2222 = vmul.f32 %v2211, %v2220
    %v2223 = vadd.f32 %v2219, %v2222
    %v2225 = vrot.slane %v2223, 4
    %v2226 = vsel %vm300, %v2225, 0
    %2228 = vmatpush.msra.mxu0 0.0
    %2229 = vmatpush.msra.mxu0 0.0
    %2230 = vmatpush.msra.mxu0 0.0
    %2231 = vmatpush.msra.mxu0 0.0
    %2232 = vmatpush.msra.mxu0 0.0
    %2233 = vmatpush.msra.mxu0 0.0
    %2234 = vmatpush.msra.mxu0 0.0
    %2235 = vmatpush.msra.mxu0 0.0
    %2236 = vmatpush.msra.mxu0 0.0
    %2237 = vmatpush.msra.mxu0 0.0
    %2238 = vmatpush.msra.mxu0 0.0
    %2239 = vmatpush.msra.mxu0 0.0
    %2240 = vmatpush.msra.mxu0 %v1381
    %2241 = vmatpush.msra.mxu0 %v1380
    %2242 = vmatpush.msra.mxu0 %v1379
    %2243 = vmatpush.msra.mxu0 %v1378
    %2244 = vmatmul.f32.gmra.mxu0 %v2226
    %v2245 = vpop.f32.mrf.mxu0
    %v2246 = vadd.f32 0.0, %v2245
    %2247 = vdwg.mxu0
    %2248 = vmatpush.msra.mxu0 0.0
    %2249 = vmatpush.msra.mxu0 0.0
    %2250 = vmatpush.msra.mxu0 0.0
    %2251 = vmatpush.msra.mxu0 0.0
    %2252 = vmatpush.msra.mxu0 0.0
    %2253 = vmatpush.msra.mxu0 0.0
    %2254 = vmatpush.msra.mxu0 0.0
    %2255 = vmatpush.msra.mxu0 0.0
    %2256 = vmatpush.msra.mxu0 0.0
    %2257 = vmatpush.msra.mxu0 0.0
    %2258 = vmatpush.msra.mxu0 0.0
    %2259 = vmatpush.msra.mxu0 0.0
    %2260 = vmatpush.msra.mxu0 %v1386
    %2261 = vmatpush.msra.mxu0 %v1385
    %2262 = vmatpush.msra.mxu0 %v1384
    %2263 = vmatpush.msra.mxu0 %v1383
    %2264 = vmatmul.f32.gmra.mxu0 %v2226
    %v2265 = vpop.f32.mrf.mxu0
    %v2266 = vadd.f32 0.0, %v2265
    %2267 = vdwg.mxu0
    %2268 = vmatpush.msra.mxu0 0.0
    %2269 = vmatpush.msra.mxu0 0.0
    %2270 = vmatpush.msra.mxu0 0.0
    %2271 = vmatpush.msra.mxu0 0.0
    %2272 = vmatpush.msra.mxu0 0.0
    %2273 = vmatpush.msra.mxu0 0.0
    %2274 = vmatpush.msra.mxu0 0.0
    %2275 = vmatpush.msra.mxu0 0.0
    %2276 = vmatpush.msra.mxu0 0.0
    %2277 = vmatpush.msra.mxu0 0.0
    %2278 = vmatpush.msra.mxu0 0.0
    %2279 = vmatpush.msra.mxu0 0.0
    %2280 = vmatpush.msra.mxu0 %v1391
    %2281 = vmatpush.msra.mxu0 %v1390
    %2282 = vmatpush.msra.mxu0 %v1389
    %2283 = vmatpush.msra.mxu0 %v1388
    %2284 = vmatmul.f32.gmra.mxu0 %v2226
    %v2285 = vpop.f32.mrf.mxu0
    %v2286 = vadd.f32 %v1435, %v2285
    %2287 = vdwg.mxu0
    %v2289 = vrot.slane %v2246, 2
    %v2291 = vadd.f32 %v1307, %v2289
    %v2292 = vxor.u32 %v2291, 2147483648
    %v2293 = vmul.f32 %v2292, 1.442695
    %v2294 = vpow.pop %v2293
    %v2295 = vadd.f32 %v2294, 1.0
    %v2296 = vrcp.pop %v2295
    %v2297 = vmul.f32 %v2295, %v2296
    %v2298 = vsub.f32 1.0, %v2297
    %v2299 = vmul.f32 %v2296, %v2298
    %v2300 = vadd.f32 %v2296, %v2299
    %vm2301 = vweird.f32 %v2295
    %vm2302 = vweird.f32 %v2296
    %vm2303 = vmor %vm2301, %vm2302
    %v2304 = vsel %vm2303, %v2296, %v2300
    %v2305 = vand.u32 2147483647, %v2295
    %vm2306 = vcmp.eq.f32.partialorder %v2305, 8.507059e+37
    %v2307 = vand.u32 %v2295, 2147483648
    %v2308 = vor.u32 1.1754944e-38, %v2307
    %v2309 = vsel %vm2306, %v2308, %v2304
    %v2310 = vmul.f32 1.0, %v2309
    %v2312 = vrot.slane %v2266, 2
    %v2314 = vadd.f32 %v1343, %v2312
    %v2315 = vxor.u32 %v2314, 2147483648
    %v2316 = vmul.f32 %v2315, 1.442695
    %v2317 = vpow.pop %v2316
    %v2318 = vadd.f32 %v2317, 1.0
    %v2319 = vrcp.pop %v2318
    %v2320 = vmul.f32 %v2318, %v2319
    %v2321 = vsub.f32 1.0, %v2320
    %v2322 = vmul.f32 %v2319, %v2321
    %v2323 = vadd.f32 %v2319, %v2322
    %vm2324 = vweird.f32 %v2318
    %vm2325 = vweird.f32 %v2319
    %vm2326 = vmor %vm2324, %vm2325
    %v2327 = vsel %vm2326, %v2319, %v2323
    %v2328 = vand.u32 2147483647, %v2318
    %vm2329 = vcmp.eq.f32.partialorder %v2328, 8.507059e+37
    %v2330 = vand.u32 %v2318, 2147483648
    %v2331 = vor.u32 1.1754944e-38, %v2330
    %v2332 = vsel %vm2329, %v2331, %v2327
    %v2333 = vmul.f32 1.0, %v2332
    %v2335 = vrot.slane %v2286, 2
    %v2337 = vmul.f32 %v2310, %v2335
    %v2338 = vadd.f32 %v1376, %v2337
    %v2339 = vtanh.pop %v2338
    %v2340 = vsub.f32 1.0, %v2333
    %v2341 = vmul.f32 %v2340, %v2339
    %v2342 = vrot.slane %v2223, 6
    %v2344 = vmul.f32 %v2333, %v2342
    %v2345 = vadd.f32 %v2341, %v2344
    %v2346 = vld [vmem:[%s9] sm:$0xff]
    %v2347 = vld [vmem:[%s9 + $0x8] sm:$0xff]
    %v2348 = vld [vmem:[%s9 + $0x10] sm:$0xff]
    %v2349 = vld [vmem:[%s9 + $0x18] sm:$0xff]
    %v2350 = vld [vmem:[%s10] sm:$0x1]
    %v2352 = vperm.slane %v2350, 0
    %v2355 = vrot.slane %v2345, 6
    %v2356 = vsel %vm300, %v2355, 0
    %2358 = vmatpush.msra.mxu0 0.0
    %2359 = vmatpush.msra.mxu0 0.0
    %2360 = vmatpush.msra.mxu0 0.0
    %2361 = vmatpush.msra.mxu0 0.0
    %2362 = vmatpush.msra.mxu0 0.0
    %2363 = vmatpush.msra.mxu0 0.0
    %2364 = vmatpush.msra.mxu0 0.0
    %2365 = vmatpush.msra.mxu0 0.0
    %2366 = vmatpush.msra.mxu0 0.0
    %2367 = vmatpush.msra.mxu0 0.0
    %2368 = vmatpush.msra.mxu0 0.0
    %2369 = vmatpush.msra.mxu0 0.0
    %2370 = vmatpush.msra.mxu0 %v2349
    %2371 = vmatpush.msra.mxu0 %v2348
    %2372 = vmatpush.msra.mxu0 %v2347
    %2373 = vmatpush.msra.mxu0 %v2346
    %2374 = vmatmul.f32.gmra.mxu0 %v2356
    %v2375 = vpop.f32.mrf.mxu0
    %v2376 = vadd.f32 %v2352, %v2375
    %2377 = vdwg.mxu0
    %v2378 = vmax.f32 %v2376, 0.0
    %v2379 = vld [vmem:[%s11] sm:$0xff]
    %v2380 = vld [vmem:[%s11 + $0x8] sm:$0xff]
    %v2381 = vld [vmem:[%s12] sm:$0x1]
    %v2383 = vperm.slane %v2381, 0
    %v2386 = vsel %vm189, %v2378, 0
    %2388 = vmatpush.msra.mxu0 0.0
    %2389 = vmatpush.msra.mxu0 0.0
    %2390 = vmatpush.msra.mxu0 0.0
    %2391 = vmatpush.msra.mxu0 0.0
    %2392 = vmatpush.msra.mxu0 0.0
    %2393 = vmatpush.msra.mxu0 0.0
    %2394 = vmatpush.msra.mxu0 0.0
    %2395 = vmatpush.msra.mxu0 0.0
    %2396 = vmatpush.msra.mxu0 0.0
    %2397 = vmatpush.msra.mxu0 0.0
    %2398 = vmatpush.msra.mxu0 0.0
    %2399 = vmatpush.msra.mxu0 0.0
    %2400 = vmatpush.msra.mxu0 0.0
    %2401 = vmatpush.msra.mxu0 0.0
    %2402 = vmatpush.msra.mxu0 %v2380
    %2403 = vmatpush.msra.mxu0 %v2379
    %2404 = vmatmul.f32.gmra.mxu0 %v2386
    %v2405 = vpop.f32.mrf.mxu0
    %v2406 = vadd.f32 %v2383, %v2405
    %2407 = vdwg.mxu0
    %v2408 = vmax.f32 %v2406, 0.0
    %v2409 = vld [vmem:[%s13] sm:$0xff]
    %v2410 = vld [vmem:[%s14] sm:$0x1]
    %v2412 = vperm.slane %v2410, 0
    %vm2414 = vcmask 64512
    %v2416 = vsel %vm2414, %v2408, 0
    %2418 = vmatpush.msra.mxu0 0.0
    %2419 = vmatpush.msra.mxu0 0.0
    %2420 = vmatpush.msra.mxu0 0.0
    %2421 = vmatpush.msra.mxu0 0.0
    %2422 = vmatpush.msra.mxu0 0.0
    %2423 = vmatpush.msra.mxu0 0.0
    %2424 = vmatpush.msra.mxu0 0.0
    %2425 = vmatpush.msra.mxu0 0.0
    %2426 = vmatpush.msra.mxu0 0.0
    %2427 = vmatpush.msra.mxu0 0.0
    %2428 = vmatpush.msra.mxu0 0.0
    %2429 = vmatpush.msra.mxu0 0.0
    %2430 = vmatpush.msra.mxu0 0.0
    %2431 = vmatpush.msra.mxu0 0.0
    %2432 = vmatpush.msra.mxu0 0.0
    %2433 = vmatpush.msra.mxu0 %v2409
    %2434 = vmatmul.f32.gmra.mxu0 %v2416
    %v2435 = vpop.f32.mrf.mxu0
    %v2436 = vadd.f32 %v2412, %v2435
    %2437 = vdwg.mxu0
    %2438 = vst.msk [vmem:[#allocation17 - $0x6] sm:$0xc0] %vm785, %v2345
    %vm2439 = vcmask 41984
    %2440 = vst.msk [vmem:[#allocation18] sm:$0x3] %vm2439, %v2436
    // Predicated region
    $region94: #{tpu_custom_call.1} parent=1 // pred_check
      _
    $region95: #{tpu_custom_call.1} parent=1 // pred_check_branch
      %2442 = sbr.rel (0) target = $region97
    $region96: #{tpu_custom_call.1} parent=1 // pred_region
      %2444 = vsyncadd [#allocation5], 0
      %s2446 = sshll.u32 [#allocation17], 4
      %s2447 = int_to_ptr.vmem [resolvable:$true] %s2446
      %s2448 = sshll.u32 %s15, 4
      %s2449 = int_to_ptr.hbm [resolvable:$true] %s2448
      %2451 = dma.vmem_to_hbm [thread:$0]  %s2447, 32, %s2449, [#allocation5]
    $region97: #{tpu_custom_call.1} parent=1 // pred_fallthru
      _
    // Predicated region
    $region98: #{tpu_custom_call.1} parent=1 // pred_check
      _
    $region99: #{tpu_custom_call.1} parent=1 // pred_check_branch
      %2453 = sbr.rel (0) target = $region101
    $region100: #{tpu_custom_call.1} parent=1 // pred_region
      %2455 = vsyncadd [#allocation19], 0
      %s2457 = sshll.u32 [#allocation18], 4
      %s2458 = int_to_ptr.vmem [resolvable:$true] %s2457
      %s2459 = sshll.u32 %s16, 4
      %s2460 = int_to_ptr.hbm [resolvable:$true] %s2459
      %2462 = dma.vmem_to_hbm [thread:$0]  %s2458, 32, %s2460, [#allocation19]
    $region101: #{tpu_custom_call.1} parent=1 // pred_fallthru
      _
    // Predicated region
    $region102: #{tpu_custom_call.1} parent=1 // pred_check
      _
    $region103: #{tpu_custom_call.1} parent=1 // pred_check_branch
      %2464 = sbr.rel (0) target = $region105
    $region104: #{tpu_custom_call.1} parent=1 // pred_region
      %2466 = dma.done [#allocation5], 32
    $region105: #{tpu_custom_call.1} parent=1 // pred_fallthru
      _
    // Predicated region
    $region106: #{tpu_custom_call.1} parent=1 // pred_check
      _
    $region107: #{tpu_custom_call.1} parent=1 // pred_check_branch
      %2468 = sbr.rel (0) target = $region109
    $region108: #{tpu_custom_call.1} parent=1 // pred_region
      %2470 = dma.done [#allocation19], 32
    $region109: #{tpu_custom_call.1} parent=1 // pred_fallthru
      _
    %2471 = vsyncpa [#allocation4], 1
    %2472 = vsyncpa [#allocation7], 1
    %2473 = vsyncpa [#allocation10], 1
    %2474 = vsyncpa [#allocation13], 1
    %2475 = vsyncpa [#allocation16], 1
    %2476 = vsyncpa [#allocation5], 1
    %2477 = vsyncpa [#allocation19], 1

</llo_original>
